<compile_context>
chip_gen: v7x
topology: tpu7x:2x2x1
jax: 0.10.0
libtpu: 0.0.40
codegen_flags: <defaults>
</compile_context>

<pallas_src>
import math
import functools

import jax
import jax.numpy as jnp
from jax.experimental import pallas as pl
from jax.experimental.pallas import tpu as pltpu


# --------------------------- tiling / limits ---------------------------------

def _pick_tile(dim, target, align):
    """Largest tile <= target that divides dim; prefers 256-multiples (MXU fill)."""
    if dim <= target:
        return dim                                   # whole dim -> always legal
    for a in sorted({max(align, 256), align}, reverse=True):
        t = (target // a) * a
        while t >= a:
            if dim % t == 0:
                return t
            t -= a
    return dim                                       # fallback: whole dim


def _default_vmem_limit():
    """Generation-aware scoped-VMEM budget (~48 MiB on v7x, ~96 MiB on v5e/v6e)."""
    cap = None
    try:
        info = pltpu.get_tpu_info()
        cap = getattr(info, "vmem_capacity_bytes", None)
    except Exception:
        cap = None
    if not cap:
        cap = 64 * 1024 * 1024                       # conservative default
    return int(min(cap * 3 // 4, 100 * 1024 * 1024))


_VMEM_LIMIT = _default_vmem_limit()


# --------------------------- fused linear kernel ----------------------------

def _linear_kernel(*refs, nk, fuse_ln, ln_eps, activation, add_residual):
    """y = [LN](x) @ w + b  [-> gelu/sigmoid]  [+ residual]; K-tiled f32 acc."""
    idx = 0
    x_ref = refs[idx]; idx += 1
    w_ref = refs[idx]; idx += 1
    b_ref = refs[idx]; idx += 1
    if fuse_ln:
        g_ref = refs[idx]; idx += 1
        bb_ref = refs[idx]; idx += 1
    if add_residual:
        r_ref = refs[idx]; idx += 1
    o_ref = refs[idx]; idx += 1
    if fuse_ln:
        ln_ref = refs[idx]; idx += 1                 # (tm, K) bf16 LN cache
    if nk > 1:
        acc_ref = refs[idx]; idx += 1                # (tm, tn) f32 accumulator

    j = pl.program_id(1)
    k = pl.program_id(2)

    if fuse_ln:
        # LN prologue computed once per row-tile (j == 0), cached for all N-tiles.
        @pl.when(j == 0)
        def _():
            x = x_ref[...].astype(jnp.float32)
            u = jnp.mean(x, axis=-1, keepdims=True)
            xc = x - u
            s = jnp.mean(xc * xc, axis=-1, keepdims=True)
            xn = xc * jax.lax.rsqrt(s + ln_eps)
            xn = xn * g_ref[...].astype(jnp.float32) + bb_ref[...].astype(jnp.float32)
            ln_ref[...] = xn.astype(jnp.bfloat16)
        x_in = ln_ref[...]                           # bf16 MXU operand
    else:
        x_in = x_ref[...]                            # already bf16

    partial = jnp.dot(x_in, w_ref[...], preferred_element_type=jnp.float32)

    def _epilogue(y):
        y = y + b_ref[...].astype(jnp.float32)
        if activation == "gelu":
            c = math.sqrt(2.0 / math.pi)
            y = 0.5 * y * (1.0 + jnp.tanh(c * (y + 0.044715 * (y * y * y))))
        elif activation == "sigmoid":
            y = jax.nn.sigmoid(y)
        if add_residual:
            y = y + r_ref[...].astype(jnp.float32)
        o_ref[...] = y.astype(o_ref.dtype)

    if nk == 1:
        # Single K step: no accumulator scratch, no extra store/load/add.
        _epilogue(partial)
    else:
        @pl.when(k == 0)
        def _():
            acc_ref[...] = jnp.zeros_like(acc_ref)
        acc_ref[...] += partial

        @pl.when(k == nk - 1)
        def _():
            _epilogue(acc_ref[...])


def linear(x2d, w, b, *, ln=None, activation=None, residual=None,
           residual_rows=None, out_dtype=jnp.bfloat16,
           tm_target=256, tn_target=1024, tk_target=1024):
    """Fused (LN ->) matmul (+bias, +activation, +residual).  x2d: [M,K], w: [K,N]."""
    M, K = x2d.shape
    K2, N = w.shape
    assert K == K2
    fuse_ln = ln is not None
    add_res = residual is not None
    assert not (activation is not None and add_res), \
        "fused epilogue applies activation before residual; not used in this model"

    if residual_rows is not None:
        assert add_res and residual.shape == (residual_rows, N)
        assert M % residual_rows == 0
        tm = _pick_tile(residual_rows, tm_target, 8)   # tm | residual_rows | M
    else:
        tm = _pick_tile(M, tm_target, 8)
    tn = _pick_tile(N, tn_target, 128)
    if fuse_ln:
        tk = K                                         # LN needs the whole feature row
    else:
        tk = _pick_tile(K, tk_target, 128)
    nm, nnt, nk = M // tm, N // tn, K // tk
    assert (not fuse_ln) or nk == 1, "fused LayerNorm requires tk == K"

    inputs = [x2d.astype(jnp.bfloat16),
              w.astype(jnp.bfloat16),
              b.reshape(1, N).astype(jnp.float32)]

    w_spec = pl.BlockSpec((tk, tn), lambda i, j, kk: (kk, j))
    if (not fuse_ln) and nk >= 3:
        # Deeper pipelining on the weight stream hides the HBM fetch on v5e.
        try:
            w_spec = pl.BlockSpec((tk, tn), lambda i, j, kk: (kk, j),
                                  pipeline_mode=pl.Buffered(3))
        except Exception:
            pass

    in_specs = [
        pl.BlockSpec((tm, tk), lambda i, j, kk: (i, kk)),
        w_spec,
        pl.BlockSpec((1, tn), lambda i, j, kk: (0, j)),
    ]
    ln_eps = 0.0
    if fuse_ln:
        g, be, ln_eps = ln
        inputs += [g.reshape(1, K).astype(jnp.float32),
                   be.reshape(1, K).astype(jnp.float32)]
        in_specs += [pl.BlockSpec((1, tk), lambda i, j, kk: (0, kk)),
                     pl.BlockSpec((1, tk), lambda i, j, kk: (0, kk))]
    if add_res:
        inputs.append(residual.astype(jnp.bfloat16))
        if residual_rows is not None:
            nrp = residual_rows // tm
            in_specs.append(
                pl.BlockSpec((tm, tn), lambda i, j, kk, nrp=nrp: (i % nrp, j)))
        else:
            in_specs.append(pl.BlockSpec((tm, tn), lambda i, j, kk: (i, j)))

    scratch = []
    if fuse_ln:
        scratch.append(pltpu.VMEM((tm, K), jnp.bfloat16))
    if nk > 1:
        scratch.append(pltpu.VMEM((tm, tn), jnp.float32))

    # j must stay "arbitrary" when the LN cache relies on the j == 0 init.
    dims = (("parallel", "arbitrary", "arbitrary") if fuse_ln
            else ("parallel", "parallel", "arbitrary"))

    kernel = functools.partial(
        _linear_kernel, nk=nk, fuse_ln=fuse_ln, ln_eps=ln_eps,
        activation=activation, add_residual=add_res)

    return pl.pallas_call(
        kernel,
        out_shape=jax.ShapeDtypeStruct((M, N), out_dtype),
        grid=(nm, nnt, nk),
        in_specs=in_specs,
        out_specs=pl.BlockSpec((tm, tn), lambda i, j, kk: (i, j)),
        scratch_shapes=scratch,
        compiler_params=pltpu.CompilerParams(
            dimension_semantics=dims,
            vmem_limit_bytes=_VMEM_LIMIT),
    )(*inputs)


# ----------------------------- flash attention ------------------------------

def _flash_attn_kernel(q_ref, k_ref, v_ref, o_ref, m_sc, l_sc, acc_sc, *,
                       n_head, hd, scale, t):
    """Causal online-softmax attention.  Blocks: q (1,t,D), k/v (1,t,D), out (1,t,D).

    Heads are a static in-kernel loop; per-head running max/denominator live in
    (t, n_head) scratch columns and the output accumulates into a (t, D) scratch
    so the HBM store is a single lane-dense block per (batch, q-tile).
    """
    qi = pl.program_id(1)
    ki = pl.program_id(2)
    nkv = pl.num_programs(2)

    @pl.when(ki == 0)
    def _():
        m_sc[...] = jnp.full_like(m_sc, -1e30)
        l_sc[...] = jnp.zeros_like(l_sc)
        acc_sc[...] = jnp.zeros_like(acc_sc)

    # Causal tile skipping: with tq == tkv, a kv tile strictly above the diagonal
    # is fully masked (its DMA is also skipped via the clamped index_map).
    @pl.when(ki <= qi)
    def _():
        q_all = q_ref[0]                              # [t, D] bf16
        k_all = k_ref[0]
        v_all = v_ref[0]
        row = qi * t + jax.lax.broadcasted_iota(jnp.int32, (t, t), 0)
        col = ki * t + jax.lax.broadcasted_iota(jnp.int32, (t, t), 1)
        causal = col <= row
        for h in range(n_head):
            sl = slice(h * hd, (h + 1) * hd)
            s = jax.lax.dot_general(
                q_all[:, sl], k_all[:, sl],
                (((1,), (1,)), ((), ())),
                preferred_element_type=jnp.float32) * scale        # [t, t]
            s = jnp.where(causal, s, -1e10)
            m_prev = m_sc[:, h:h + 1]                              # [t, 1]
            m_new = jnp.maximum(m_prev, jnp.max(s, axis=-1, keepdims=True))
            alpha = jnp.exp(m_prev - m_new)
            p = jnp.exp(s - m_new)
            l_sc[:, h:h + 1] = alpha * l_sc[:, h:h + 1] + jnp.sum(
                p, axis=-1, keepdims=True)
            acc_sc[:, sl] = alpha * acc_sc[:, sl] + jnp.dot(
                p.astype(jnp.bfloat16), v_all[:, sl],
                preferred_element_type=jnp.float32)
            m_sc[:, h:h + 1] = m_new

    @pl.when(ki == nkv - 1)
    def _():
        for h in range(n_head):
            sl = slice(h * hd, (h + 1) * hd)
            inv = pl.reciprocal(l_sc[:, h:h + 1], approx=False)    # exact for parity
            o_ref[0, :, sl] = (acc_sc[:, sl] * inv).astype(o_ref.dtype)


def attention(qkv3d, *, n_head, t_target=256):
    """qkv3d: [B, S, 3D] bf16 (q | k | v on the last axis) -> [B, S, D] bf16."""
    B, S, threeD = qkv3d.shape
    D = threeD // 3
    hd = D // n_head
    t = _pick_tile(S, t_target, 8)                    # tq == tkv (causal-skip safe)
    nq = S // t

    q_map = lambda b, qi, ki: (b, qi, 0)
    if D % 128 == 0:
        # Slice q/k/v straight out of the fused QKV buffer (no extra HBM copy).
        q_in = k_in = v_in = qkv3d
        k_map = lambda b, qi, ki: (b, jnp.minimum(ki, qi), 1)
        v_map = lambda b, qi, ki: (b, jnp.minimum(ki, qi), 2)
    else:
        # Small/odd D: split once in XLA so every block keeps a full last dim.
        q_in = qkv3d[..., :D]
        k_in = qkv3d[..., D:2 * D]
        v_in = qkv3d[..., 2 * D:]
        k_map = v_map = lambda b, qi, ki: (b, jnp.minimum(ki, qi), 0)

    kernel = functools.partial(_flash_attn_kernel, n_head=n_head, hd=hd,
                               scale=1.0 / math.sqrt(hd), t=t)
    return pl.pallas_call(
        kernel,
        out_shape=jax.ShapeDtypeStruct((B, S, D), jnp.bfloat16),
        grid=(B, nq, nq),
        in_specs=[pl.BlockSpec((1, t, D), q_map),
                  pl.BlockSpec((1, t, D), k_map),
                  pl.BlockSpec((1, t, D), v_map)],
        out_specs=pl.BlockSpec((1, t, D), lambda b, qi, ki: (b, qi, 0)),
        scratch_shapes=[pltpu.VMEM((t, n_head), jnp.float32),   # running max
                        pltpu.VMEM((t, n_head), jnp.float32),   # running denom
                        pltpu.VMEM((t, D), jnp.float32)],       # output acc
        compiler_params=pltpu.CompilerParams(
            dimension_semantics=("parallel", "parallel", "arbitrary"),
            vmem_limit_bytes=_VMEM_LIMIT),
    )(q_in, k_in, v_in)


# ----------------------------- Model (glue) --------------------------------

def init_params(key, *, n_embd, n_head, n_layer, n_positions, vocab):
    keys = jax.random.split(key, 2 + 4 * n_layer)
    ki = iter(keys)
    std = 0.02
    # Tied embedding: nn.Linear(V, D).weight has shape [D, V].
    w_emb = (jax.random.normal(next(ki), (n_embd, vocab)) * std).astype(jnp.bfloat16)
    params = {
        "w_emb": w_emb,                        # [D, V] — tied head
        "w_emb_t": jnp.transpose(w_emb),       # [V, D] — transposed ONCE at init
        "pos_emb": (jax.random.normal(next(ki), (n_positions, n_embd)) * std
                    ).astype(jnp.float32),
        "lnf_g": jnp.ones((n_embd,), jnp.float32),
        "lnf_b": jnp.zeros((n_embd,), jnp.float32),
        "layers": [],
    }
    for _ in range(n_layer):
        layer = {
            "ln1_g": jnp.ones((n_embd,), jnp.float32),
            "ln1_b": jnp.zeros((n_embd,), jnp.float32),
            "c_attn_w": (jax.random.normal(next(ki), (n_embd, 3 * n_embd)) * std
                         ).astype(jnp.bfloat16),
            "c_attn_b": jnp.zeros((3 * n_embd,), jnp.float32),
            "c_proj_w": (jax.random.normal(next(ki), (n_embd, n_embd)) * std
                         ).astype(jnp.bfloat16),
            "c_proj_b": jnp.zeros((n_embd,), jnp.float32),
            "ln2_g": jnp.ones((n_embd,), jnp.float32),
            "ln2_b": jnp.zeros((n_embd,), jnp.float32),
            "c_fc_w": (jax.random.normal(next(ki), (n_embd, 4 * n_embd)) * std
                       ).astype(jnp.bfloat16),
            "c_fc_b": jnp.zeros((4 * n_embd,), jnp.float32),
            "c_proj2_w": (jax.random.normal(next(ki), (4 * n_embd, n_embd)) * std
                          ).astype(jnp.bfloat16),
            "c_proj2_b": jnp.zeros((n_embd,), jnp.float32),
        }
        params["layers"].append(layer)
    return params


def gpt_forward(params, input_visits, *, n_head, ln_eps=1e-5):
    """code_probs = sigmoid(tied-head(ln_f(transformer(x)))) — [B, S, V] (bf16)."""
    B, S, V = input_visits.shape
    D = params["pos_emb"].shape[1]

    x2d = input_visits.reshape(B * S, V).astype(jnp.bfloat16)
    pos = params["pos_emb"][:S].astype(jnp.bfloat16)              # [S, D]

    # input embedding; positional embedding added per-tile (no [B,S,D] broadcast)
    h2d = linear(x2d, params["w_emb_t"], jnp.zeros((D,), jnp.float32),
                 residual=pos, residual_rows=S)                    # [B*S, D] bf16

    for layer in params["layers"]:
        # --- attention sub-block: LN1 fused into the QKV projection ---
        qkv = linear(h2d, layer["c_attn_w"], layer["c_attn_b"],
                     ln=(layer["ln1_g"], layer["ln1_b"], ln_eps))  # [B*S, 3D]
        a = attention(qkv.reshape(B, S, 3 * D), n_head=n_head)     # [B, S, D]
        h2d = linear(a.reshape(B * S, D), layer["c_proj_w"], layer["c_proj_b"],
                     residual=h2d)                                 # + residual
        # --- MLP sub-block: LN2 fused into FC, residual fused into proj ---
        m = linear(h2d, layer["c_fc_w"], layer["c_fc_b"],
                   ln=(layer["ln2_g"], layer["ln2_b"], ln_eps),
                   activation="gelu")                              # [B*S, 4D]
        h2d = linear(m, layer["c_proj2_w"], layer["c_proj2_b"],
                     residual=h2d)

    # tied head: ln_f fused as prologue, sigmoid fused as epilogue, bf16 output.
    probs = linear(h2d, params["w_emb"], jnp.zeros((V,), jnp.float32),
                   ln=(params["lnf_g"], params["lnf_b"], ln_eps),
                   activation="sigmoid")
    return probs.reshape(B, S, V)
    # TODO(synk): BCE-loss / bernoulli-sampling / past-KV (presents) branches of
    #             GPT.forward are training/decoding host logic, not kernelized.


# --------------------------- pure-JAX reference ------------------------------

def gpt_forward_ref(params, input_visits, *, n_head, ln_eps=1e-5):
    f32 = jnp.float32
    B, S, V = input_visits.shape
    D = params["pos_emb"].shape[1]
    hd = D // n_head

    def ln(v, g, b):
        u = v.mean(-1, keepdims=True)
        s = ((v - u) ** 2).mean(-1, keepdims=True)
        return (v - u) / jnp.sqrt(s + ln_eps) * g + b

    h = input_visits.reshape(B * S, V).astype(f32) @ params["w_emb_t"].astype(f32)
    h = h + jnp.tile(params["pos_emb"][:S].astype(f32), (B, 1))
    mask = jnp.tril(jnp.ones((S, S), f32))
    for layer in params["layers"]:
        xh = ln(h, layer["ln1_g"], layer["ln1_b"])
        qkv = xh @ layer["c_attn_w"].astype(f32) + layer["c_attn_b"]
        qkv = qkv.reshape(B, S, 3, n_head, hd)
        q = qkv[:, :, 0].transpose(0, 2, 1, 3)
        k = qkv[:, :, 1].transpose(0, 2, 1, 3)
        v = qkv[:, :, 2].transpose(0, 2, 1, 3)
        w = jnp.einsum("bhqd,bhkd->bhqk", q, k) / math.sqrt(hd)
        w = w * mask - 1e10 * (1.0 - mask)
        p = jax.nn.softmax(w, axis=-1)
        a = jnp.einsum("bhqk,bhkd->bhqd", p, v).transpose(0, 2, 1, 3).reshape(B * S, D)
        a = a @ layer["c_proj_w"].astype(f32) + layer["c_proj_b"]
        h = h + a
        xh = ln(h, layer["ln2_g"], layer["ln2_b"])
        m = xh @ layer["c_fc_w"].astype(f32) + layer["c_fc_b"]
        m = 0.5 * m * (1.0 + jnp.tanh(math.sqrt(2.0 / math.pi)
                                      * (m + 0.044715 * m ** 3)))
        h = h + (m @ layer["c_proj2_w"].astype(f32) + layer["c_proj2_b"])
    h = ln(h, params["lnf_g"], params["lnf_b"])
    logits = h @ params["w_emb"].astype(f32)
    return jax.nn.sigmoid(logits).reshape(B, S, V)


# --------------------------------- main -------------------------------------

if __name__ == "__main__":
    # Small config consistent with the MediSimConfig fields used by the model.
    B, S = 2, 8
    N_EMBD, N_HEAD, N_LAYER = 32, 4, 2
    N_POSITIONS = 8
    VOCAB = 64
    LN_EPS = 1e-5

    key = jax.random.PRNGKey(0)
    k_params, k_inp = jax.random.split(key)

    params = init_params(k_params, n_embd=N_EMBD, n_head=N_HEAD,
                         n_layer=N_LAYER, n_positions=N_POSITIONS, vocab=VOCAB)

    # input_visits: multi-hot float visit vectors [B, S, V]
    input_visits = jax.random.bernoulli(k_inp, p=0.1,
                                        shape=(B, S, VOCAB)).astype(jnp.float32)

    fwd = jax.jit(functools.partial(gpt_forward, n_head=N_HEAD, ln_eps=LN_EPS))
    code_probs = jax.block_until_ready(fwd(params, input_visits))

    assert code_probs.shape == (B, S, VOCAB)
    probs_f32 = code_probs.astype(jnp.float32)
    assert bool(jnp.all(jnp.isfinite(probs_f32)))
    assert bool(jnp.all((probs_f32 >= 0.0) & (probs_f32 <= 1.0)))

    # Pure-JAX f32 reference (same bf16 weights) — loose tolerance for the bf16
    # activation path.
    ref = gpt_forward_ref(params, input_visits, n_head=N_HEAD, ln_eps=LN_EPS)
    max_err = float(jnp.max(jnp.abs(probs_f32 - ref)))
    assert max_err < 0.03, f"mismatch vs reference: {max_err}"

    print("KERNEL_OK")
</pallas_src>

<mosaic_0001>
module attributes {stable_mosaic.version = 11 : i64} {
  func.func @_linear_kernel(%arg0: i32, %arg1: i32, %arg2: i32, %arg3: memref<8x64xbf16, #tpu.memory_space<vmem>>, %arg4: memref<64x32xbf16, #tpu.memory_space<vmem>>, %arg5: memref<1x32xf32, #tpu.memory_space<vmem>>, %arg6: memref<8x32xbf16, #tpu.memory_space<vmem>>, %arg7: memref<8x32xbf16, #tpu.memory_space<vmem>>) attributes {dimension_semantics = [#tpu.dimension_semantics<parallel>, #tpu.dimension_semantics<parallel>, #tpu.dimension_semantics<arbitrary>], iteration_bounds = array<i64: 2, 1, 1>, scalar_prefetch = 0 : i64, scratch_operands = 0 : i64, tpu.core_type = #tpu.core_type<tc>, window_params = [{transform_indices = @transform_0, window_bounds = array<i64: 8, 64>}, {transform_indices = @transform_1, window_bounds = array<i64: 64, 32>}, {transform_indices = @transform_2, window_bounds = array<i64: 1, 32>}, {transform_indices = @transform_3, window_bounds = array<i64: 8, 32>}, {transform_indices = @transform_4, window_bounds = array<i64: 8, 32>}]} {
    %c0 = arith.constant 0 : index
    %c0_0 = arith.constant 0 : index
    %0 = vector.load %arg3[%c0, %c0_0] : memref<8x64xbf16, #tpu.memory_space<vmem>>, vector<8x64xbf16>
    %c0_1 = arith.constant 0 : index
    %c0_2 = arith.constant 0 : index
    %1 = vector.load %arg4[%c0_1, %c0_2] : memref<64x32xbf16, #tpu.memory_space<vmem>>, vector<64x32xbf16>
    %cst = arith.constant dense<0.000000e+00> : vector<8x32xf32>
    %2 = tpu.matmul %0, %1, %cst {dimension_numbers = #tpu.dot_dimension_numbers<[1], [0], [0], [1], [0, 0, 1, 1], [], []>} : vector<8x64xbf16>, vector<64x32xbf16>, vector<8x32xf32> -> vector<8x32xf32>
    %c0_3 = arith.constant 0 : index
    %c0_4 = arith.constant 0 : index
    %3 = vector.load %arg5[%c0_3, %c0_4] : memref<1x32xf32, #tpu.memory_space<vmem>>, vector<1x32xf32>
    %4 = vector.broadcast %3 : vector<1x32xf32> to vector<8x32xf32>
    %5 = arith.addf %2, %4 : vector<8x32xf32>
    %c0_5 = arith.constant 0 : index
    %c0_6 = arith.constant 0 : index
    %6 = vector.load %arg6[%c0_5, %c0_6] : memref<8x32xbf16, #tpu.memory_space<vmem>>, vector<8x32xbf16>
    %7 = arith.extf %6 : vector<8x32xbf16> to vector<8x32xf32>
    %8 = arith.addf %5, %7 : vector<8x32xf32>
    %9 = arith.truncf %8 : vector<8x32xf32> to vector<8x32xbf16>
    %c0_7 = arith.constant 0 : index
    %c0_8 = arith.constant 0 : index
    %10 = vector.load %arg7[%c0_7, %c0_8] : memref<8x32xbf16, #tpu.memory_space<vmem>>, vector<8x32xbf16>
    tpu.vector_store %arg7[%c0_7, %c0_8], %9 {strides = array<i32>} : memref<8x32xbf16, #tpu.memory_space<vmem>>, vector<8x32xbf16>,
    return
  }
  func.func @transform_0(%arg0: i32, %arg1: i32, %arg2: i32) -> (i32, i32) {
    %c0_i32 = arith.constant 0 : i32
    return %arg0, %arg2 : i32, i32
  }
  func.func @transform_1(%arg0: i32, %arg1: i32, %arg2: i32) -> (i32, i32) {
    %c0_i32 = arith.constant 0 : i32
    return %arg2, %arg1 : i32, i32
  }
  func.func @transform_2(%arg0: i32, %arg1: i32, %arg2: i32) -> (i32, i32) {
    %c0_i32 = arith.constant 0 : i32
    %c0_i32_0 = arith.constant 0 : i32
    return %c0_i32, %arg1 : i32, i32
  }
  func.func @transform_3(%arg0: i32, %arg1: i32, %arg2: i32) -> (i32, i32) {
    %c1_i32 = arith.constant 1 : i32
    %c0_i32 = arith.constant 0 : i32
    %0 = arith.cmpi eq, %c1_i32, %c0_i32 : i32
    %c1_i32_0 = arith.constant 1 : i32
    %1 = arith.select %0, %c1_i32_0, %c1_i32 : i32
    %2 = arith.remsi %arg0, %1 : i32
    %c0_i32_1 = arith.constant 0 : i32
    %3 = arith.cmpi ne, %2, %c0_i32_1 : i32
    %c0_i32_2 = arith.constant 0 : i32
    %4 = arith.cmpi slt, %2, %c0_i32_2 : i32
    %c0_i32_3 = arith.constant 0 : i32
    %5 = arith.cmpi slt, %1, %c0_i32_3 : i32
    %6 = arith.xori %4, %5 : i1
    %7 = arith.andi %6, %3 : i1
    %8 = arith.addi %2, %1 : i32
    %9 = arith.select %7, %8, %2 : i32
    %c0_i32_4 = arith.constant 0 : i32
    return %9, %arg1 : i32, i32
  }
  func.func @transform_4(%arg0: i32, %arg1: i32, %arg2: i32) -> (i32, i32) {
    %c0_i32 = arith.constant 0 : i32
    return %arg0, %arg1 : i32, i32
  }
}

module attributes {stable_mosaic.version = 11 : i64} {
  func.func @_linear_kernel(%arg0: i32, %arg1: i32, %arg2: i32, %arg3: memref<16x32xbf16, #tpu.memory_space<vmem>>, %arg4: memref<32x32xbf16, #tpu.memory_space<vmem>>, %arg5: memref<1x32xf32, #tpu.memory_space<vmem>>, %arg6: memref<16x32xbf16, #tpu.memory_space<vmem>>, %arg7: memref<16x32xbf16, #tpu.memory_space<vmem>>) attributes {dimension_semantics = [#tpu.dimension_semantics<parallel>, #tpu.dimension_semantics<parallel>, #tpu.dimension_semantics<arbitrary>], iteration_bounds = array<i64: 1, 1, 1>, scalar_prefetch = 0 : i64, scratch_operands = 0 : i64, tpu.core_type = #tpu.core_type<tc>, window_params = [{transform_indices = @transform_0, window_bounds = array<i64: 16, 32>}, {transform_indices = @transform_1, window_bounds = array<i64: 32, 32>}, {transform_indices = @transform_2, window_bounds = array<i64: 1, 32>}, {transform_indices = @transform_3, window_bounds = array<i64: 16, 32>}, {transform_indices = @transform_4, window_bounds = array<i64: 16, 32>}]} {
    %c0 = arith.constant 0 : index
    %c0_0 = arith.constant 0 : index
    %0 = vector.load %arg3[%c0, %c0_0] : memref<16x32xbf16, #tpu.memory_space<vmem>>, vector<16x32xbf16>
    %c0_1 = arith.constant 0 : index
    %c0_2 = arith.constant 0 : index
    %1 = vector.load %arg4[%c0_1, %c0_2] : memref<32x32xbf16, #tpu.memory_space<vmem>>, vector<32x32xbf16>
    %cst = arith.constant dense<0.000000e+00> : vector<16x32xf32>
    %2 = tpu.matmul %0, %1, %cst {dimension_numbers = #tpu.dot_dimension_numbers<[1], [0], [0], [1], [0, 0, 1, 1], [], []>} : vector<16x32xbf16>, vector<32x32xbf16>, vector<16x32xf32> -> vector<16x32xf32>
    %c0_3 = arith.constant 0 : index
    %c0_4 = arith.constant 0 : index
    %3 = vector.load %arg5[%c0_3, %c0_4] : memref<1x32xf32, #tpu.memory_space<vmem>>, vector<1x32xf32>
    %4 = vector.broadcast %3 : vector<1x32xf32> to vector<16x32xf32>
    %5 = arith.addf %2, %4 : vector<16x32xf32>
    %c0_5 = arith.constant 0 : index
    %c0_6 = arith.constant 0 : index
    %6 = vector.load %arg6[%c0_5, %c0_6] : memref<16x32xbf16, #tpu.memory_space<vmem>>, vector<16x32xbf16>
    %7 = arith.extf %6 : vector<16x32xbf16> to vector<16x32xf32>
    %8 = arith.addf %5, %7 : vector<16x32xf32>
    %9 = arith.truncf %8 : vector<16x32xf32> to vector<16x32xbf16>
    %c0_7 = arith.constant 0 : index
    %c0_8 = arith.constant 0 : index
    %10 = vector.load %arg7[%c0_7, %c0_8] : memref<16x32xbf16, #tpu.memory_space<vmem>>, vector<16x32xbf16>
    tpu.vector_store %arg7[%c0_7, %c0_8], %9 {strides = array<i32>} : memref<16x32xbf16, #tpu.memory_space<vmem>>, vector<16x32xbf16>,
    return
  }
  func.func @transform_0(%arg0: i32, %arg1: i32, %arg2: i32) -> (i32, i32) {
    %c0_i32 = arith.constant 0 : i32
    return %arg0, %arg2 : i32, i32
  }
  func.func @transform_1(%arg0: i32, %arg1: i32, %arg2: i32) -> (i32, i32) {
    %c0_i32 = arith.constant 0 : i32
    return %arg2, %arg1 : i32, i32
  }
  func.func @transform_2(%arg0: i32, %arg1: i32, %arg2: i32) -> (i32, i32) {
    %c0_i32 = arith.constant 0 : i32
    %c0_i32_0 = arith.constant 0 : i32
    return %c0_i32, %arg1 : i32, i32
  }
  func.func @transform_3(%arg0: i32, %arg1: i32, %arg2: i32) -> (i32, i32) {
    %c0_i32 = arith.constant 0 : i32
    return %arg0, %arg1 : i32, i32
  }
  func.func @transform_4(%arg0: i32, %arg1: i32, %arg2: i32) -> (i32, i32) {
    %c0_i32 = arith.constant 0 : i32
    return %arg0, %arg1 : i32, i32
  }
}

module attributes {stable_mosaic.version = 11 : i64} {
  func.func @_flash_attn_kernel(%arg0: i32, %arg1: i32, %arg2: i32, %arg3: memref<1x8x32xbf16, #tpu.memory_space<vmem>>, %arg4: memref<1x8x32xbf16, #tpu.memory_space<vmem>>, %arg5: memref<1x8x32xbf16, #tpu.memory_space<vmem>>, %arg6: memref<1x8x32xbf16, #tpu.memory_space<vmem>>, %arg7: memref<8x4xf32, #tpu.memory_space<vmem>>, %arg8: memref<8x4xf32, #tpu.memory_space<vmem>>, %arg9: memref<8x32xf32, #tpu.memory_space<vmem>>) attributes {dimension_semantics = [#tpu.dimension_semantics<parallel>, #tpu.dimension_semantics<parallel>, #tpu.dimension_semantics<arbitrary>], iteration_bounds = array<i64: 2, 1, 1>, scalar_prefetch = 0 : i64, scratch_operands = 3 : i64, tpu.core_type = #tpu.core_type<tc>, window_params = [{transform_indices = @transform_0, window_bounds = array<i64: 1, 8, 32>}, {transform_indices = @transform_1, window_bounds = array<i64: 1, 8, 32>}, {transform_indices = @transform_2, window_bounds = array<i64: 1, 8, 32>}, {transform_indices = @transform_3, window_bounds = array<i64: 1, 8, 32>}]} {
    %c0_i32 = arith.constant 0 : i32
    %0 = arith.cmpi eq, %arg2, %c0_i32 : i32
    %1 = arith.extui %0 : i1 to i32
    %c0_i32_0 = arith.constant 0 : i32
    %2 = arith.cmpi ne, %1, %c0_i32_0 : i32
    scf.if %2 {
      %cst = arith.constant -1.000000e+30 : f32
      %9 = vector.broadcast %cst : f32 to vector<8x4xf32>
      %c0 = arith.constant 0 : index
      %c0_4 = arith.constant 0 : index
      %10 = vector.load %arg7[%c0, %c0_4] : memref<8x4xf32, #tpu.memory_space<vmem>>, vector<8x4xf32>
      tpu.vector_store %arg7[%c0, %c0_4], %9 {strides = array<i32>} : memref<8x4xf32, #tpu.memory_space<vmem>>, vector<8x4xf32>,
      %cst_5 = arith.constant 0.000000e+00 : f32
      %11 = vector.broadcast %cst_5 : f32 to vector<8x4xf32>
      %c0_6 = arith.constant 0 : index
      %c0_7 = arith.constant 0 : index
      %12 = vector.load %arg8[%c0_6, %c0_7] : memref<8x4xf32, #tpu.memory_space<vmem>>, vector<8x4xf32>
      tpu.vector_store %arg8[%c0_6, %c0_7], %11 {strides = array<i32>} : memref<8x4xf32, #tpu.memory_space<vmem>>, vector<8x4xf32>,
      %cst_8 = arith.constant 0.000000e+00 : f32
      %13 = vector.broadcast %cst_8 : f32 to vector<8x32xf32>
      %c0_9 = arith.constant 0 : index
      %c0_10 = arith.constant 0 : index
      %14 = vector.load %arg9[%c0_9, %c0_10] : memref<8x32xf32, #tpu.memory_space<vmem>>, vector<8x32xf32>
      tpu.vector_store %arg9[%c0_9, %c0_10], %13 {strides = array<i32>} : memref<8x32xf32, #tpu.memory_space<vmem>>, vector<8x32xf32>,
    } else {
    }
    %3 = arith.cmpi sle, %arg2, %arg1 : i32
    %4 = arith.extui %3 : i1 to i32
    %c0_i32_1 = arith.constant 0 : i32
    %5 = arith.cmpi ne, %4, %c0_i32_1 : i32
    scf.if %5 {
      %c0 = arith.constant 0 : index
      %c0_4 = arith.constant 0 : index
      %c0_5 = arith.constant 0 : index
      %9 = vector.load %arg3[%c0, %c0_4, %c0_5] : memref<1x8x32xbf16, #tpu.memory_space<vmem>>, vector<1x8x32xbf16>
      %10 = vector.shape_cast %9 : vector<1x8x32xbf16> to vector<8x32xbf16>
      %c0_6 = arith.constant 0 : index
      %c0_7 = arith.constant 0 : index
      %c0_8 = arith.constant 0 : index
      %11 = vector.load %arg4[%c0_6, %c0_7, %c0_8] : memref<1x8x32xbf16, #tpu.memory_space<vmem>>, vector<1x8x32xbf16>
      %12 = vector.shape_cast %11 : vector<1x8x32xbf16> to vector<8x32xbf16>
      %c0_9 = arith.constant 0 : index
      %c0_10 = arith.constant 0 : index
      %c0_11 = arith.constant 0 : index
      %13 = vector.load %arg5[%c0_9, %c0_10, %c0_11] : memref<1x8x32xbf16, #tpu.memory_space<vmem>>, vector<1x8x32xbf16>
      %14 = vector.shape_cast %13 : vector<1x8x32xbf16> to vector<8x32xbf16>
      %c8_i32 = arith.constant 8 : i32
      %15 = arith.muli %arg1, %c8_i32 : i32
      %16 = tpu.iota {dimensions = array<i32: 0>} : vector<8x8xi32>
      %17 = vector.broadcast %15 : i32 to vector<8x8xi32>
      %18 = arith.addi %17, %16 : vector<8x8xi32>
      %c8_i32_12 = arith.constant 8 : i32
      %19 = arith.muli %arg2, %c8_i32_12 : i32
      %20 = tpu.iota {dimensions = array<i32: 1>} : vector<8x8xi32>
      %21 = vector.broadcast %19 : i32 to vector<8x8xi32>
      %22 = arith.addi %21, %20 : vector<8x8xi32>
      %23 = arith.cmpi sle, %22, %18 : vector<8x8xi32>
      %24 = vector.extract_strided_slice %10 {offsets = [0, 0], sizes = [8, 8], strides = [1, 1]} : vector<8x32xbf16> to vector<8x8xbf16>
      %25 = vector.extract_strided_slice %12 {offsets = [0, 0], sizes = [8, 8], strides = [1, 1]} : vector<8x32xbf16> to vector<8x8xbf16>
      %cst = arith.constant dense<0.000000e+00> : vector<8x8xf32>
      %26 = tpu.matmul %24, %25, %cst {dimension_numbers = #tpu.dot_dimension_numbers<[1], [1], [0], [0], [0, 0, 1, 0], [], []>} : vector<8x8xbf16>, vector<8x8xbf16>, vector<8x8xf32> -> vector<8x8xf32>
      %cst_13 = arith.constant 0.353553385 : f32
      %27 = vector.broadcast %cst_13 : f32 to vector<8x8xf32>
      %28 = arith.mulf %26, %27 : vector<8x8xf32>
      %cst_14 = arith.constant -1.000000e+10 : f32
      %29 = vector.broadcast %cst_14 : f32 to vector<8x8xf32>
      %30 = arith.select %23, %28, %29 : vector<8x8xi1>, vector<8x8xf32>
      %c0_15 = arith.constant 0 : index
      %c0_16 = arith.constant 0 : index
      %31 = vector.load %arg7[%c0_15, %c0_16] : memref<8x4xf32, #tpu.memory_space<vmem>>, vector<8x1xf32>
      %cst_17 = arith.constant dense<0xFF800000> : vector<8xf32>
      %32 = vector.multi_reduction <maximumf>, %30, %cst_17 [1] : vector<8x8xf32> to vector<8xf32>
      %33 = vector.shape_cast %32 : vector<8xf32> to vector<8x1xf32>
      %34 = arith.maximumf %31, %33 : vector<8x1xf32>
      %35 = arith.subf %31, %34 : vector<8x1xf32>
      %36 = math.exp %35 : vector<8x1xf32>
      %37 = vector.broadcast %34 : vector<8x1xf32> to vector<8x8xf32>
      %38 = arith.subf %30, %37 : vector<8x8xf32>
      %39 = math.exp %38 : vector<8x8xf32>
      %c0_18 = arith.constant 0 : index
      %c0_19 = arith.constant 0 : index
      %40 = vector.load %arg8[%c0_18, %c0_19] : memref<8x4xf32, #tpu.memory_space<vmem>>, vector<8x1xf32>
      %41 = arith.mulf %36, %40 : vector<8x1xf32>
      %cst_20 = arith.constant dense<0.000000e+00> : vector<8xf32>
      %42 = vector.multi_reduction <add>, %39, %cst_20 [1] : vector<8x8xf32> to vector<8xf32>
      %43 = vector.shape_cast %42 : vector<8xf32> to vector<8x1xf32>
      %44 = arith.addf %41, %43 : vector<8x1xf32>
      %c0_21 = arith.constant 0 : index
      %c0_22 = arith.constant 0 : index
      %45 = vector.load %arg8[%c0_21, %c0_22] : memref<8x4xf32, #tpu.memory_space<vmem>>, vector<8x1xf32>
      tpu.vector_store %arg8[%c0_21, %c0_22], %44 {strides = array<i32>} : memref<8x4xf32, #tpu.memory_space<vmem>>, vector<8x1xf32>,
      %c0_23 = arith.constant 0 : index
      %c0_24 = arith.constant 0 : index
      %46 = vector.load %arg9[%c0_23, %c0_24] : memref<8x32xf32, #tpu.memory_space<vmem>>, vector<8x8xf32>
      %47 = vector.broadcast %36 : vector<8x1xf32> to vector<8x8xf32>
      %48 = arith.mulf %47, %46 : vector<8x8xf32>
      %49 = arith.truncf %39 : vector<8x8xf32> to vector<8x8xbf16>
      %50 = vector.extract_strided_slice %14 {offsets = [0, 0], sizes = [8, 8], strides = [1, 1]} : vector<8x32xbf16> to vector<8x8xbf16>
      %cst_25 = arith.constant dense<0.000000e+00> : vector<8x8xf32>
      %51 = tpu.matmul %49, %50, %cst_25 {dimension_numbers = #tpu.dot_dimension_numbers<[1], [0], [0], [1], [0, 0, 1, 1], [], []>} : vector<8x8xbf16>, vector<8x8xbf16>, vector<8x8xf32> -> vector<8x8xf32>
      %52 = arith.addf %48, %51 : vector<8x8xf32>
      %c0_26 = arith.constant 0 : index
      %c0_27 = arith.constant 0 : index
      %53 = vector.load %arg9[%c0_26, %c0_27] : memref<8x32xf32, #tpu.memory_space<vmem>>, vector<8x8xf32>
      tpu.vector_store %arg9[%c0_26, %c0_27], %52 {strides = array<i32>} : memref<8x32xf32, #tpu.memory_space<vmem>>, vector<8x8xf32>,
      %c0_28 = arith.constant 0 : index
      %c0_29 = arith.constant 0 : index
      %54 = vector.load %arg7[%c0_28, %c0_29] : memref<8x4xf32, #tpu.memory_space<vmem>>, vector<8x1xf32>
      tpu.vector_store %arg7[%c0_28, %c0_29], %34 {strides = array<i32>} : memref<8x4xf32, #tpu.memory_space<vmem>>, vector<8x1xf32>,
      %55 = vector.extract_strided_slice %10 {offsets = [0, 8], sizes = [8, 8], strides = [1, 1]} : vector<8x32xbf16> to vector<8x8xbf16>
      %56 = vector.extract_strided_slice %12 {offsets = [0, 8], sizes = [8, 8], strides = [1, 1]} : vector<8x32xbf16> to vector<8x8xbf16>
      %cst_30 = arith.constant dense<0.000000e+00> : vector<8x8xf32>
      %57 = tpu.matmul %55, %56, %cst_30 {dimension_numbers = #tpu.dot_dimension_numbers<[1], [1], [0], [0], [0, 0, 1, 0], [], []>} : vector<8x8xbf16>, vector<8x8xbf16>, vector<8x8xf32> -> vector<8x8xf32>
      %cst_31 = arith.constant 0.353553385 : f32
      %58 = vector.broadcast %cst_31 : f32 to vector<8x8xf32>
      %59 = arith.mulf %57, %58 : vector<8x8xf32>
      %cst_32 = arith.constant -1.000000e+10 : f32
      %60 = vector.broadcast %cst_32 : f32 to vector<8x8xf32>
      %61 = arith.select %23, %59, %60 : vector<8x8xi1>, vector<8x8xf32>
      %c0_33 = arith.constant 0 : index
      %c1 = arith.constant 1 : index
      %62 = vector.load %arg7[%c0_33, %c1] : memref<8x4xf32, #tpu.memory_space<vmem>>, vector<8x1xf32>
      %cst_34 = arith.constant dense<0xFF800000> : vector<8xf32>
      %63 = vector.multi_reduction <maximumf>, %61, %cst_34 [1] : vector<8x8xf32> to vector<8xf32>
      %64 = vector.shape_cast %63 : vector<8xf32> to vector<8x1xf32>
      %65 = arith.maximumf %62, %64 : vector<8x1xf32>
      %66 = arith.subf %62, %65 : vector<8x1xf32>
      %67 = math.exp %66 : vector<8x1xf32>
      %68 = vector.broadcast %65 : vector<8x1xf32> to vector<8x8xf32>
      %69 = arith.subf %61, %68 : vector<8x8xf32>
      %70 = math.exp %69 : vector<8x8xf32>
      %c0_35 = arith.constant 0 : index
      %c1_36 = arith.constant 1 : index
      %71 = vector.load %arg8[%c0_35, %c1_36] : memref<8x4xf32, #tpu.memory_space<vmem>>, vector<8x1xf32>
      %72 = arith.mulf %67, %71 : vector<8x1xf32>
      %cst_37 = arith.constant dense<0.000000e+00> : vector<8xf32>
      %73 = vector.multi_reduction <add>, %70, %cst_37 [1] : vector<8x8xf32> to vector<8xf32>
      %74 = vector.shape_cast %73 : vector<8xf32> to vector<8x1xf32>
      %75 = arith.addf %72, %74 : vector<8x1xf32>
      %c0_38 = arith.constant 0 : index
      %c1_39 = arith.constant 1 : index
      %76 = vector.load %arg8[%c0_38, %c1_39] : memref<8x4xf32, #tpu.memory_space<vmem>>, vector<8x1xf32>
      tpu.vector_store %arg8[%c0_38, %c1_39], %75 {strides = array<i32>} : memref<8x4xf32, #tpu.memory_space<vmem>>, vector<8x1xf32>,
      %c0_40 = arith.constant 0 : index
      %c8 = arith.constant 8 : index
      %77 = vector.load %arg9[%c0_40, %c8] : memref<8x32xf32, #tpu.memory_space<vmem>>, vector<8x8xf32>
      %78 = vector.broadcast %67 : vector<8x1xf32> to vector<8x8xf32>
      %79 = arith.mulf %78, %77 : vector<8x8xf32>
      %80 = arith.truncf %70 : vector<8x8xf32> to vector<8x8xbf16>
      %81 = vector.extract_strided_slice %14 {offsets = [0, 8], sizes = [8, 8], strides = [1, 1]} : vector<8x32xbf16> to vector<8x8xbf16>
      %cst_41 = arith.constant dense<0.000000e+00> : vector<8x8xf32>
      %82 = tpu.matmul %80, %81, %cst_41 {dimension_numbers = #tpu.dot_dimension_numbers<[1], [0], [0], [1], [0, 0, 1, 1], [], []>} : vector<8x8xbf16>, vector<8x8xbf16>, vector<8x8xf32> -> vector<8x8xf32>
      %83 = arith.addf %79, %82 : vector<8x8xf32>
      %c0_42 = arith.constant 0 : index
      %c8_43 = arith.constant 8 : index
      %84 = vector.load %arg9[%c0_42, %c8_43] : memref<8x32xf32, #tpu.memory_space<vmem>>, vector<8x8xf32>
      tpu.vector_store %arg9[%c0_42, %c8_43], %83 {strides = array<i32>} : memref<8x32xf32, #tpu.memory_space<vmem>>, vector<8x8xf32>,
      %c0_44 = arith.constant 0 : index
      %c1_45 = arith.constant 1 : index
      %85 = vector.load %arg7[%c0_44, %c1_45] : memref<8x4xf32, #tpu.memory_space<vmem>>, vector<8x1xf32>
      tpu.vector_store %arg7[%c0_44, %c1_45], %65 {strides = array<i32>} : memref<8x4xf32, #tpu.memory_space<vmem>>, vector<8x1xf32>,
      %86 = vector.extract_strided_slice %10 {offsets = [0, 16], sizes = [8, 8], strides = [1, 1]} : vector<8x32xbf16> to vector<8x8xbf16>
      %87 = vector.extract_strided_slice %12 {offsets = [0, 16], sizes = [8, 8], strides = [1, 1]} : vector<8x32xbf16> to vector<8x8xbf16>
      %cst_46 = arith.constant dense<0.000000e+00> : vector<8x8xf32>
      %88 = tpu.matmul %86, %87, %cst_46 {dimension_numbers = #tpu.dot_dimension_numbers<[1], [1], [0], [0], [0, 0, 1, 0], [], []>} : vector<8x8xbf16>, vector<8x8xbf16>, vector<8x8xf32> -> vector<8x8xf32>
      %cst_47 = arith.constant 0.353553385 : f32
      %89 = vector.broadcast %cst_47 : f32 to vector<8x8xf32>
      %90 = arith.mulf %88, %89 : vector<8x8xf32>
      %cst_48 = arith.constant -1.000000e+10 : f32
      %91 = vector.broadcast %cst_48 : f32 to vector<8x8xf32>
      %92 = arith.select %23, %90, %91 : vector<8x8xi1>, vector<8x8xf32>
      %c0_49 = arith.constant 0 : index
      %c2 = arith.constant 2 : index
      %93 = vector.load %arg7[%c0_49, %c2] : memref<8x4xf32, #tpu.memory_space<vmem>>, vector<8x1xf32>
      %cst_50 = arith.constant dense<0xFF800000> : vector<8xf32>
      %94 = vector.multi_reduction <maximumf>, %92, %cst_50 [1] : vector<8x8xf32> to vector<8xf32>
      %95 = vector.shape_cast %94 : vector<8xf32> to vector<8x1xf32>
      %96 = arith.maximumf %93, %95 : vector<8x1xf32>
      %97 = arith.subf %93, %96 : vector<8x1xf32>
      %98 = math.exp %97 : vector<8x1xf32>
      %99 = vector.broadcast %96 : vector<8x1xf32> to vector<8x8xf32>
      %100 = arith.subf %92, %99 : vector<8x8xf32>
      %101 = math.exp %100 : vector<8x8xf32>
      %c0_51 = arith.constant 0 : index
      %c2_52 = arith.constant 2 : index
      %102 = vector.load %arg8[%c0_51, %c2_52] : memref<8x4xf32, #tpu.memory_space<vmem>>, vector<8x1xf32>
      %103 = arith.mulf %98, %102 : vector<8x1xf32>
      %cst_53 = arith.constant dense<0.000000e+00> : vector<8xf32>
      %104 = vector.multi_reduction <add>, %101, %cst_53 [1] : vector<8x8xf32> to vector<8xf32>
      %105 = vector.shape_cast %104 : vector<8xf32> to vector<8x1xf32>
      %106 = arith.addf %103, %105 : vector<8x1xf32>
      %c0_54 = arith.constant 0 : index
      %c2_55 = arith.constant 2 : index
      %107 = vector.load %arg8[%c0_54, %c2_55] : memref<8x4xf32, #tpu.memory_space<vmem>>, vector<8x1xf32>
      tpu.vector_store %arg8[%c0_54, %c2_55], %106 {strides = array<i32>} : memref<8x4xf32, #tpu.memory_space<vmem>>, vector<8x1xf32>,
      %c0_56 = arith.constant 0 : index
      %c16 = arith.constant 16 : index
      %108 = vector.load %arg9[%c0_56, %c16] : memref<8x32xf32, #tpu.memory_space<vmem>>, vector<8x8xf32>
      %109 = vector.broadcast %98 : vector<8x1xf32> to vector<8x8xf32>
      %110 = arith.mulf %109, %108 : vector<8x8xf32>
      %111 = arith.truncf %101 : vector<8x8xf32> to vector<8x8xbf16>
      %112 = vector.extract_strided_slice %14 {offsets = [0, 16], sizes = [8, 8], strides = [1, 1]} : vector<8x32xbf16> to vector<8x8xbf16>
      %cst_57 = arith.constant dense<0.000000e+00> : vector<8x8xf32>
      %113 = tpu.matmul %111, %112, %cst_57 {dimension_numbers = #tpu.dot_dimension_numbers<[1], [0], [0], [1], [0, 0, 1, 1], [], []>} : vector<8x8xbf16>, vector<8x8xbf16>, vector<8x8xf32> -> vector<8x8xf32>
      %114 = arith.addf %110, %113 : vector<8x8xf32>
      %c0_58 = arith.constant 0 : index
      %c16_59 = arith.constant 16 : index
      %115 = vector.load %arg9[%c0_58, %c16_59] : memref<8x32xf32, #tpu.memory_space<vmem>>, vector<8x8xf32>
      tpu.vector_store %arg9[%c0_58, %c16_59], %114 {strides = array<i32>} : memref<8x32xf32, #tpu.memory_space<vmem>>, vector<8x8xf32>,
      %c0_60 = arith.constant 0 : index
      %c2_61 = arith.constant 2 : index
      %116 = vector.load %arg7[%c0_60, %c2_61] : memref<8x4xf32, #tpu.memory_space<vmem>>, vector<8x1xf32>
      tpu.vector_store %arg7[%c0_60, %c2_61], %96 {strides = array<i32>} : memref<8x4xf32, #tpu.memory_space<vmem>>, vector<8x1xf32>,
      %117 = vector.extract_strided_slice %10 {offsets = [0, 24], sizes = [8, 8], strides = [1, 1]} : vector<8x32xbf16> to vector<8x8xbf16>
      %118 = vector.extract_strided_slice %12 {offsets = [0, 24], sizes = [8, 8], strides = [1, 1]} : vector<8x32xbf16> to vector<8x8xbf16>
      %cst_62 = arith.constant dense<0.000000e+00> : vector<8x8xf32>
      %119 = tpu.matmul %117, %118, %cst_62 {dimension_numbers = #tpu.dot_dimension_numbers<[1], [1], [0], [0], [0, 0, 1, 0], [], []>} : vector<8x8xbf16>, vector<8x8xbf16>, vector<8x8xf32> -> vector<8x8xf32>
      %cst_63 = arith.constant 0.353553385 : f32
      %120 = vector.broadcast %cst_63 : f32 to vector<8x8xf32>
      %121 = arith.mulf %119, %120 : vector<8x8xf32>
      %cst_64 = arith.constant -1.000000e+10 : f32
      %122 = vector.broadcast %cst_64 : f32 to vector<8x8xf32>
      %123 = arith.select %23, %121, %122 : vector<8x8xi1>, vector<8x8xf32>
      %c0_65 = arith.constant 0 : index
      %c3 = arith.constant 3 : index
      %124 = vector.load %arg7[%c0_65, %c3] : memref<8x4xf32, #tpu.memory_space<vmem>>, vector<8x1xf32>
      %cst_66 = arith.constant dense<0xFF800000> : vector<8xf32>
      %125 = vector.multi_reduction <maximumf>, %123, %cst_66 [1] : vector<8x8xf32> to vector<8xf32>
      %126 = vector.shape_cast %125 : vector<8xf32> to vector<8x1xf32>
      %127 = arith.maximumf %124, %126 : vector<8x1xf32>
      %128 = arith.subf %124, %127 : vector<8x1xf32>
      %129 = math.exp %128 : vector<8x1xf32>
      %130 = vector.broadcast %127 : vector<8x1xf32> to vector<8x8xf32>
      %131 = arith.subf %123, %130 : vector<8x8xf32>
      %132 = math.exp %131 : vector<8x8xf32>
      %c0_67 = arith.constant 0 : index
      %c3_68 = arith.constant 3 : index
      %133 = vector.load %arg8[%c0_67, %c3_68] : memref<8x4xf32, #tpu.memory_space<vmem>>, vector<8x1xf32>
      %134 = arith.mulf %129, %133 : vector<8x1xf32>
      %cst_69 = arith.constant dense<0.000000e+00> : vector<8xf32>
      %135 = vector.multi_reduction <add>, %132, %cst_69 [1] : vector<8x8xf32> to vector<8xf32>
      %136 = vector.shape_cast %135 : vector<8xf32> to vector<8x1xf32>
      %137 = arith.addf %134, %136 : vector<8x1xf32>
      %c0_70 = arith.constant 0 : index
      %c3_71 = arith.constant 3 : index
      %138 = vector.load %arg8[%c0_70, %c3_71] : memref<8x4xf32, #tpu.memory_space<vmem>>, vector<8x1xf32>
      tpu.vector_store %arg8[%c0_70, %c3_71], %137 {strides = array<i32>} : memref<8x4xf32, #tpu.memory_space<vmem>>, vector<8x1xf32>,
      %c0_72 = arith.constant 0 : index
      %c24 = arith.constant 24 : index
      %139 = vector.load %arg9[%c0_72, %c24] : memref<8x32xf32, #tpu.memory_space<vmem>>, vector<8x8xf32>
      %140 = vector.broadcast %129 : vector<8x1xf32> to vector<8x8xf32>
      %141 = arith.mulf %140, %139 : vector<8x8xf32>
      %142 = arith.truncf %132 : vector<8x8xf32> to vector<8x8xbf16>
      %143 = vector.extract_strided_slice %14 {offsets = [0, 24], sizes = [8, 8], strides = [1, 1]} : vector<8x32xbf16> to vector<8x8xbf16>
      %cst_73 = arith.constant dense<0.000000e+00> : vector<8x8xf32>
      %144 = tpu.matmul %142, %143, %cst_73 {dimension_numbers = #tpu.dot_dimension_numbers<[1], [0], [0], [1], [0, 0, 1, 1], [], []>} : vector<8x8xbf16>, vector<8x8xbf16>, vector<8x8xf32> -> vector<8x8xf32>
      %145 = arith.addf %141, %144 : vector<8x8xf32>
      %c0_74 = arith.constant 0 : index
      %c24_75 = arith.constant 24 : index
      %146 = vector.load %arg9[%c0_74, %c24_75] : memref<8x32xf32, #tpu.memory_space<vmem>>, vector<8x8xf32>
      tpu.vector_store %arg9[%c0_74, %c24_75], %145 {strides = array<i32>} : memref<8x32xf32, #tpu.memory_space<vmem>>, vector<8x8xf32>,
      %c0_76 = arith.constant 0 : index
      %c3_77 = arith.constant 3 : index
      %147 = vector.load %arg7[%c0_76, %c3_77] : memref<8x4xf32, #tpu.memory_space<vmem>>, vector<8x1xf32>
      tpu.vector_store %arg7[%c0_76, %c3_77], %127 {strides = array<i32>} : memref<8x4xf32, #tpu.memory_space<vmem>>, vector<8x1xf32>,
    } else {
    }
    %c0_i32_2 = arith.constant 0 : i32
    %6 = arith.cmpi eq, %arg2, %c0_i32_2 : i32
    %7 = arith.extui %6 : i1 to i32
    %c0_i32_3 = arith.constant 0 : i32
    %8 = arith.cmpi ne, %7, %c0_i32_3 : i32
    scf.if %8 {
      %c0 = arith.constant 0 : index
      %c0_4 = arith.constant 0 : index
      %9 = vector.load %arg8[%c0, %c0_4] : memref<8x4xf32, #tpu.memory_space<vmem>>, vector<8x1xf32>
      %10 = tpu.reciprocal %9 : vector<8x1xf32> -> vector<8x1xf32>
      %c0_5 = arith.constant 0 : index
      %c0_6 = arith.constant 0 : index
      %11 = vector.load %arg9[%c0_5, %c0_6] : memref<8x32xf32, #tpu.memory_space<vmem>>, vector<8x8xf32>
      %12 = vector.broadcast %10 : vector<8x1xf32> to vector<8x8xf32>
      %13 = arith.mulf %11, %12 : vector<8x8xf32>
      %14 = arith.truncf %13 : vector<8x8xf32> to vector<8x8xbf16>
      %c0_7 = arith.constant 0 : index
      %c0_8 = arith.constant 0 : index
      %c0_9 = arith.constant 0 : index
      %15 = vector.load %arg6[%c0_7, %c0_8, %c0_9] : memref<1x8x32xbf16, #tpu.memory_space<vmem>>, vector<1x8x8xbf16>
      %16 = vector.shape_cast %15 : vector<1x8x8xbf16> to vector<8x8xbf16>
      %17 = vector.shape_cast %14 : vector<8x8xbf16> to vector<1x8x8xbf16>
      tpu.vector_store %arg6[%c0_7, %c0_8, %c0_9], %17 {strides = array<i32>} : memref<1x8x32xbf16, #tpu.memory_space<vmem>>, vector<1x8x8xbf16>,
      %c0_10 = arith.constant 0 : index
      %c1 = arith.constant 1 : index
      %18 = vector.load %arg8[%c0_10, %c1] : memref<8x4xf32, #tpu.memory_space<vmem>>, vector<8x1xf32>
      %19 = tpu.reciprocal %18 : vector<8x1xf32> -> vector<8x1xf32>
      %c0_11 = arith.constant 0 : index
      %c8 = arith.constant 8 : index
      %20 = vector.load %arg9[%c0_11, %c8] : memref<8x32xf32, #tpu.memory_space<vmem>>, vector<8x8xf32>
      %21 = vector.broadcast %19 : vector<8x1xf32> to vector<8x8xf32>
      %22 = arith.mulf %20, %21 : vector<8x8xf32>
      %23 = arith.truncf %22 : vector<8x8xf32> to vector<8x8xbf16>
      %c0_12 = arith.constant 0 : index
      %c0_13 = arith.constant 0 : index
      %c8_14 = arith.constant 8 : index
      %24 = vector.load %arg6[%c0_12, %c0_13, %c8_14] : memref<1x8x32xbf16, #tpu.memory_space<vmem>>, vector<1x8x8xbf16>
      %25 = vector.shape_cast %24 : vector<1x8x8xbf16> to vector<8x8xbf16>
      %26 = vector.shape_cast %23 : vector<8x8xbf16> to vector<1x8x8xbf16>
      tpu.vector_store %arg6[%c0_12, %c0_13, %c8_14], %26 {strides = array<i32>} : memref<1x8x32xbf16, #tpu.memory_space<vmem>>, vector<1x8x8xbf16>,
      %c0_15 = arith.constant 0 : index
      %c2 = arith.constant 2 : index
      %27 = vector.load %arg8[%c0_15, %c2] : memref<8x4xf32, #tpu.memory_space<vmem>>, vector<8x1xf32>
      %28 = tpu.reciprocal %27 : vector<8x1xf32> -> vector<8x1xf32>
      %c0_16 = arith.constant 0 : index
      %c16 = arith.constant 16 : index
      %29 = vector.load %arg9[%c0_16, %c16] : memref<8x32xf32, #tpu.memory_space<vmem>>, vector<8x8xf32>
      %30 = vector.broadcast %28 : vector<8x1xf32> to vector<8x8xf32>
      %31 = arith.mulf %29, %30 : vector<8x8xf32>
      %32 = arith.truncf %31 : vector<8x8xf32> to vector<8x8xbf16>
      %c0_17 = arith.constant 0 : index
      %c0_18 = arith.constant 0 : index
      %c16_19 = arith.constant 16 : index
      %33 = vector.load %arg6[%c0_17, %c0_18, %c16_19] : memref<1x8x32xbf16, #tpu.memory_space<vmem>>, vector<1x8x8xbf16>
      %34 = vector.shape_cast %33 : vector<1x8x8xbf16> to vector<8x8xbf16>
      %35 = vector.shape_cast %32 : vector<8x8xbf16> to vector<1x8x8xbf16>
      tpu.vector_store %arg6[%c0_17, %c0_18, %c16_19], %35 {strides = array<i32>} : memref<1x8x32xbf16, #tpu.memory_space<vmem>>, vector<1x8x8xbf16>,
      %c0_20 = arith.constant 0 : index
      %c3 = arith.constant 3 : index
      %36 = vector.load %arg8[%c0_20, %c3] : memref<8x4xf32, #tpu.memory_space<vmem>>, vector<8x1xf32>
      %37 = tpu.reciprocal %36 : vector<8x1xf32> -> vector<8x1xf32>
      %c0_21 = arith.constant 0 : index
      %c24 = arith.constant 24 : index
      %38 = vector.load %arg9[%c0_21, %c24] : memref<8x32xf32, #tpu.memory_space<vmem>>, vector<8x8xf32>
      %39 = vector.broadcast %37 : vector<8x1xf32> to vector<8x8xf32>
      %40 = arith.mulf %38, %39 : vector<8x8xf32>
      %41 = arith.truncf %40 : vector<8x8xf32> to vector<8x8xbf16>
      %c0_22 = arith.constant 0 : index
      %c0_23 = arith.constant 0 : index
      %c24_24 = arith.constant 24 : index
      %42 = vector.load %arg6[%c0_22, %c0_23, %c24_24] : memref<1x8x32xbf16, #tpu.memory_space<vmem>>, vector<1x8x8xbf16>
      %43 = vector.shape_cast %42 : vector<1x8x8xbf16> to vector<8x8xbf16>
      %44 = vector.shape_cast %41 : vector<8x8xbf16> to vector<1x8x8xbf16>
      tpu.vector_store %arg6[%c0_22, %c0_23, %c24_24], %44 {strides = array<i32>} : memref<1x8x32xbf16, #tpu.memory_space<vmem>>, vector<1x8x8xbf16>,
    } else {
    }
    return
  }
  func.func @transform_0(%arg0: i32, %arg1: i32, %arg2: i32) -> (i32, i32, i32) {
    %c0_i32 = arith.constant 0 : i32
    %c0_i32_0 = arith.constant 0 : i32
    return %arg0, %arg1, %c0_i32 : i32, i32, i32
  }
  func.func @transform_1(%arg0: i32, %arg1: i32, %arg2: i32) -> (i32, i32, i32) {
    %0 = arith.minsi %arg2, %arg1 : i32
    %c0_i32 = arith.constant 0 : i32
    %c0_i32_0 = arith.constant 0 : i32
    return %arg0, %0, %c0_i32 : i32, i32, i32
  }
  func.func @transform_2(%arg0: i32, %arg1: i32, %arg2: i32) -> (i32, i32, i32) {
    %0 = arith.minsi %arg2, %arg1 : i32
    %c0_i32 = arith.constant 0 : i32
    %c0_i32_0 = arith.constant 0 : i32
    return %arg0, %0, %c0_i32 : i32, i32, i32
  }
  func.func @transform_3(%arg0: i32, %arg1: i32, %arg2: i32) -> (i32, i32, i32) {
    %c0_i32 = arith.constant 0 : i32
    %c0_i32_0 = arith.constant 0 : i32
    return %arg0, %arg1, %c0_i32 : i32, i32, i32
  }
}

module attributes {stable_mosaic.version = 11 : i64} {
  func.func @_linear_kernel(%arg0: i32, %arg1: i32, %arg2: i32, %arg3: memref<16x32xbf16, #tpu.memory_space<vmem>>, %arg4: memref<32x96xbf16, #tpu.memory_space<vmem>>, %arg5: memref<1x96xf32, #tpu.memory_space<vmem>>, %arg6: memref<1x32xf32, #tpu.memory_space<vmem>>, %arg7: memref<1x32xf32, #tpu.memory_space<vmem>>, %arg8: memref<16x96xbf16, #tpu.memory_space<vmem>>, %arg9: memref<16x32xbf16, #tpu.memory_space<vmem>>) attributes {dimension_semantics = [#tpu.dimension_semantics<parallel>, #tpu.dimension_semantics<arbitrary>, #tpu.dimension_semantics<arbitrary>], iteration_bounds = array<i64: 1, 1, 1>, scalar_prefetch = 0 : i64, scratch_operands = 1 : i64, tpu.core_type = #tpu.core_type<tc>, window_params = [{transform_indices = @transform_0, window_bounds = array<i64: 16, 32>}, {transform_indices = @transform_1, window_bounds = array<i64: 32, 96>}, {transform_indices = @transform_2, window_bounds = array<i64: 1, 96>}, {transform_indices = @transform_3, window_bounds = array<i64: 1, 32>}, {transform_indices = @transform_4, window_bounds = array<i64: 1, 32>}, {transform_indices = @transform_5, window_bounds = array<i64: 16, 96>}]} {
    %c0_i32 = arith.constant 0 : i32
    %0 = arith.cmpi eq, %arg1, %c0_i32 : i32
    %1 = arith.extui %0 : i1 to i32
    %c0_i32_0 = arith.constant 0 : i32
    %2 = arith.cmpi ne, %1, %c0_i32_0 : i32
    scf.if %2 {
      %c0_8 = arith.constant 0 : index
      %c0_9 = arith.constant 0 : index
      %11 = vector.load %arg3[%c0_8, %c0_9] : memref<16x32xbf16, #tpu.memory_space<vmem>>, vector<16x32xbf16>
      %12 = arith.extf %11 : vector<16x32xbf16> to vector<16x32xf32>
      %cst_10 = arith.constant dense<0.000000e+00> : vector<16xf32>
      %13 = vector.multi_reduction <add>, %12, %cst_10 [1] : vector<16x32xf32> to vector<16xf32>
      %14 = vector.shape_cast %13 : vector<16xf32> to vector<16x1xf32>
      %cst_11 = arith.constant 3.200000e+01 : f32
      %15 = vector.broadcast %cst_11 : f32 to vector<16x1xf32>
      %16 = arith.divf %14, %15 : vector<16x1xf32>
      %17 = vector.broadcast %16 : vector<16x1xf32> to vector<16x32xf32>
      %18 = arith.subf %12, %17 : vector<16x32xf32>
      %19 = arith.mulf %18, %18 : vector<16x32xf32>
      %cst_12 = arith.constant dense<0.000000e+00> : vector<16xf32>
      %20 = vector.multi_reduction <add>, %19, %cst_12 [1] : vector<16x32xf32> to vector<16xf32>
      %21 = vector.shape_cast %20 : vector<16xf32> to vector<16x1xf32>
      %cst_13 = arith.constant 3.200000e+01 : f32
      %22 = vector.broadcast %cst_13 : f32 to vector<16x1xf32>
      %23 = arith.divf %21, %22 : vector<16x1xf32>
      %cst_14 = arith.constant 9.99999974E-6 : f32
      %24 = vector.broadcast %cst_14 : f32 to vector<16x1xf32>
      %25 = arith.addf %23, %24 : vector<16x1xf32>
      %26 = math.rsqrt %25 : vector<16x1xf32>
      %27 = vector.broadcast %26 : vector<16x1xf32> to vector<16x32xf32>
      %28 = arith.mulf %18, %27 : vector<16x32xf32>
      %c0_15 = arith.constant 0 : index
      %c0_16 = arith.constant 0 : index
      %29 = vector.load %arg6[%c0_15, %c0_16] : memref<1x32xf32, #tpu.memory_space<vmem>>, vector<1x32xf32>
      %30 = vector.broadcast %29 : vector<1x32xf32> to vector<16x32xf32>
      %31 = arith.mulf %28, %30 : vector<16x32xf32>
      %c0_17 = arith.constant 0 : index
      %c0_18 = arith.constant 0 : index
      %32 = vector.load %arg7[%c0_17, %c0_18] : memref<1x32xf32, #tpu.memory_space<vmem>>, vector<1x32xf32>
      %33 = vector.broadcast %32 : vector<1x32xf32> to vector<16x32xf32>
      %34 = arith.addf %31, %33 : vector<16x32xf32>
      %35 = arith.truncf %34 : vector<16x32xf32> to vector<16x32xbf16>
      %c0_19 = arith.constant 0 : index
      %c0_20 = arith.constant 0 : index
      %36 = vector.load %arg9[%c0_19, %c0_20] : memref<16x32xbf16, #tpu.memory_space<vmem>>, vector<16x32xbf16>
      tpu.vector_store %arg9[%c0_19, %c0_20], %35 {strides = array<i32>} : memref<16x32xbf16, #tpu.memory_space<vmem>>, vector<16x32xbf16>,
    } else {
    }
    %c0 = arith.constant 0 : index
    %c0_1 = arith.constant 0 : index
    %3 = vector.load %arg9[%c0, %c0_1] : memref<16x32xbf16, #tpu.memory_space<vmem>>, vector<16x32xbf16>
    %c0_2 = arith.constant 0 : index
    %c0_3 = arith.constant 0 : index
    %4 = vector.load %arg4[%c0_2, %c0_3] : memref<32x96xbf16, #tpu.memory_space<vmem>>, vector<32x96xbf16>
    %cst = arith.constant dense<0.000000e+00> : vector<16x96xf32>
    %5 = tpu.matmul %3, %4, %cst {dimension_numbers = #tpu.dot_dimension_numbers<[1], [0], [0], [1], [0, 0, 1, 1], [], []>} : vector<16x32xbf16>, vector<32x96xbf16>, vector<16x96xf32> -> vector<16x96xf32>
    %c0_4 = arith.constant 0 : index
    %c0_5 = arith.constant 0 : index
    %6 = vector.load %arg5[%c0_4, %c0_5] : memref<1x96xf32, #tpu.memory_space<vmem>>, vector<1x96xf32>
    %7 = vector.broadcast %6 : vector<1x96xf32> to vector<16x96xf32>
    %8 = arith.addf %5, %7 : vector<16x96xf32>
    %9 = arith.truncf %8 : vector<16x96xf32> to vector<16x96xbf16>
    %c0_6 = arith.constant 0 : index
    %c0_7 = arith.constant 0 : index
    %10 = vector.load %arg8[%c0_6, %c0_7] : memref<16x96xbf16, #tpu.memory_space<vmem>>, vector<16x96xbf16>
    tpu.vector_store %arg8[%c0_6, %c0_7], %9 {strides = array<i32>} : memref<16x96xbf16, #tpu.memory_space<vmem>>, vector<16x96xbf16>,
    return
  }
  func.func @transform_0(%arg0: i32, %arg1: i32, %arg2: i32) -> (i32, i32) {
    %c0_i32 = arith.constant 0 : i32
    return %arg0, %arg2 : i32, i32
  }
  func.func @transform_1(%arg0: i32, %arg1: i32, %arg2: i32) -> (i32, i32) {
    %c0_i32 = arith.constant 0 : i32
    return %arg2, %arg1 : i32, i32
  }
  func.func @transform_2(%arg0: i32, %arg1: i32, %arg2: i32) -> (i32, i32) {
    %c0_i32 = arith.constant 0 : i32
    %c0_i32_0 = arith.constant 0 : i32
    return %c0_i32, %arg1 : i32, i32
  }
  func.func @transform_3(%arg0: i32, %arg1: i32, %arg2: i32) -> (i32, i32) {
    %c0_i32 = arith.constant 0 : i32
    %c0_i32_0 = arith.constant 0 : i32
    return %c0_i32, %arg2 : i32, i32
  }
  func.func @transform_4(%arg0: i32, %arg1: i32, %arg2: i32) -> (i32, i32) {
    %c0_i32 = arith.constant 0 : i32
    %c0_i32_0 = arith.constant 0 : i32
    return %c0_i32, %arg2 : i32, i32
  }
  func.func @transform_5(%arg0: i32, %arg1: i32, %arg2: i32) -> (i32, i32) {
    %c0_i32 = arith.constant 0 : i32
    return %arg0, %arg1 : i32, i32
  }
}

module attributes {stable_mosaic.version = 11 : i64} {
  func.func @_linear_kernel(%arg0: i32, %arg1: i32, %arg2: i32, %arg3: memref<16x32xbf16, #tpu.memory_space<vmem>>, %arg4: memref<32x128xbf16, #tpu.memory_space<vmem>>, %arg5: memref<1x128xf32, #tpu.memory_space<vmem>>, %arg6: memref<1x32xf32, #tpu.memory_space<vmem>>, %arg7: memref<1x32xf32, #tpu.memory_space<vmem>>, %arg8: memref<16x128xbf16, #tpu.memory_space<vmem>>, %arg9: memref<16x32xbf16, #tpu.memory_space<vmem>>) attributes {dimension_semantics = [#tpu.dimension_semantics<parallel>, #tpu.dimension_semantics<arbitrary>, #tpu.dimension_semantics<arbitrary>], iteration_bounds = array<i64: 1, 1, 1>, scalar_prefetch = 0 : i64, scratch_operands = 1 : i64, tpu.core_type = #tpu.core_type<tc>, window_params = [{transform_indices = @transform_0, window_bounds = array<i64: 16, 32>}, {transform_indices = @transform_1, window_bounds = array<i64: 32, 128>}, {transform_indices = @transform_2, window_bounds = array<i64: 1, 128>}, {transform_indices = @transform_3, window_bounds = array<i64: 1, 32>}, {transform_indices = @transform_4, window_bounds = array<i64: 1, 32>}, {transform_indices = @transform_5, window_bounds = array<i64: 16, 128>}]} {
    %c0_i32 = arith.constant 0 : i32
    %0 = arith.cmpi eq, %arg1, %c0_i32 : i32
    %1 = arith.extui %0 : i1 to i32
    %c0_i32_0 = arith.constant 0 : i32
    %2 = arith.cmpi ne, %1, %c0_i32_0 : i32
    scf.if %2 {
      %c0_12 = arith.constant 0 : index
      %c0_13 = arith.constant 0 : index
      %24 = vector.load %arg3[%c0_12, %c0_13] : memref<16x32xbf16, #tpu.memory_space<vmem>>, vector<16x32xbf16>
      %25 = arith.extf %24 : vector<16x32xbf16> to vector<16x32xf32>
      %cst_14 = arith.constant dense<0.000000e+00> : vector<16xf32>
      %26 = vector.multi_reduction <add>, %25, %cst_14 [1] : vector<16x32xf32> to vector<16xf32>
      %27 = vector.shape_cast %26 : vector<16xf32> to vector<16x1xf32>
      %cst_15 = arith.constant 3.200000e+01 : f32
      %28 = vector.broadcast %cst_15 : f32 to vector<16x1xf32>
      %29 = arith.divf %27, %28 : vector<16x1xf32>
      %30 = vector.broadcast %29 : vector<16x1xf32> to vector<16x32xf32>
      %31 = arith.subf %25, %30 : vector<16x32xf32>
      %32 = arith.mulf %31, %31 : vector<16x32xf32>
      %cst_16 = arith.constant dense<0.000000e+00> : vector<16xf32>
      %33 = vector.multi_reduction <add>, %32, %cst_16 [1] : vector<16x32xf32> to vector<16xf32>
      %34 = vector.shape_cast %33 : vector<16xf32> to vector<16x1xf32>
      %cst_17 = arith.constant 3.200000e+01 : f32
      %35 = vector.broadcast %cst_17 : f32 to vector<16x1xf32>
      %36 = arith.divf %34, %35 : vector<16x1xf32>
      %cst_18 = arith.constant 9.99999974E-6 : f32
      %37 = vector.broadcast %cst_18 : f32 to vector<16x1xf32>
      %38 = arith.addf %36, %37 : vector<16x1xf32>
      %39 = math.rsqrt %38 : vector<16x1xf32>
      %40 = vector.broadcast %39 : vector<16x1xf32> to vector<16x32xf32>
      %41 = arith.mulf %31, %40 : vector<16x32xf32>
      %c0_19 = arith.constant 0 : index
      %c0_20 = arith.constant 0 : index
      %42 = vector.load %arg6[%c0_19, %c0_20] : memref<1x32xf32, #tpu.memory_space<vmem>>, vector<1x32xf32>
      %43 = vector.broadcast %42 : vector<1x32xf32> to vector<16x32xf32>
      %44 = arith.mulf %41, %43 : vector<16x32xf32>
      %c0_21 = arith.constant 0 : index
      %c0_22 = arith.constant 0 : index
      %45 = vector.load %arg7[%c0_21, %c0_22] : memref<1x32xf32, #tpu.memory_space<vmem>>, vector<1x32xf32>
      %46 = vector.broadcast %45 : vector<1x32xf32> to vector<16x32xf32>
      %47 = arith.addf %44, %46 : vector<16x32xf32>
      %48 = arith.truncf %47 : vector<16x32xf32> to vector<16x32xbf16>
      %c0_23 = arith.constant 0 : index
      %c0_24 = arith.constant 0 : index
      %49 = vector.load %arg9[%c0_23, %c0_24] : memref<16x32xbf16, #tpu.memory_space<vmem>>, vector<16x32xbf16>
      tpu.vector_store %arg9[%c0_23, %c0_24], %48 {strides = array<i32>} : memref<16x32xbf16, #tpu.memory_space<vmem>>, vector<16x32xbf16>,
    } else {
    }
    %c0 = arith.constant 0 : index
    %c0_1 = arith.constant 0 : index
    %3 = vector.load %arg9[%c0, %c0_1] : memref<16x32xbf16, #tpu.memory_space<vmem>>, vector<16x32xbf16>
    %c0_2 = arith.constant 0 : index
    %c0_3 = arith.constant 0 : index
    %4 = vector.load %arg4[%c0_2, %c0_3] : memref<32x128xbf16, #tpu.memory_space<vmem>>, vector<32x128xbf16>
    %cst = arith.constant dense<0.000000e+00> : vector<16x128xf32>
    %5 = tpu.matmul %3, %4, %cst {dimension_numbers = #tpu.dot_dimension_numbers<[1], [0], [0], [1], [0, 0, 1, 1], [], []>} : vector<16x32xbf16>, vector<32x128xbf16>, vector<16x128xf32> -> vector<16x128xf32>
    %c0_4 = arith.constant 0 : index
    %c0_5 = arith.constant 0 : index
    %6 = vector.load %arg5[%c0_4, %c0_5] : memref<1x128xf32, #tpu.memory_space<vmem>>, vector<1x128xf32>
    %7 = vector.broadcast %6 : vector<1x128xf32> to vector<16x128xf32>
    %8 = arith.addf %5, %7 : vector<16x128xf32>
    %cst_6 = arith.constant 5.000000e-01 : f32
    %9 = vector.broadcast %cst_6 : f32 to vector<16x128xf32>
    %10 = arith.mulf %9, %8 : vector<16x128xf32>
    %11 = arith.mulf %8, %8 : vector<16x128xf32>
    %12 = arith.mulf %11, %8 : vector<16x128xf32>
    %cst_7 = arith.constant 4.471500e-02 : f32
    %13 = vector.broadcast %cst_7 : f32 to vector<16x128xf32>
    %14 = arith.mulf %13, %12 : vector<16x128xf32>
    %15 = arith.addf %8, %14 : vector<16x128xf32>
    %cst_8 = arith.constant 0.797884583 : f32
    %16 = vector.broadcast %cst_8 : f32 to vector<16x128xf32>
    %17 = arith.mulf %16, %15 : vector<16x128xf32>
    %18 = math.tanh %17 : vector<16x128xf32>
    %cst_9 = arith.constant 1.000000e+00 : f32
    %19 = vector.broadcast %cst_9 : f32 to vector<16x128xf32>
    %20 = arith.addf %19, %18 : vector<16x128xf32>
    %21 = arith.mulf %10, %20 : vector<16x128xf32>
    %22 = arith.truncf %21 : vector<16x128xf32> to vector<16x128xbf16>
    %c0_10 = arith.constant 0 : index
    %c0_11 = arith.constant 0 : index
    %23 = vector.load %arg8[%c0_10, %c0_11] : memref<16x128xbf16, #tpu.memory_space<vmem>>, vector<16x128xbf16>
    tpu.vector_store %arg8[%c0_10, %c0_11], %22 {strides = array<i32>} : memref<16x128xbf16, #tpu.memory_space<vmem>>, vector<16x128xbf16>,
    return
  }
  func.func @transform_0(%arg0: i32, %arg1: i32, %arg2: i32) -> (i32, i32) {
    %c0_i32 = arith.constant 0 : i32
    return %arg0, %arg2 : i32, i32
  }
  func.func @transform_1(%arg0: i32, %arg1: i32, %arg2: i32) -> (i32, i32) {
    %c0_i32 = arith.constant 0 : i32
    return %arg2, %arg1 : i32, i32
  }
  func.func @transform_2(%arg0: i32, %arg1: i32, %arg2: i32) -> (i32, i32) {
    %c0_i32 = arith.constant 0 : i32
    %c0_i32_0 = arith.constant 0 : i32
    return %c0_i32, %arg1 : i32, i32
  }
  func.func @transform_3(%arg0: i32, %arg1: i32, %arg2: i32) -> (i32, i32) {
    %c0_i32 = arith.constant 0 : i32
    %c0_i32_0 = arith.constant 0 : i32
    return %c0_i32, %arg2 : i32, i32
  }
  func.func @transform_4(%arg0: i32, %arg1: i32, %arg2: i32) -> (i32, i32) {
    %c0_i32 = arith.constant 0 : i32
    %c0_i32_0 = arith.constant 0 : i32
    return %c0_i32, %arg2 : i32, i32
  }
  func.func @transform_5(%arg0: i32, %arg1: i32, %arg2: i32) -> (i32, i32) {
    %c0_i32 = arith.constant 0 : i32
    return %arg0, %arg1 : i32, i32
  }
}

module attributes {stable_mosaic.version = 11 : i64} {
  func.func @_linear_kernel(%arg0: i32, %arg1: i32, %arg2: i32, %arg3: memref<16x128xbf16, #tpu.memory_space<vmem>>, %arg4: memref<128x32xbf16, #tpu.memory_space<vmem>>, %arg5: memref<1x32xf32, #tpu.memory_space<vmem>>, %arg6: memref<16x32xbf16, #tpu.memory_space<vmem>>, %arg7: memref<16x32xbf16, #tpu.memory_space<vmem>>) attributes {dimension_semantics = [#tpu.dimension_semantics<parallel>, #tpu.dimension_semantics<parallel>, #tpu.dimension_semantics<arbitrary>], iteration_bounds = array<i64: 1, 1, 1>, scalar_prefetch = 0 : i64, scratch_operands = 0 : i64, tpu.core_type = #tpu.core_type<tc>, window_params = [{transform_indices = @transform_0, window_bounds = array<i64: 16, 128>}, {transform_indices = @transform_1, window_bounds = array<i64: 128, 32>}, {transform_indices = @transform_2, window_bounds = array<i64: 1, 32>}, {transform_indices = @transform_3, window_bounds = array<i64: 16, 32>}, {transform_indices = @transform_4, window_bounds = array<i64: 16, 32>}]} {
    %c0 = arith.constant 0 : index
    %c0_0 = arith.constant 0 : index
    %0 = vector.load %arg3[%c0, %c0_0] : memref<16x128xbf16, #tpu.memory_space<vmem>>, vector<16x128xbf16>
    %c0_1 = arith.constant 0 : index
    %c0_2 = arith.constant 0 : index
    %1 = vector.load %arg4[%c0_1, %c0_2] : memref<128x32xbf16, #tpu.memory_space<vmem>>, vector<128x32xbf16>
    %cst = arith.constant dense<0.000000e+00> : vector<16x32xf32>
    %2 = tpu.matmul %0, %1, %cst {dimension_numbers = #tpu.dot_dimension_numbers<[1], [0], [0], [1], [0, 0, 1, 1], [], []>} : vector<16x128xbf16>, vector<128x32xbf16>, vector<16x32xf32> -> vector<16x32xf32>
    %c0_3 = arith.constant 0 : index
    %c0_4 = arith.constant 0 : index
    %3 = vector.load %arg5[%c0_3, %c0_4] : memref<1x32xf32, #tpu.memory_space<vmem>>, vector<1x32xf32>
    %4 = vector.broadcast %3 : vector<1x32xf32> to vector<16x32xf32>
    %5 = arith.addf %2, %4 : vector<16x32xf32>
    %c0_5 = arith.constant 0 : index
    %c0_6 = arith.constant 0 : index
    %6 = vector.load %arg6[%c0_5, %c0_6] : memref<16x32xbf16, #tpu.memory_space<vmem>>, vector<16x32xbf16>
    %7 = arith.extf %6 : vector<16x32xbf16> to vector<16x32xf32>
    %8 = arith.addf %5, %7 : vector<16x32xf32>
    %9 = arith.truncf %8 : vector<16x32xf32> to vector<16x32xbf16>
    %c0_7 = arith.constant 0 : index
    %c0_8 = arith.constant 0 : index
    %10 = vector.load %arg7[%c0_7, %c0_8] : memref<16x32xbf16, #tpu.memory_space<vmem>>, vector<16x32xbf16>
    tpu.vector_store %arg7[%c0_7, %c0_8], %9 {strides = array<i32>} : memref<16x32xbf16, #tpu.memory_space<vmem>>, vector<16x32xbf16>,
    return
  }
  func.func @transform_0(%arg0: i32, %arg1: i32, %arg2: i32) -> (i32, i32) {
    %c0_i32 = arith.constant 0 : i32
    return %arg0, %arg2 : i32, i32
  }
  func.func @transform_1(%arg0: i32, %arg1: i32, %arg2: i32) -> (i32, i32) {
    %c0_i32 = arith.constant 0 : i32
    return %arg2, %arg1 : i32, i32
  }
  func.func @transform_2(%arg0: i32, %arg1: i32, %arg2: i32) -> (i32, i32) {
    %c0_i32 = arith.constant 0 : i32
    %c0_i32_0 = arith.constant 0 : i32
    return %c0_i32, %arg1 : i32, i32
  }
  func.func @transform_3(%arg0: i32, %arg1: i32, %arg2: i32) -> (i32, i32) {
    %c0_i32 = arith.constant 0 : i32
    return %arg0, %arg1 : i32, i32
  }
  func.func @transform_4(%arg0: i32, %arg1: i32, %arg2: i32) -> (i32, i32) {
    %c0_i32 = arith.constant 0 : i32
    return %arg0, %arg1 : i32, i32
  }
}

module attributes {stable_mosaic.version = 11 : i64} {
  func.func @_linear_kernel(%arg0: i32, %arg1: i32, %arg2: i32, %arg3: memref<16x32xbf16, #tpu.memory_space<vmem>>, %arg4: memref<32x64xbf16, #tpu.memory_space<vmem>>, %arg5: memref<1x64xf32, #tpu.memory_space<vmem>>, %arg6: memref<1x32xf32, #tpu.memory_space<vmem>>, %arg7: memref<1x32xf32, #tpu.memory_space<vmem>>, %arg8: memref<16x64xbf16, #tpu.memory_space<vmem>>, %arg9: memref<16x32xbf16, #tpu.memory_space<vmem>>) attributes {dimension_semantics = [#tpu.dimension_semantics<parallel>, #tpu.dimension_semantics<arbitrary>, #tpu.dimension_semantics<arbitrary>], iteration_bounds = array<i64: 1, 1, 1>, scalar_prefetch = 0 : i64, scratch_operands = 1 : i64, tpu.core_type = #tpu.core_type<tc>, window_params = [{transform_indices = @transform_0, window_bounds = array<i64: 16, 32>}, {transform_indices = @transform_1, window_bounds = array<i64: 32, 64>}, {transform_indices = @transform_2, window_bounds = array<i64: 1, 64>}, {transform_indices = @transform_3, window_bounds = array<i64: 1, 32>}, {transform_indices = @transform_4, window_bounds = array<i64: 1, 32>}, {transform_indices = @transform_5, window_bounds = array<i64: 16, 64>}]} {
    %c0_i32 = arith.constant 0 : i32
    %0 = arith.cmpi eq, %arg1, %c0_i32 : i32
    %1 = arith.extui %0 : i1 to i32
    %c0_i32_0 = arith.constant 0 : i32
    %2 = arith.cmpi ne, %1, %c0_i32_0 : i32
    scf.if %2 {
      %c0_9 = arith.constant 0 : index
      %c0_10 = arith.constant 0 : index
      %16 = vector.load %arg3[%c0_9, %c0_10] : memref<16x32xbf16, #tpu.memory_space<vmem>>, vector<16x32xbf16>
      %17 = arith.extf %16 : vector<16x32xbf16> to vector<16x32xf32>
      %cst_11 = arith.constant dense<0.000000e+00> : vector<16xf32>
      %18 = vector.multi_reduction <add>, %17, %cst_11 [1] : vector<16x32xf32> to vector<16xf32>
      %19 = vector.shape_cast %18 : vector<16xf32> to vector<16x1xf32>
      %cst_12 = arith.constant 3.200000e+01 : f32
      %20 = vector.broadcast %cst_12 : f32 to vector<16x1xf32>
      %21 = arith.divf %19, %20 : vector<16x1xf32>
      %22 = vector.broadcast %21 : vector<16x1xf32> to vector<16x32xf32>
      %23 = arith.subf %17, %22 : vector<16x32xf32>
      %24 = arith.mulf %23, %23 : vector<16x32xf32>
      %cst_13 = arith.constant dense<0.000000e+00> : vector<16xf32>
      %25 = vector.multi_reduction <add>, %24, %cst_13 [1] : vector<16x32xf32> to vector<16xf32>
      %26 = vector.shape_cast %25 : vector<16xf32> to vector<16x1xf32>
      %cst_14 = arith.constant 3.200000e+01 : f32
      %27 = vector.broadcast %cst_14 : f32 to vector<16x1xf32>
      %28 = arith.divf %26, %27 : vector<16x1xf32>
      %cst_15 = arith.constant 9.99999974E-6 : f32
      %29 = vector.broadcast %cst_15 : f32 to vector<16x1xf32>
      %30 = arith.addf %28, %29 : vector<16x1xf32>
      %31 = math.rsqrt %30 : vector<16x1xf32>
      %32 = vector.broadcast %31 : vector<16x1xf32> to vector<16x32xf32>
      %33 = arith.mulf %23, %32 : vector<16x32xf32>
      %c0_16 = arith.constant 0 : index
      %c0_17 = arith.constant 0 : index
      %34 = vector.load %arg6[%c0_16, %c0_17] : memref<1x32xf32, #tpu.memory_space<vmem>>, vector<1x32xf32>
      %35 = vector.broadcast %34 : vector<1x32xf32> to vector<16x32xf32>
      %36 = arith.mulf %33, %35 : vector<16x32xf32>
      %c0_18 = arith.constant 0 : index
      %c0_19 = arith.constant 0 : index
      %37 = vector.load %arg7[%c0_18, %c0_19] : memref<1x32xf32, #tpu.memory_space<vmem>>, vector<1x32xf32>
      %38 = vector.broadcast %37 : vector<1x32xf32> to vector<16x32xf32>
      %39 = arith.addf %36, %38 : vector<16x32xf32>
      %40 = arith.truncf %39 : vector<16x32xf32> to vector<16x32xbf16>
      %c0_20 = arith.constant 0 : index
      %c0_21 = arith.constant 0 : index
      %41 = vector.load %arg9[%c0_20, %c0_21] : memref<16x32xbf16, #tpu.memory_space<vmem>>, vector<16x32xbf16>
      tpu.vector_store %arg9[%c0_20, %c0_21], %40 {strides = array<i32>} : memref<16x32xbf16, #tpu.memory_space<vmem>>, vector<16x32xbf16>,
    } else {
    }
    %c0 = arith.constant 0 : index
    %c0_1 = arith.constant 0 : index
    %3 = vector.load %arg9[%c0, %c0_1] : memref<16x32xbf16, #tpu.memory_space<vmem>>, vector<16x32xbf16>
    %c0_2 = arith.constant 0 : index
    %c0_3 = arith.constant 0 : index
    %4 = vector.load %arg4[%c0_2, %c0_3] : memref<32x64xbf16, #tpu.memory_space<vmem>>, vector<32x64xbf16>
    %cst = arith.constant dense<0.000000e+00> : vector<16x64xf32>
    %5 = tpu.matmul %3, %4, %cst {dimension_numbers = #tpu.dot_dimension_numbers<[1], [0], [0], [1], [0, 0, 1, 1], [], []>} : vector<16x32xbf16>, vector<32x64xbf16>, vector<16x64xf32> -> vector<16x64xf32>
    %c0_4 = arith.constant 0 : index
    %c0_5 = arith.constant 0 : index
    %6 = vector.load %arg5[%c0_4, %c0_5] : memref<1x64xf32, #tpu.memory_space<vmem>>, vector<1x64xf32>
    %7 = vector.broadcast %6 : vector<1x64xf32> to vector<16x64xf32>
    %8 = arith.addf %5, %7 : vector<16x64xf32>
    %9 = arith.negf %8 : vector<16x64xf32>
    %10 = math.exp %9 : vector<16x64xf32>
    %cst_6 = arith.constant 1.000000e+00 : f32
    %11 = vector.broadcast %cst_6 : f32 to vector<16x64xf32>
    %12 = arith.addf %11, %10 : vector<16x64xf32>
    %13 = arith.divf %11, %12 : vector<16x64xf32>
    %14 = arith.truncf %13 : vector<16x64xf32> to vector<16x64xbf16>
    %c0_7 = arith.constant 0 : index
    %c0_8 = arith.constant 0 : index
    %15 = vector.load %arg8[%c0_7, %c0_8] : memref<16x64xbf16, #tpu.memory_space<vmem>>, vector<16x64xbf16>
    tpu.vector_store %arg8[%c0_7, %c0_8], %14 {strides = array<i32>} : memref<16x64xbf16, #tpu.memory_space<vmem>>, vector<16x64xbf16>,
    return
  }
  func.func @transform_0(%arg0: i32, %arg1: i32, %arg2: i32) -> (i32, i32) {
    %c0_i32 = arith.constant 0 : i32
    return %arg0, %arg2 : i32, i32
  }
  func.func @transform_1(%arg0: i32, %arg1: i32, %arg2: i32) -> (i32, i32) {
    %c0_i32 = arith.constant 0 : i32
    return %arg2, %arg1 : i32, i32
  }
  func.func @transform_2(%arg0: i32, %arg1: i32, %arg2: i32) -> (i32, i32) {
    %c0_i32 = arith.constant 0 : i32
    %c0_i32_0 = arith.constant 0 : i32
    return %c0_i32, %arg1 : i32, i32
  }
  func.func @transform_3(%arg0: i32, %arg1: i32, %arg2: i32) -> (i32, i32) {
    %c0_i32 = arith.constant 0 : i32
    %c0_i32_0 = arith.constant 0 : i32
    return %c0_i32, %arg2 : i32, i32
  }
  func.func @transform_4(%arg0: i32, %arg1: i32, %arg2: i32) -> (i32, i32) {
    %c0_i32 = arith.constant 0 : i32
    %c0_i32_0 = arith.constant 0 : i32
    return %c0_i32, %arg2 : i32, i32
  }
  func.func @transform_5(%arg0: i32, %arg1: i32, %arg2: i32) -> (i32, i32) {
    %c0_i32 = arith.constant 0 : i32
    return %arg0, %arg1 : i32, i32
  }
}

</mosaic_0001>

<llo_original>
// kernel: gpt_forward.15
$region0: #{gpt_forward.15}
  #allocation0 [shape = 'u32[]', space=smem, size = 0x4, offset = 0x4, fixed_abs, tag = 'smem constant byte address 0x4 - core index']
  #allocation1 [shape = 'u32[144,128]{1,0:T(1,128)}', space=vmem, size = 0x12000, scoped, tag = 'internal scratch']
  %s0 = inlined_call_operand.vmem [shape: bf16[16,32], index: 0, kind: input, shape index: {}]
  %s1 = inlined_call_operand.vmem [shape: bf16[32,32], index: 1, kind: input, shape index: {}]
  %s2 = inlined_call_operand.vmem [shape: f32[1,32], index: 2, kind: input, shape index: {}]
  %s3 = inlined_call_operand.vmem [shape: bf16[16,32], index: 3, kind: input, shape index: {}]
  %s4 = inlined_call_operand.vmem [shape: bf16[16,32], index: 4, kind: output, shape index: {}]
  %s5 = sld [smem:[#allocation0]]
  $region26: #{gpt_forward.15} parent=0
    _
  %s7 = ssub.s32 1, %s5
  %s8 = scalar_select 0, %s7, %s5
  // Predicated region
  $region2: #{gpt_forward.15} parent=0 // pred_check
    _
  $region3: #{gpt_forward.15} parent=0 // pred_check_branch
    %10 = sbr.rel (0) target = $region5
  $region4: #{gpt_forward.15} parent=0 // pred_region
    _
  $region5: #{gpt_forward.15} parent=0 // pred_fallthru
    _
  // Predicated region
  $region6: #{gpt_forward.15} parent=0 // pred_check
    _
  $region7: #{gpt_forward.15} parent=0 // pred_check_branch
    %12 = sbr.rel (0) target = $region9
  $region8: #{gpt_forward.15} parent=0 // pred_region
    _
  $region9: #{gpt_forward.15} parent=0 // pred_fallthru
    _
  // Predicated region
  $region10: #{gpt_forward.15} parent=0 // pred_check
    _
  $region11: #{gpt_forward.15} parent=0 // pred_check_branch
    %14 = sbr.rel (0) target = $region13
  $region12: #{gpt_forward.15} parent=0 // pred_region
    _
  $region13: #{gpt_forward.15} parent=0 // pred_fallthru
    _
  // Predicated region
  $region14: #{gpt_forward.15} parent=0 // pred_check
    _
  $region15: #{gpt_forward.15} parent=0 // pred_check_branch
    %16 = sbr.rel (0) target = $region17
  $region16: #{gpt_forward.15} parent=0 // pred_region
    _
  $region17: #{gpt_forward.15} parent=0 // pred_fallthru
    _
  %v18 = vld [vmem:[%s0] sm:$0xf]
  %v19 = vld [vmem:[%s0 + $0x4] sm:$0xf]
  %v20 = vld [vmem:[%s1] sm:$0xf]
  %v21 = vld [vmem:[%s1 + $0x4] sm:$0xf]
  %v22 = vld [vmem:[%s1 + $0x8] sm:$0xf]
  %v23 = vld [vmem:[%s1 + $0xc] sm:$0xf]
  %v24 = vld [vmem:[%s2] sm:$0x1]
  %v26 = vlaneseq
  %v27 = vshrl.u32 %v26, 7
  %v28 = vsub.s32 0, %v27
  %v29 = vrot.slane %v24, %v28
  %v33 = vunpack.c.l.b16 %v18
  %v34 = vunpack.c.l.b16 %v19
  %v35 = vpack.c.b16 %v34, %v33
  %v40 = vunpack.c.l.b16 %v20
  %v41 = vunpack.c.l.b16 %v21
  %v42 = vunpack.c.l.b16 %v22
  %v43 = vunpack.c.l.b16 %v23
  %v44 = vpack.c.b16 %v41, %v40
  %v45 = vpack.c.b16 %v43, %v42
  %vm48 = vcmask 261120
  %v50 = vsel %vm48, %v35, 0
  %52 = vmatprep.subr.bf16.mxu0 0
  %53 = vmatpush1.bf16.msra.mxu0 %v44
  %54 = vmatprep.subr.bf16.mxu0 0
  %55 = vmatpush1.bf16.msra.mxu0 %v45
  %56 = vmatprep.subr.bf16.mxu0 0
  %57 = vmatpush1.bf16.msra.mxu0 0
  %58 = vmatprep.subr.bf16.mxu0 0
  %59 = vmatpush1.bf16.msra.mxu0 0
  %60 = vmatprep.subr.bf16.mxu0 0
  %61 = vmatpush1.bf16.msra.mxu0 0
  %62 = vmatprep.subr.bf16.mxu0 0
  %63 = vmatpush1.bf16.msra.mxu0 0
  %64 = vmatprep.subr.bf16.mxu0 0
  %65 = vmatpush1.bf16.msra.mxu0 0
  %66 = vmatprep.subr.bf16.mxu0 0
  %67 = vmatpush1.bf16.msra.mxu0 0
  %68 = vmatprep.subr.bf16.mxu0 0
  %69 = vmatpush1.bf16.msra.mxu0 0
  %70 = vmatprep.subr.bf16.mxu0 0
  %71 = vmatpush1.bf16.msra.mxu0 0
  %72 = vmatprep.subr.bf16.mxu0 0
  %73 = vmatpush1.bf16.msra.mxu0 0
  %74 = vmatprep.subr.bf16.mxu0 0
  %75 = vmatpush1.bf16.msra.mxu0 0
  %76 = vmatprep.subr.bf16.mxu0 0
  %77 = vmatpush1.bf16.msra.mxu0 0
  %78 = vmatprep.subr.bf16.mxu0 0
  %79 = vmatpush1.bf16.msra.mxu0 0
  %80 = vmatprep.subr.bf16.mxu0 0
  %81 = vmatpush1.bf16.msra.mxu0 0
  %82 = vmatprep.subr.bf16.mxu0 0
  %83 = vmatpush1.bf16.msra.mxu0 0
  %84 = vmatprep.mubr.bf16.mxu0 0
  %85 = vmatmul.mubr.bf16.gmra.mrb[0].mxu0 %v50
  %v86 = vpop.f32.mrb[0].mxu0
  %v87 = vadd.f32 %v29, %v86
  %v88 = vpop.f32.mrb[0].mxu0
  %v89 = vpop.f32.mrb[0].mxu0
  %v90 = vadd.f32 %v29, %v89
  %v91 = vpop.f32.mrb[0].mxu0
  %92 = vdwg.mxu0
  %v93 = vld [vmem:[%s3] sm:$0xf]
  %v94 = vld [vmem:[%s3 + $0x4] sm:$0xf]
  %v95 = vunpack.c.l.bf16 %v93
  %v96 = vunpack.c.l.bf16 %v94
  %v97 = vadd.f32 %v87, %v95
  %v98 = vadd.f32 %v90, %v96
  %v99 = vpack.c.bf16 %v98, %v97
  %v101 = vunpack.c.l.b16 %v99
  %v102 = vunpack.c.h.b16 %v99
  %v103 = vpack.c.b16 %v101, %v101
  %v104 = vpack.c.b16 %v102, %v102
  %vm107 = vcmask 257024
  %108 = vst.msk [vmem:[%s4] sm:$0xf] %vm107, %v103
  %109 = vst.msk [vmem:[%s4 + $0x4] sm:$0xf] %vm107, %v104
  // Predicated region
  $region18: #{gpt_forward.15} parent=0 // pred_check
    _
  $region19: #{gpt_forward.15} parent=0 // pred_check_branch
    %111 = sbr.rel (0) target = $region21
  $region20: #{gpt_forward.15} parent=0 // pred_region
    _
  $region21: #{gpt_forward.15} parent=0 // pred_fallthru
    _
  // Predicated region
  $region22: #{gpt_forward.15} parent=0 // pred_check
    _
  $region23: #{gpt_forward.15} parent=0 // pred_check_branch
    %113 = sbr.rel (0) target = $region25
  $region24: #{gpt_forward.15} parent=0 // pred_region
    _
  $region25: #{gpt_forward.15} parent=0 // pred_fallthru
    _

// kernel: gpt_forward.12
$region0: #{gpt_forward.12}
  #allocation0 [shape = 'u32[]', space=smem, size = 0x4, offset = 0x4, fixed_abs, tag = 'smem constant byte address 0x4 - core index']
  #allocation1 [shape = 'u32[144,128]{1,0:T(1,128)}', space=vmem, size = 0x12000, scoped, tag = 'internal scratch']
  %s0 = inlined_call_operand.vmem [shape: bf16[16,64], index: 0, kind: input, shape index: {}]
  %s1 = inlined_call_operand.vmem [shape: bf16[64,32], index: 1, kind: input, shape index: {}]
  %s2 = inlined_call_operand.vmem [shape: f32[1,32], index: 2, kind: input, shape index: {}]
  %s3 = inlined_call_operand.vmem [shape: bf16[8,32], index: 3, kind: input, shape index: {}]
  %s4 = inlined_call_operand.vmem [shape: bf16[16,32], index: 4, kind: output, shape index: {}]
  %s5 = sld [smem:[#allocation0]]
  $region49: #{gpt_forward.12} parent=0
    _
  %s7 = ssub.s32 1, %s5
  %s8 = scalar_select 0, %s7, %s5
  loop: start=0, step=1, limit=4
  $region2: #{gpt_forward.12} parent=0 // loop_pre_header
    _
  $region3: #{gpt_forward.12} parent=0 // loop_header
    %s10 = sphi 0, %s14
    %p11 = scmp.ge.s32.totalorder %s10, 4
    %s17 = sphi 0, %s36
    %s18 = sphi 0, %s32
    %s19 = sphi 0, %s28
    %s20 = sphi 0, %s17
    %s21 = sphi 0, %s18
    %s22 = sphi 0, %s19
    %s23 = sphi 0, %s20
    %s24 = sphi 0, %s21
    %s25 = sphi 0, %s22
    %s41 = sphi 0, %s43
    %s44 = sphi 0, %s41
    %s45 = sphi 0, %s44
    %s61 = sphi 0, %s45
    %s69 = sphi 0, %s71
    %s72 = sphi 0, %s69
    %s73 = sphi 0, %s72
    %s89 = sphi 0, %s73
    %s95 = sphi 0, %s97
    %s98 = sphi 0, %s95
    %s99 = sphi 0, %s98
    %s115 = sphi 0, %s99
    %s121 = sphi 0, %s123
    %s124 = sphi 0, %s121
    %s125 = sphi 0, %s124
    %s141 = sphi 0, %s125
    %s149 = sphi 0, %s151
    %s152 = sphi 0, %s149
    %s153 = sphi 0, %s152
    %s169 = sphi 0, %s153
  $region4: #{gpt_forward.12} parent=0 // loop_header_branch
    %13 = sbr.rel (%p11) target = $region8
  $region5: #{gpt_forward.12} parent=0 // loop_body
    %s15 = ssub.s32 %s10, 1
    %s16 = ssub.s32 %s10, 2
    %s26 = sadd.s32 1, %s19
    %p27 = scmp.ge.s32.totalorder %s26, 1
    %s28 = scalar_select %p27, 0, %s26
    %s29 = sadd.s32 1, %s18
    %s30 = scalar_select %p27, %s29, %s18
    %p31 = scmp.ge.s32.totalorder %s30, 1
    %s32 = scalar_select %p31, 0, %s30
    %s33 = sadd.s32 1, %s17
    %s34 = scalar_select %p31, %s33, %s17
    %p35 = scmp.ge.s32.totalorder %s34, 2
    %s36 = scalar_select %p35, 0, %s34
    %s37 = ssub.s32 %s17, %s36
    %s38 = ssub.s32 %s19, %s28
    %s39 = sor.u32 %s37, %s38
    %p40 = scmp.eq.s32.totalorder %s39, 0
    %s42 = sadd.s32 %s41, 1
    %s43 = scalar_select %p40, %s41, %s42
    %p46 = pneg %p40
    %p47 = scmp.eq.s32.totalorder %s10, 1
    %p48 = por %p46, %p47
    %p49 = scmp.ne.s32.totalorder %s41, %s44
    %p50 = scmp.eq.s32.totalorder %s10, 0
    %p51 = por %p49, %p50
    %p52 = scmp.ne.s32.totalorder %s41, %s44
    %p53 = scmp.eq.s32.totalorder %s15, 1
    %p54 = por %p52, %p53
    %p55 = scmp.ne.s32.totalorder %s44, %s45
    %p56 = scmp.eq.s32.totalorder %s15, 0
    %p57 = por %p55, %p56
    %p58 = scmp.ne.s32.totalorder %s44, %s45
    %p59 = scmp.eq.s32.totalorder %s16, 1
    %p60 = por %p58, %p59
    %p62 = scmp.ne.s32.totalorder %s45, %s61
    %p63 = scmp.eq.s32.totalorder %s16, 0
    %p64 = por %p62, %p63
    %s65 = ssub.s32 %s19, %s28
    %s66 = ssub.s32 %s18, %s32
    %s67 = sor.u32 %s65, %s66
    %p68 = scmp.eq.s32.totalorder %s67, 0
    %s70 = sadd.s32 %s69, 1
    %s71 = scalar_select %p68, %s69, %s70
    %p74 = pneg %p68
    %p75 = scmp.eq.s32.totalorder %s10, 1
    %p76 = por %p74, %p75
    %p77 = scmp.ne.s32.totalorder %s69, %s72
    %p78 = scmp.eq.s32.totalorder %s10, 0
    %p79 = por %p77, %p78
    %p80 = scmp.ne.s32.totalorder %s69, %s72
    %p81 = scmp.eq.s32.totalorder %s15, 1
    %p82 = por %p80, %p81
    %p83 = scmp.ne.s32.totalorder %s72, %s73
    %p84 = scmp.eq.s32.totalorder %s15, 0
    %p85 = por %p83, %p84
    %p86 = scmp.ne.s32.totalorder %s72, %s73
    %p87 = scmp.eq.s32.totalorder %s16, 1
    %p88 = por %p86, %p87
    %p90 = scmp.ne.s32.totalorder %s73, %s89
    %p91 = scmp.eq.s32.totalorder %s16, 0
    %p92 = por %p90, %p91
    %s93 = ssub.s32 %s18, %s32
    %p94 = scmp.eq.s32.totalorder %s93, 0
    %s96 = sadd.s32 %s95, 1
    %s97 = scalar_select %p94, %s95, %s96
    %p100 = pneg %p94
    %p101 = scmp.eq.s32.totalorder %s10, 1
    %p102 = por %p100, %p101
    %p103 = scmp.ne.s32.totalorder %s95, %s98
    %p104 = scmp.eq.s32.totalorder %s10, 0
    %p105 = por %p103, %p104
    %p106 = scmp.ne.s32.totalorder %s95, %s98
    %p107 = scmp.eq.s32.totalorder %s15, 1
    %p108 = por %p106, %p107
    %p109 = scmp.ne.s32.totalorder %s98, %s99
    %p110 = scmp.eq.s32.totalorder %s15, 0
    %p111 = por %p109, %p110
    %p112 = scmp.ne.s32.totalorder %s98, %s99
    %p113 = scmp.eq.s32.totalorder %s16, 1
    %p114 = por %p112, %p113
    %p116 = scmp.ne.s32.totalorder %s99, %s115
    %p117 = scmp.eq.s32.totalorder %s16, 0
    %p118 = por %p116, %p117
    %s119 = ssub.s32 %s18, %s32
    %p120 = scmp.eq.s32.totalorder %s119, 0
    %s122 = sadd.s32 %s121, 1
    %s123 = scalar_select %p120, %s121, %s122
    %p126 = pneg %p120
    %p127 = scmp.eq.s32.totalorder %s10, 1
    %p128 = por %p126, %p127
    %p129 = scmp.ne.s32.totalorder %s121, %s124
    %p130 = scmp.eq.s32.totalorder %s10, 0
    %p131 = por %p129, %p130
    %p132 = scmp.ne.s32.totalorder %s121, %s124
    %p133 = scmp.eq.s32.totalorder %s15, 1
    %p134 = por %p132, %p133
    %p135 = scmp.ne.s32.totalorder %s124, %s125
    %p136 = scmp.eq.s32.totalorder %s15, 0
    %p137 = por %p135, %p136
    %p138 = scmp.ne.s32.totalorder %s124, %s125
    %p139 = scmp.eq.s32.totalorder %s16, 1
    %p140 = por %p138, %p139
    %p142 = scmp.ne.s32.totalorder %s125, %s141
    %p143 = scmp.eq.s32.totalorder %s16, 0
    %p144 = por %p142, %p143
    %s145 = ssub.s32 %s17, %s36
    %s146 = ssub.s32 %s18, %s32
    %s147 = sor.u32 %s145, %s146
    %p148 = scmp.eq.s32.totalorder %s147, 0
    %s150 = sadd.s32 %s149, 1
    %s151 = scalar_select %p148, %s149, %s150
    %p154 = pneg %p148
    %p155 = scmp.eq.s32.totalorder %s10, 1
    %p156 = por %p154, %p155
    %p157 = scmp.ne.s32.totalorder %s149, %s152
    %p158 = scmp.eq.s32.totalorder %s10, 0
    %p159 = por %p157, %p158
    %p160 = scmp.ne.s32.totalorder %s149, %s152
    %p161 = scmp.eq.s32.totalorder %s15, 1
    %p162 = por %p160, %p161
    %p163 = scmp.ne.s32.totalorder %s152, %s153
    %p164 = scmp.eq.s32.totalorder %s15, 0
    %p165 = por %p163, %p164
    %p166 = scmp.ne.s32.totalorder %s152, %s153
    %p167 = scmp.eq.s32.totalorder %s16, 1
    %p168 = por %p166, %p167
    %p170 = scmp.ne.s32.totalorder %s153, %s169
    %p171 = scmp.eq.s32.totalorder %s16, 0
    %p172 = por %p170, %p171
    %p173 = scmp.le.s32.totalorder 1, %s10
    %p174 = scmp.lt.s32.totalorder %s10, 3
    %p175 = pnand %p173, %p174
    %p176 = pneg %p175
    // Predicated region
    $region9: #{gpt_forward.12} parent=5 // pred_check
      _
    $region10: #{gpt_forward.12} parent=5 // pred_check_branch
      %178 = sbr.rel (%p175) target = $region12
    $region11: #{gpt_forward.12} parent=5 // pred_region
      %s179 = ssub.s32 %s10, 1
      // Predicated region
      $region13: #{gpt_forward.12} parent=11 // pred_check
        %p180 = pneg %p85
      $region14: #{gpt_forward.12} parent=11 // pred_check_branch
        %182 = sbr.rel (%p180) target = $region16
      $region15: #{gpt_forward.12} parent=11 // pred_region
        %s183 = smul.u32 8, %s22
        %p184 = scmp.lt.s32.totalorder %s183, 7
        %s185 = scalar_select %p184, %s183, 7
        %p186 = scmp.lt.s32.totalorder %s21, 0
        %s187 = scalar_select %p186, %s21, 0
        %s188 = sadd.s32 %s187, %s185
        %s189 = smul.addr %s188, 4
        %s190 = scalar_lea.vmem %s1, %s189
        %s191 = smul.u32 8, %s22
      $region16: #{gpt_forward.12} parent=11 // pred_fallthru
        _
      // Predicated region
      $region17: #{gpt_forward.12} parent=11 // pred_check
        %p192 = pneg %p111
      $region18: #{gpt_forward.12} parent=11 // pred_check_branch
        %194 = sbr.rel (%p192) target = $region20
      $region19: #{gpt_forward.12} parent=11 // pred_region
        %p195 = scmp.lt.s32.totalorder %s21, 0
        %s196 = scalar_select %p195, %s21, 0
        %s197 = scalar_lea.vmem %s2, %s196
      $region20: #{gpt_forward.12} parent=11 // pred_fallthru
        _
      // Predicated region
      $region21: #{gpt_forward.12} parent=11 // pred_check
        %p198 = pneg %p137
      $region22: #{gpt_forward.12} parent=11 // pred_check_branch
        %200 = sbr.rel (%p198) target = $region24
      $region23: #{gpt_forward.12} parent=11 // pred_region
        %p201 = scmp.lt.s32.totalorder %s21, 0
        %s202 = scalar_select %p201, %s21, 0
        %s203 = smul.addr %s202, 4
        %s204 = scalar_lea.vmem %s3, %s203
      $region24: #{gpt_forward.12} parent=11 // pred_fallthru
        _
    $region12: #{gpt_forward.12} parent=5 // pred_fallthru
      _
    %p205 = scmp.lt.s32.totalorder %s10, 2
    // Predicated region
    $region25: #{gpt_forward.12} parent=5 // pred_check
      %p206 = pneg %p205
    $region26: #{gpt_forward.12} parent=5 // pred_check_branch
      %208 = sbr.rel (%p206) target = $region28
    $region27: #{gpt_forward.12} parent=5 // pred_region
      // Predicated region
      $region29: #{gpt_forward.12} parent=27 // pred_check
        %p209 = pneg %p51
      $region30: #{gpt_forward.12} parent=27 // pred_check_branch
        %211 = sbr.rel (%p209) target = $region32
      $region31: #{gpt_forward.12} parent=27 // pred_region
        %p212 = scmp.lt.s32.totalorder %s17, 1
        %s213 = scalar_select %p212, %s17, 1
        %p214 = scmp.lt.s32.totalorder %s19, 0
        %s215 = scalar_select %p214, %s19, 0
        %s216 = sadd.s32 %s215, %s213
        %s217 = smul.addr %s216, 4
        %s218 = scalar_lea.vmem %s0, %s217
      $region32: #{gpt_forward.12} parent=27 // pred_fallthru
        _
    $region28: #{gpt_forward.12} parent=5 // pred_fallthru
      _
    %p219 = scmp.le.s32.totalorder 1, %s10
    %p220 = scmp.lt.s32.totalorder %s10, 3
    %p221 = pnand %p219, %p220
    %p222 = pneg %p221
    // Predicated region
    $region33: #{gpt_forward.12} parent=5 // pred_check
      _
    $region34: #{gpt_forward.12} parent=5 // pred_check_branch
      %224 = sbr.rel (%p221) target = $region36
    $region35: #{gpt_forward.12} parent=5 // pred_region
      %s225 = ssub.s32 %s10, 1
      %p226 = scmp.lt.s32.totalorder %s20, 1
      %s227 = scalar_select %p226, %s20, 1
      %p228 = scmp.lt.s32.totalorder %s22, 0
      %s229 = scalar_select %p228, %s22, 0
      %s230 = sadd.s32 %s229, %s227
      %s231 = smul.addr %s230, 4
      %s232 = scalar_lea.vmem %s0, %s231
      %p233 = pneg %p57
      %p234 = pneg %p54
      %s235 = smul.u32 8, %s22
      %p236 = scmp.lt.s32.totalorder %s235, 7
      %s237 = scalar_select %p236, %s235, 7
      %p238 = scmp.lt.s32.totalorder %s21, 0
      %s239 = scalar_select %p238, %s21, 0
      %s240 = sadd.s32 %s239, %s237
      %s241 = smul.addr %s240, 4
      %s242 = scalar_lea.vmem %s1, %s241
      %p243 = pneg %p85
      %p244 = pneg %p82
      %p245 = scmp.lt.s32.totalorder %s21, 0
      %s246 = scalar_select %p245, %s21, 0
      %s247 = scalar_lea.vmem %s2, %s246
      %p248 = pneg %p111
      %p249 = pneg %p108
      %p250 = scmp.lt.s32.totalorder %s21, 0
      %s251 = scalar_select %p250, %s21, 0
      %s252 = smul.addr %s251, 4
      %s253 = scalar_lea.vmem %s3, %s252
      %p254 = pneg %p137
      %p255 = pneg %p134
      %p256 = pneg %p165
      %p257 = pneg %p162
      %p258 = scmp.lt.s32.totalorder %s20, 1
      %s259 = scalar_select %p258, %s20, 1
      %p260 = scmp.lt.s32.totalorder %s21, 0
      %s261 = scalar_select %p260, %s21, 0
      %s262 = sadd.s32 %s261, %s259
      %s263 = smul.addr %s262, 4
      %s264 = scalar_lea.vmem %s4, %s263
      %p265 = scmp.lt.s32.totalorder %s20, 1
      %s266 = scalar_select %p265, %s20, 1
      %p267 = scmp.lt.s32.totalorder %s22, 0
      %s268 = scalar_select %p267, %s22, 0
      %s269 = sadd.s32 %s268, %s266
      %s270 = smul.addr %s269, 4
      %s271 = scalar_lea.vmem %s0, %s270
      %s272 = smul.u32 8, %s22
      %p273 = scmp.lt.s32.totalorder %s272, 7
      %s274 = scalar_select %p273, %s272, 7
      %p275 = scmp.lt.s32.totalorder %s21, 0
      %s276 = scalar_select %p275, %s21, 0
      %s277 = sadd.s32 %s276, %s274
      %s278 = smul.addr %s277, 4
      %s279 = scalar_lea.vmem %s1, %s278
      %s280 = smul.u32 8, %s22
      %p281 = scmp.lt.s32.totalorder %s21, 0
      %s282 = scalar_select %p281, %s21, 0
      %s283 = scalar_lea.vmem %s2, %s282
      %p284 = scmp.lt.s32.totalorder %s21, 0
      %s285 = scalar_select %p284, %s21, 0
      %s286 = smul.addr %s285, 4
      %s287 = scalar_lea.vmem %s3, %s286
      %p288 = scmp.lt.s32.totalorder %s20, 1
      %s289 = scalar_select %p288, %s20, 1
      %p290 = scmp.lt.s32.totalorder %s21, 0
      %s291 = scalar_select %p290, %s21, 0
      %s292 = sadd.s32 %s291, %s289
      %s293 = smul.addr %s292, 4
      %s294 = scalar_lea.vmem %s4, %s293
      %v296 = vld [vmem:[%s271] sm:$0xf]
      %v297 = vld [vmem:[%s279] sm:$0xf]
      %v298 = vld [vmem:[%s279 + $0x4] sm:$0xf]
      %v299 = vld [vmem:[%s279 + $0x8] sm:$0xf]
      %v300 = vld [vmem:[%s279 + $0xc] sm:$0xf]
      %v301 = vld [vmem:[%s279 + $0x10] sm:$0xf]
      %v302 = vld [vmem:[%s279 + $0x14] sm:$0xf]
      %v303 = vld [vmem:[%s279 + $0x18] sm:$0xf]
      %v304 = vld [vmem:[%s279 + $0x1c] sm:$0xf]
      %v305 = vld [vmem:[%s283] sm:$0x1]
      %v307 = vlaneseq
      %v308 = vshrl.u32 %v307, 7
      %v309 = vsub.s32 0, %v308
      %v310 = vrot.slane %v305, %v309
      %v320 = vunpack.c.l.b16 %v297
      %v321 = vunpack.c.l.b16 %v298
      %v322 = vunpack.c.l.b16 %v299
      %v323 = vunpack.c.l.b16 %v300
      %v324 = vunpack.c.l.b16 %v301
      %v325 = vunpack.c.l.b16 %v302
      %v326 = vunpack.c.l.b16 %v303
      %v327 = vunpack.c.l.b16 %v304
      %v328 = vpack.c.b16 %v321, %v320
      %v329 = vpack.c.b16 %v323, %v322
      %v330 = vpack.c.b16 %v325, %v324
      %v331 = vpack.c.b16 %v327, %v326
      %vm336 = vcmask 523264
      %v338 = vsel %vm336, %v296, 0
      %340 = vmatprep.subr.bf16.mxu0 0
      %341 = vmatpush1.bf16.msra.mxu0 %v328
      %342 = vmatprep.subr.bf16.mxu0 0
      %343 = vmatpush1.bf16.msra.mxu0 %v329
      %344 = vmatprep.subr.bf16.mxu0 0
      %345 = vmatpush1.bf16.msra.mxu0 %v330
      %346 = vmatprep.subr.bf16.mxu0 0
      %347 = vmatpush1.bf16.msra.mxu0 %v331
      %348 = vmatprep.subr.bf16.mxu0 0
      %349 = vmatpush1.bf16.msra.mxu0 0
      %350 = vmatprep.subr.bf16.mxu0 0
      %351 = vmatpush1.bf16.msra.mxu0 0
      %352 = vmatprep.subr.bf16.mxu0 0
      %353 = vmatpush1.bf16.msra.mxu0 0
      %354 = vmatprep.subr.bf16.mxu0 0
      %355 = vmatpush1.bf16.msra.mxu0 0
      %356 = vmatprep.subr.bf16.mxu0 0
      %357 = vmatpush1.bf16.msra.mxu0 0
      %358 = vmatprep.subr.bf16.mxu0 0
      %359 = vmatpush1.bf16.msra.mxu0 0
      %360 = vmatprep.subr.bf16.mxu0 0
      %361 = vmatpush1.bf16.msra.mxu0 0
      %362 = vmatprep.subr.bf16.mxu0 0
      %363 = vmatpush1.bf16.msra.mxu0 0
      %364 = vmatprep.subr.bf16.mxu0 0
      %365 = vmatpush1.bf16.msra.mxu0 0
      %366 = vmatprep.subr.bf16.mxu0 0
      %367 = vmatpush1.bf16.msra.mxu0 0
      %368 = vmatprep.subr.bf16.mxu0 0
      %369 = vmatpush1.bf16.msra.mxu0 0
      %370 = vmatprep.subr.bf16.mxu0 0
      %371 = vmatpush1.bf16.msra.mxu0 0
      %372 = vmatprep.mubr.bf16.mxu0 0
      %373 = vmatmul.mubr.bf16.gmra.mrb[0].mxu0 %v338
      %v374 = vpop.f32.mrb[0].mxu0
      %v375 = vadd.f32 %v310, %v374
      %v376 = vpop.f32.mrb[0].mxu0
      %v377 = vpop.f32.mrb[0].mxu0
      %v378 = vpop.f32.mrb[0].mxu0
      %379 = vdwg.mxu0
      %v380 = vld [vmem:[%s287] sm:$0xf]
      %v381 = vunpack.c.l.bf16 %v380
      %v382 = vadd.f32 %v375, %v381
      %v383 = vpack.c.bf16 %v382, %v382
      %vm384 = vcmask 257024
      %385 = vst.msk [vmem:[%s294] sm:$0xf] %vm384, %v383
      %p386 = scmp.lt.s32.totalorder %s20, 1
      %s387 = scalar_select %p386, %s20, 1
      %p388 = scmp.lt.s32.totalorder %s21, 0
      %s389 = scalar_select %p388, %s21, 0
      %s390 = sadd.s32 %s389, %s387
      %s391 = smul.addr %s390, 4
      %s392 = scalar_lea.vmem %s4, %s391
      // Predicated region
      $region37: #{gpt_forward.12} parent=35 // pred_check
        %p393 = pneg %p162
      $region38: #{gpt_forward.12} parent=35 // pred_check_branch
        %395 = sbr.rel (%p393) target = $region40
      $region39: #{gpt_forward.12} parent=35 // pred_region
        _
      $region40: #{gpt_forward.12} parent=35 // pred_fallthru
        _
    $region36: #{gpt_forward.12} parent=5 // pred_fallthru
      _
    %p396 = scmp.le.s32.totalorder 2, %s10
    // Predicated region
    $region41: #{gpt_forward.12} parent=5 // pred_check
      %p397 = pneg %p396
    $region42: #{gpt_forward.12} parent=5 // pred_check_branch
      %399 = sbr.rel (%p397) target = $region44
    $region43: #{gpt_forward.12} parent=5 // pred_region
      %s400 = ssub.s32 %s10, 2
      // Predicated region
      $region45: #{gpt_forward.12} parent=43 // pred_check
        %p401 = pneg %p168
      $region46: #{gpt_forward.12} parent=43 // pred_check_branch
        %403 = sbr.rel (%p401) target = $region48
      $region47: #{gpt_forward.12} parent=43 // pred_region
        %p404 = scmp.lt.s32.totalorder %s23, 1
        %s405 = scalar_select %p404, %s23, 1
        %p406 = scmp.lt.s32.totalorder %s24, 0
        %s407 = scalar_select %p406, %s24, 0
        %s408 = sadd.s32 %s407, %s405
        %s409 = smul.addr %s408, 4
        %s410 = scalar_lea.vmem %s4, %s409
      $region48: #{gpt_forward.12} parent=43 // pred_fallthru
        _
    $region44: #{gpt_forward.12} parent=5 // pred_fallthru
      _
  $region6: #{gpt_forward.12} parent=0 // loop_footer
    %s14 = sadd.s32 1, %s10
  $region7: #{gpt_forward.12} parent=0 // loop_footer_branch
    %9 = sbr.rel target = $region3
  $region8: #{gpt_forward.12} parent=0 // loop_exit
    _

// kernel: gpt_forward.13
$region0: #{gpt_forward.13}
  #allocation0 [shape = 'u32[]', space=smem, size = 0x4, offset = 0x4, fixed_abs, tag = 'smem constant byte address 0x4 - core index']
  #allocation1 [shape = 'u32[144,128]{1,0:T(1,128)}', space=vmem, size = 0x12000, scoped, tag = 'internal scratch']
  #allocation2 [shape = 'bf16[16,32]{1,0:T(16,128)(2,1)}', space=vmem, size = 0x1000, scoped, tag = 'scratch operand']
  %s0 = inlined_call_operand.vmem [shape: bf16[16,32], index: 0, kind: input, shape index: {}]
  %s1 = inlined_call_operand.vmem [shape: bf16[32,96], index: 1, kind: input, shape index: {}]
  %s2 = inlined_call_operand.vmem [shape: f32[1,96], index: 2, kind: input, shape index: {}]
  %s3 = inlined_call_operand.vmem [shape: f32[1,32], index: 3, kind: input, shape index: {}]
  %s4 = inlined_call_operand.vmem [shape: f32[1,32], index: 4, kind: input, shape index: {}]
  %s5 = inlined_call_operand.vmem [shape: bf16[16,96], index: 5, kind: output, shape index: {}]
  %s6 = sld [smem:[#allocation0]]
  $region34: #{gpt_forward.13} parent=0
    _
  %s8 = ssub.s32 1, %s6
  %s9 = scalar_select 0, %s8, %s6
  // Predicated region
  $region2: #{gpt_forward.13} parent=0 // pred_check
    _
  $region3: #{gpt_forward.13} parent=0 // pred_check_branch
    %11 = sbr.rel (0) target = $region5
  $region4: #{gpt_forward.13} parent=0 // pred_region
    _
  $region5: #{gpt_forward.13} parent=0 // pred_fallthru
    _
  // Predicated region
  $region6: #{gpt_forward.13} parent=0 // pred_check
    _
  $region7: #{gpt_forward.13} parent=0 // pred_check_branch
    %13 = sbr.rel (0) target = $region9
  $region8: #{gpt_forward.13} parent=0 // pred_region
    _
  $region9: #{gpt_forward.13} parent=0 // pred_fallthru
    _
  // Predicated region
  $region10: #{gpt_forward.13} parent=0 // pred_check
    _
  $region11: #{gpt_forward.13} parent=0 // pred_check_branch
    %15 = sbr.rel (0) target = $region13
  $region12: #{gpt_forward.13} parent=0 // pred_region
    _
  $region13: #{gpt_forward.13} parent=0 // pred_fallthru
    _
  // Predicated region
  $region14: #{gpt_forward.13} parent=0 // pred_check
    _
  $region15: #{gpt_forward.13} parent=0 // pred_check_branch
    %17 = sbr.rel (0) target = $region17
  $region16: #{gpt_forward.13} parent=0 // pred_region
    _
  $region17: #{gpt_forward.13} parent=0 // pred_fallthru
    _
  // Predicated region
  $region18: #{gpt_forward.13} parent=0 // pred_check
    _
  $region19: #{gpt_forward.13} parent=0 // pred_check_branch
    %19 = sbr.rel (0) target = $region21
  $region20: #{gpt_forward.13} parent=0 // pred_region
    _
  $region21: #{gpt_forward.13} parent=0 // pred_fallthru
    _
  %p21 = scmp.eq.s32.totalorder 0, 0
  // Predicated region
  $region22: #{gpt_forward.13} parent=0 // pred_check
    %p22 = pneg %p21
  $region23: #{gpt_forward.13} parent=0 // pred_check_branch
    %24 = sbr.rel (%p22) target = $region25
  $region24: #{gpt_forward.13} parent=0 // pred_region
    %v25 = vld [vmem:[%s0] sm:$0xf]
    %v26 = vld [vmem:[%s0 + $0x4] sm:$0xf]
    %v27 = vunpack.c.l.bf16 %v25
    %v28 = vunpack.c.l.bf16 %v26
    %vm29 = vcmask 261120
    %v30 = vsel %vm29, %v27, 0.0
    %31 = vadd.xlane.f32.xlu0 %v30
    %v32 = vpop.xlane.xlu0 %31
    %v33 = vsel %vm29, %v28, 0.0
    %34 = vadd.xlane.f32.xlu0 %v33
    %v35 = vpop.xlane.xlu0 %34
    %v36 = vrcp.pop 32.0
    %v37 = vmul.f32 %v32, %v36
    %v38 = vmul.f32 %v35, %v36
    %v39 = vsub.f32 %v27, %v37
    %v40 = vsub.f32 %v28, %v38
    %v41 = vmul.f32 %v39, %v39
    %v42 = vmul.f32 %v40, %v40
    %v43 = vsel %vm29, %v41, 0.0
    %44 = vadd.xlane.f32.xlu0 %v43
    %v45 = vpop.xlane.xlu0 %44
    %v46 = vsel %vm29, %v42, 0.0
    %47 = vadd.xlane.f32.xlu0 %v46
    %v48 = vpop.xlane.xlu0 %47
    %v49 = vmul.f32 %v45, %v36
    %v50 = vmul.f32 %v48, %v36
    %v51 = vadd.f32 %v49, 1e-05
    %v52 = vadd.f32 %v50, 1e-05
    %v53 = vrsqrt.pop %v51
    %v54 = vrsqrt.pop %v52
    %v55 = vmul.f32 %v39, %v53
    %v56 = vmul.f32 %v40, %v54
    %v57 = vld [vmem:[%s3] sm:$0x1]
    %v59 = vlaneseq
    %v60 = vshrl.u32 %v59, 7
    %v61 = vsub.s32 0, %v60
    %v62 = vrot.slane %v57, %v61
    %v64 = vmul.f32 %v55, %v62
    %v65 = vmul.f32 %v56, %v62
    %v66 = vld [vmem:[%s4] sm:$0x1]
    %v68 = vlaneseq
    %v69 = vshrl.u32 %v68, 7
    %v70 = vsub.s32 0, %v69
    %v71 = vrot.slane %v66, %v70
    %v73 = vadd.f32 %v64, %v71
    %v74 = vadd.f32 %v65, %v71
    %v75 = vpack.c.bf16 %v74, %v73
    %76 = vst.msk [vmem:[#allocation2] sm:$0xff] %vm29, %v75
  $region25: #{gpt_forward.13} parent=0 // pred_fallthru
    _
  %v77 = vld [vmem:[#allocation2] sm:$0xff]
  %v78 = vld [vmem:[%s1] sm:$0xf]
  %v79 = vld [vmem:[%s1 + $0x4] sm:$0xf]
  %v80 = vld [vmem:[%s1 + $0x8] sm:$0xf]
  %v81 = vld [vmem:[%s1 + $0xc] sm:$0xf]
  %v82 = vld [vmem:[%s2] sm:$0x1]
  %v84 = vlaneseq
  %v85 = vshrl.u32 %v84, 7
  %v86 = vsub.s32 0, %v85
  %v87 = vrot.slane %v82, %v86
  %v93 = vunpack.c.l.b16 %v78
  %v94 = vunpack.c.l.b16 %v79
  %v95 = vunpack.c.l.b16 %v80
  %v96 = vunpack.c.l.b16 %v81
  %v97 = vpack.c.b16 %v94, %v93
  %v98 = vpack.c.b16 %v96, %v95
  %vm101 = vcmask 261120
  %v103 = vsel %vm101, %v77, 0
  %105 = vmatprep.subr.bf16.mxu0 0
  %106 = vmatpush1.bf16.msra.mxu0 %v97
  %107 = vmatprep.subr.bf16.mxu0 0
  %108 = vmatpush1.bf16.msra.mxu0 %v98
  %109 = vmatprep.subr.bf16.mxu0 0
  %110 = vmatpush1.bf16.msra.mxu0 0
  %111 = vmatprep.subr.bf16.mxu0 0
  %112 = vmatpush1.bf16.msra.mxu0 0
  %113 = vmatprep.subr.bf16.mxu0 0
  %114 = vmatpush1.bf16.msra.mxu0 0
  %115 = vmatprep.subr.bf16.mxu0 0
  %116 = vmatpush1.bf16.msra.mxu0 0
  %117 = vmatprep.subr.bf16.mxu0 0
  %118 = vmatpush1.bf16.msra.mxu0 0
  %119 = vmatprep.subr.bf16.mxu0 0
  %120 = vmatpush1.bf16.msra.mxu0 0
  %121 = vmatprep.subr.bf16.mxu0 0
  %122 = vmatpush1.bf16.msra.mxu0 0
  %123 = vmatprep.subr.bf16.mxu0 0
  %124 = vmatpush1.bf16.msra.mxu0 0
  %125 = vmatprep.subr.bf16.mxu0 0
  %126 = vmatpush1.bf16.msra.mxu0 0
  %127 = vmatprep.subr.bf16.mxu0 0
  %128 = vmatpush1.bf16.msra.mxu0 0
  %129 = vmatprep.subr.bf16.mxu0 0
  %130 = vmatpush1.bf16.msra.mxu0 0
  %131 = vmatprep.subr.bf16.mxu0 0
  %132 = vmatpush1.bf16.msra.mxu0 0
  %133 = vmatprep.subr.bf16.mxu0 0
  %134 = vmatpush1.bf16.msra.mxu0 0
  %135 = vmatprep.subr.bf16.mxu0 0
  %136 = vmatpush1.bf16.msra.mxu0 0
  %137 = vmatprep.mubr.bf16.mxu0 0
  %138 = vmatmul.mubr.bf16.gmra.mrb[0].mxu0 %v103
  %v139 = vpop.f32.mrb[0].mxu0
  %v140 = vadd.f32 %v87, %v139
  %v141 = vpop.f32.mrb[0].mxu0
  %v142 = vpop.f32.mrb[0].mxu0
  %v143 = vadd.f32 %v87, %v142
  %v144 = vpop.f32.mrb[0].mxu0
  %145 = vdwg.mxu0
  %v146 = vpack.c.bf16 %v143, %v140
  %v148 = vunpack.c.l.b16 %v146
  %v149 = vunpack.c.h.b16 %v146
  %v150 = vpack.c.b16 %v148, %v148
  %v151 = vpack.c.b16 %v149, %v149
  %vm154 = vcmask 781312
  %155 = vst.msk [vmem:[%s5] sm:$0xf] %vm154, %v150
  %156 = vst.msk [vmem:[%s5 + $0x4] sm:$0xf] %vm154, %v151
  // Predicated region
  $region26: #{gpt_forward.13} parent=0 // pred_check
    _
  $region27: #{gpt_forward.13} parent=0 // pred_check_branch
    %158 = sbr.rel (0) target = $region29
  $region28: #{gpt_forward.13} parent=0 // pred_region
    _
  $region29: #{gpt_forward.13} parent=0 // pred_fallthru
    _
  // Predicated region
  $region30: #{gpt_forward.13} parent=0 // pred_check
    _
  $region31: #{gpt_forward.13} parent=0 // pred_check_branch
    %160 = sbr.rel (0) target = $region33
  $region32: #{gpt_forward.13} parent=0 // pred_region
    _
  $region33: #{gpt_forward.13} parent=0 // pred_fallthru
    _

// kernel: gpt_forward.14
$region0: #{gpt_forward.14}
  #allocation0 [shape = 'u32[]', space=smem, size = 0x4, offset = 0x4, fixed_abs, tag = 'smem constant byte address 0x4 - core index']
  #allocation1 [shape = 'u32[144,128]{1,0:T(1,128)}', space=vmem, size = 0x12000, scoped, tag = 'internal scratch']
  #allocation2 [shape = 'f32[8,4]{1,0:T(8,128)}', space=vmem, size = 0x1000, scoped, tag = 'scratch operand']
  #allocation3 [shape = 'f32[8,4]{1,0:T(8,128)}', space=vmem, size = 0x1000, scoped, tag = 'scratch operand']
  #allocation4 [shape = 'f32[8,32]{1,0:T(8,128)}', space=vmem, size = 0x1000, scoped, tag = 'scratch operand']
  %s0 = inlined_call_operand.vmem [shape: bf16[2,8,32], index: 0, kind: input, shape index: {}]
  %s1 = inlined_call_operand.vmem [shape: bf16[2,8,32], index: 1, kind: input, shape index: {}]
  %s2 = inlined_call_operand.vmem [shape: bf16[2,8,32], index: 2, kind: input, shape index: {}]
  %s3 = inlined_call_operand.vmem [shape: bf16[2,8,32], index: 3, kind: output, shape index: {}]
  %s4 = sld [smem:[#allocation0]]
  $region57: #{gpt_forward.14} parent=0
    _
  %s6 = ssub.s32 1, %s4
  %s7 = scalar_select 0, %s6, %s4
  loop: start=0, step=1, limit=4
  $region2: #{gpt_forward.14} parent=0 // loop_pre_header
    _
  $region3: #{gpt_forward.14} parent=0 // loop_header
    %s9 = sphi 0, %s13
    %p10 = scmp.ge.s32.totalorder %s9, 4
    %s16 = sphi 0, %s35
    %s17 = sphi 0, %s31
    %s18 = sphi 0, %s27
    %s19 = sphi 0, %s16
    %s20 = sphi 0, %s17
    %s21 = sphi 0, %s18
    %s22 = sphi 0, %s19
    %s23 = sphi 0, %s20
    %s24 = sphi 0, %s21
    %s40 = sphi 0, %s42
    %s43 = sphi 0, %s40
    %s44 = sphi 0, %s43
    %s60 = sphi 0, %s44
    %s72 = sphi 0, %s74
    %s75 = sphi 0, %s72
    %s76 = sphi 0, %s75
    %s92 = sphi 0, %s76
    %s104 = sphi 0, %s106
    %s107 = sphi 0, %s104
    %s108 = sphi 0, %s107
    %s124 = sphi 0, %s108
    %s132 = sphi 0, %s134
    %s135 = sphi 0, %s132
    %s136 = sphi 0, %s135
    %s152 = sphi 0, %s136
  $region4: #{gpt_forward.14} parent=0 // loop_header_branch
    %12 = sbr.rel (%p10) target = $region8
  $region5: #{gpt_forward.14} parent=0 // loop_body
    %s14 = ssub.s32 %s9, 1
    %s15 = ssub.s32 %s9, 2
    %s25 = sadd.s32 1, %s18
    %p26 = scmp.ge.s32.totalorder %s25, 1
    %s27 = scalar_select %p26, 0, %s25
    %s28 = sadd.s32 1, %s17
    %s29 = scalar_select %p26, %s28, %s17
    %p30 = scmp.ge.s32.totalorder %s29, 1
    %s31 = scalar_select %p30, 0, %s29
    %s32 = sadd.s32 1, %s16
    %s33 = scalar_select %p30, %s32, %s16
    %p34 = scmp.ge.s32.totalorder %s33, 2
    %s35 = scalar_select %p34, 0, %s33
    %s36 = ssub.s32 %s16, %s35
    %s37 = ssub.s32 %s17, %s31
    %s38 = sor.u32 %s36, %s37
    %p39 = scmp.eq.s32.totalorder %s38, 0
    %s41 = sadd.s32 %s40, 1
    %s42 = scalar_select %p39, %s40, %s41
    %p45 = pneg %p39
    %p46 = scmp.eq.s32.totalorder %s9, 1
    %p47 = por %p45, %p46
    %p48 = scmp.ne.s32.totalorder %s40, %s43
    %p49 = scmp.eq.s32.totalorder %s9, 0
    %p50 = por %p48, %p49
    %p51 = scmp.ne.s32.totalorder %s40, %s43
    %p52 = scmp.eq.s32.totalorder %s14, 1
    %p53 = por %p51, %p52
    %p54 = scmp.ne.s32.totalorder %s43, %s44
    %p55 = scmp.eq.s32.totalorder %s14, 0
    %p56 = por %p54, %p55
    %p57 = scmp.ne.s32.totalorder %s43, %s44
    %p58 = scmp.eq.s32.totalorder %s15, 1
    %p59 = por %p57, %p58
    %p61 = scmp.ne.s32.totalorder %s44, %s60
    %p62 = scmp.eq.s32.totalorder %s15, 0
    %p63 = por %p61, %p62
    %p64 = scmp.lt.s32.totalorder %s18, %s17
    %s65 = scalar_select %p64, %s18, %s17
    %p66 = scmp.lt.s32.totalorder %s27, %s31
    %s67 = scalar_select %p66, %s27, %s31
    %s68 = ssub.s32 %s16, %s35
    %s69 = ssub.s32 %s65, %s67
    %s70 = sor.u32 %s68, %s69
    %p71 = scmp.eq.s32.totalorder %s70, 0
    %s73 = sadd.s32 %s72, 1
    %s74 = scalar_select %p71, %s72, %s73
    %p77 = pneg %p71
    %p78 = scmp.eq.s32.totalorder %s9, 1
    %p79 = por %p77, %p78
    %p80 = scmp.ne.s32.totalorder %s72, %s75
    %p81 = scmp.eq.s32.totalorder %s9, 0
    %p82 = por %p80, %p81
    %p83 = scmp.ne.s32.totalorder %s72, %s75
    %p84 = scmp.eq.s32.totalorder %s14, 1
    %p85 = por %p83, %p84
    %p86 = scmp.ne.s32.totalorder %s75, %s76
    %p87 = scmp.eq.s32.totalorder %s14, 0
    %p88 = por %p86, %p87
    %p89 = scmp.ne.s32.totalorder %s75, %s76
    %p90 = scmp.eq.s32.totalorder %s15, 1
    %p91 = por %p89, %p90
    %p93 = scmp.ne.s32.totalorder %s76, %s92
    %p94 = scmp.eq.s32.totalorder %s15, 0
    %p95 = por %p93, %p94
    %p96 = scmp.lt.s32.totalorder %s18, %s17
    %s97 = scalar_select %p96, %s18, %s17
    %p98 = scmp.lt.s32.totalorder %s27, %s31
    %s99 = scalar_select %p98, %s27, %s31
    %s100 = ssub.s32 %s16, %s35
    %s101 = ssub.s32 %s97, %s99
    %s102 = sor.u32 %s100, %s101
    %p103 = scmp.eq.s32.totalorder %s102, 0
    %s105 = sadd.s32 %s104, 1
    %s106 = scalar_select %p103, %s104, %s105
    %p109 = pneg %p103
    %p110 = scmp.eq.s32.totalorder %s9, 1
    %p111 = por %p109, %p110
    %p112 = scmp.ne.s32.totalorder %s104, %s107
    %p113 = scmp.eq.s32.totalorder %s9, 0
    %p114 = por %p112, %p113
    %p115 = scmp.ne.s32.totalorder %s104, %s107
    %p116 = scmp.eq.s32.totalorder %s14, 1
    %p117 = por %p115, %p116
    %p118 = scmp.ne.s32.totalorder %s107, %s108
    %p119 = scmp.eq.s32.totalorder %s14, 0
    %p120 = por %p118, %p119
    %p121 = scmp.ne.s32.totalorder %s107, %s108
    %p122 = scmp.eq.s32.totalorder %s15, 1
    %p123 = por %p121, %p122
    %p125 = scmp.ne.s32.totalorder %s108, %s124
    %p126 = scmp.eq.s32.totalorder %s15, 0
    %p127 = por %p125, %p126
    %s128 = ssub.s32 %s16, %s35
    %s129 = ssub.s32 %s17, %s31
    %s130 = sor.u32 %s128, %s129
    %p131 = scmp.eq.s32.totalorder %s130, 0
    %s133 = sadd.s32 %s132, 1
    %s134 = scalar_select %p131, %s132, %s133
    %p137 = pneg %p131
    %p138 = scmp.eq.s32.totalorder %s9, 1
    %p139 = por %p137, %p138
    %p140 = scmp.ne.s32.totalorder %s132, %s135
    %p141 = scmp.eq.s32.totalorder %s9, 0
    %p142 = por %p140, %p141
    %p143 = scmp.ne.s32.totalorder %s132, %s135
    %p144 = scmp.eq.s32.totalorder %s14, 1
    %p145 = por %p143, %p144
    %p146 = scmp.ne.s32.totalorder %s135, %s136
    %p147 = scmp.eq.s32.totalorder %s14, 0
    %p148 = por %p146, %p147
    %p149 = scmp.ne.s32.totalorder %s135, %s136
    %p150 = scmp.eq.s32.totalorder %s15, 1
    %p151 = por %p149, %p150
    %p153 = scmp.ne.s32.totalorder %s136, %s152
    %p154 = scmp.eq.s32.totalorder %s15, 0
    %p155 = por %p153, %p154
    %p156 = scmp.le.s32.totalorder 1, %s9
    %p157 = scmp.lt.s32.totalorder %s9, 3
    %p158 = pnand %p156, %p157
    %p159 = pneg %p158
    // Predicated region
    $region9: #{gpt_forward.14} parent=5 // pred_check
      _
    $region10: #{gpt_forward.14} parent=5 // pred_check_branch
      %161 = sbr.rel (%p158) target = $region12
    $region11: #{gpt_forward.14} parent=5 // pred_region
      %s162 = ssub.s32 %s9, 1
    $region12: #{gpt_forward.14} parent=5 // pred_fallthru
      _
    %p163 = scmp.lt.s32.totalorder %s9, 2
    // Predicated region
    $region13: #{gpt_forward.14} parent=5 // pred_check
      %p164 = pneg %p163
    $region14: #{gpt_forward.14} parent=5 // pred_check_branch
      %166 = sbr.rel (%p164) target = $region16
    $region15: #{gpt_forward.14} parent=5 // pred_region
      // Predicated region
      $region17: #{gpt_forward.14} parent=15 // pred_check
        %p167 = pneg %p50
      $region18: #{gpt_forward.14} parent=15 // pred_check_branch
        %169 = sbr.rel (%p167) target = $region20
      $region19: #{gpt_forward.14} parent=15 // pred_region
        %p170 = scmp.lt.s32.totalorder %s16, 1
        %s171 = scalar_select %p170, %s16, 1
        %p172 = scmp.lt.s32.totalorder %s17, 0
        %s173 = scalar_select %p172, %s17, 0
        %s174 = sadd.s32 %s173, %s171
        %s175 = smul.addr %s174, 4
        %s176 = scalar_lea.vmem %s0, %s175
      $region20: #{gpt_forward.14} parent=15 // pred_fallthru
        _
      // Predicated region
      $region21: #{gpt_forward.14} parent=15 // pred_check
        %p177 = pneg %p82
      $region22: #{gpt_forward.14} parent=15 // pred_check_branch
        %179 = sbr.rel (%p177) target = $region24
      $region23: #{gpt_forward.14} parent=15 // pred_region
        %p180 = scmp.lt.s32.totalorder %s18, %s17
        %s181 = scalar_select %p180, %s18, %s17
        %p182 = scmp.lt.s32.totalorder %s16, 1
        %s183 = scalar_select %p182, %s16, 1
        %p184 = scmp.lt.s32.totalorder %s181, 0
        %s185 = scalar_select %p184, %s181, 0
        %s186 = sadd.s32 %s185, %s183
        %s187 = smul.addr %s186, 4
        %s188 = scalar_lea.vmem %s1, %s187
        %p189 = scmp.lt.s32.totalorder %s18, %s17
        %s190 = scalar_select %p189, %s18, %s17
      $region24: #{gpt_forward.14} parent=15 // pred_fallthru
        _
      // Predicated region
      $region25: #{gpt_forward.14} parent=15 // pred_check
        %p191 = pneg %p114
      $region26: #{gpt_forward.14} parent=15 // pred_check_branch
        %193 = sbr.rel (%p191) target = $region28
      $region27: #{gpt_forward.14} parent=15 // pred_region
        %p194 = scmp.lt.s32.totalorder %s18, %s17
        %s195 = scalar_select %p194, %s18, %s17
        %p196 = scmp.lt.s32.totalorder %s16, 1
        %s197 = scalar_select %p196, %s16, 1
        %p198 = scmp.lt.s32.totalorder %s195, 0
        %s199 = scalar_select %p198, %s195, 0
        %s200 = sadd.s32 %s199, %s197
        %s201 = smul.addr %s200, 4
        %s202 = scalar_lea.vmem %s2, %s201
        %p203 = scmp.lt.s32.totalorder %s18, %s17
        %s204 = scalar_select %p203, %s18, %s17
      $region28: #{gpt_forward.14} parent=15 // pred_fallthru
        _
    $region16: #{gpt_forward.14} parent=5 // pred_fallthru
      _
    %p205 = scmp.le.s32.totalorder 1, %s9
    %p206 = scmp.lt.s32.totalorder %s9, 3
    %p207 = pnand %p205, %p206
    %p208 = pneg %p207
    // Predicated region
    $region29: #{gpt_forward.14} parent=5 // pred_check
      _
    $region30: #{gpt_forward.14} parent=5 // pred_check_branch
      %210 = sbr.rel (%p207) target = $region32
    $region31: #{gpt_forward.14} parent=5 // pred_region
      %s211 = ssub.s32 %s9, 1
      %p212 = scmp.lt.s32.totalorder %s19, 1
      %s213 = scalar_select %p212, %s19, 1
      %p214 = scmp.lt.s32.totalorder %s20, 0
      %s215 = scalar_select %p214, %s20, 0
      %s216 = sadd.s32 %s215, %s213
      %s217 = smul.addr %s216, 4
      %s218 = scalar_lea.vmem %s0, %s217
      %p219 = pneg %p56
      %p220 = pneg %p53
      %p221 = scmp.lt.s32.totalorder %s21, %s20
      %s222 = scalar_select %p221, %s21, %s20
      %p223 = scmp.lt.s32.totalorder %s19, 1
      %s224 = scalar_select %p223, %s19, 1
      %p225 = scmp.lt.s32.totalorder %s222, 0
      %s226 = scalar_select %p225, %s222, 0
      %s227 = sadd.s32 %s226, %s224
      %s228 = smul.addr %s227, 4
      %s229 = scalar_lea.vmem %s1, %s228
      %p230 = pneg %p88
      %p231 = pneg %p85
      %p232 = scmp.lt.s32.totalorder %s21, %s20
      %s233 = scalar_select %p232, %s21, %s20
      %p234 = scmp.lt.s32.totalorder %s19, 1
      %s235 = scalar_select %p234, %s19, 1
      %p236 = scmp.lt.s32.totalorder %s233, 0
      %s237 = scalar_select %p236, %s233, 0
      %s238 = sadd.s32 %s237, %s235
      %s239 = smul.addr %s238, 4
      %s240 = scalar_lea.vmem %s2, %s239
      %p241 = pneg %p120
      %p242 = pneg %p117
      %p243 = pneg %p148
      %p244 = pneg %p145
      %p245 = scmp.lt.s32.totalorder %s19, 1
      %s246 = scalar_select %p245, %s19, 1
      %p247 = scmp.lt.s32.totalorder %s20, 0
      %s248 = scalar_select %p247, %s20, 0
      %s249 = sadd.s32 %s248, %s246
      %s250 = smul.addr %s249, 4
      %s251 = scalar_lea.vmem %s3, %s250
      %p252 = scmp.lt.s32.totalorder %s19, 1
      %s253 = scalar_select %p252, %s19, 1
      %p254 = scmp.lt.s32.totalorder %s20, 0
      %s255 = scalar_select %p254, %s20, 0
      %s256 = sadd.s32 %s255, %s253
      %s257 = smul.addr %s256, 4
      %s258 = scalar_lea.vmem %s0, %s257
      %p259 = scmp.lt.s32.totalorder %s21, %s20
      %s260 = scalar_select %p259, %s21, %s20
      %p261 = scmp.lt.s32.totalorder %s19, 1
      %s262 = scalar_select %p261, %s19, 1
      %p263 = scmp.lt.s32.totalorder %s260, 0
      %s264 = scalar_select %p263, %s260, 0
      %s265 = sadd.s32 %s264, %s262
      %s266 = smul.addr %s265, 4
      %s267 = scalar_lea.vmem %s1, %s266
      %p268 = scmp.lt.s32.totalorder %s21, %s20
      %s269 = scalar_select %p268, %s21, %s20
      %p270 = scmp.lt.s32.totalorder %s21, %s20
      %s271 = scalar_select %p270, %s21, %s20
      %p272 = scmp.lt.s32.totalorder %s19, 1
      %s273 = scalar_select %p272, %s19, 1
      %p274 = scmp.lt.s32.totalorder %s271, 0
      %s275 = scalar_select %p274, %s271, 0
      %s276 = sadd.s32 %s275, %s273
      %s277 = smul.addr %s276, 4
      %s278 = scalar_lea.vmem %s2, %s277
      %p279 = scmp.lt.s32.totalorder %s21, %s20
      %s280 = scalar_select %p279, %s21, %s20
      %p281 = scmp.lt.s32.totalorder %s19, 1
      %s282 = scalar_select %p281, %s19, 1
      %p283 = scmp.lt.s32.totalorder %s20, 0
      %s284 = scalar_select %p283, %s20, 0
      %s285 = sadd.s32 %s284, %s282
      %s286 = smul.addr %s285, 4
      %s287 = scalar_lea.vmem %s3, %s286
      %p289 = scmp.eq.s32.totalorder %s21, 0
      // Predicated region
      $region33: #{gpt_forward.14} parent=31 // pred_check
        %p290 = pneg %p289
      $region34: #{gpt_forward.14} parent=31 // pred_check_branch
        %292 = sbr.rel (%p290) target = $region36
      $region35: #{gpt_forward.14} parent=31 // pred_region
        %vm293 = vcmask 31744
        %294 = vst.msk [vmem:[#allocation2] sm:$0xff] %vm293, -1e+30
        %295 = vst.msk [vmem:[#allocation3] sm:$0xff] %vm293, 0.0
        %vm296 = vcmask 261120
        %297 = vst.msk [vmem:[#allocation4] sm:$0xff] %vm296, 0.0
      $region36: #{gpt_forward.14} parent=31 // pred_fallthru
        _
      %p298 = scmp.le.s32.totalorder %s21, %s20
      // Predicated region
      $region37: #{gpt_forward.14} parent=31 // pred_check
        %p299 = pneg %p298
      $region38: #{gpt_forward.14} parent=31 // pred_check_branch
        %301 = sbr.rel (%p299) target = $region40
      $region39: #{gpt_forward.14} parent=31 // pred_region
        %v302 = vld [vmem:[%s258] sm:$0xf]
        %v303 = vld [vmem:[%s267] sm:$0xf]
        %v304 = vld [vmem:[%s278] sm:$0xf]
        %s305 = smul.u32 %s20, 8
        %v306 = vlaneseq
        %v307 = vshrl.u32 %v306, 7
        %v308 = vstv %s305
        %v309 = vadd.s32 %v308, %v307
        %s310 = smul.u32 %s21, 8
        %v311 = vlaneseq
        %v312 = vand.u32 %v311, 127
        %v313 = vstv %s310
        %v314 = vadd.s32 %v313, %v312
        %vm315 = vcmp.le.s32.totalorder %v314, %v309
        %vm316 = vcmask 64512
        %v318 = vsel %vm316, %v302, 0
        %v321 = vsel %vm316, %v303, 0
        %323 = vmatprep.subr.bf16.mxu0 0
        %324 = vmatpush1.bf16.xpose.msra.mxu0 %v321
        %325 = vmatprep.subr.bf16.mxu0 0
        %326 = vmatpush1.bf16.xpose.msra.mxu0 0
        %327 = vmatprep.subr.bf16.mxu0 0
        %328 = vmatpush1.bf16.xpose.msra.mxu0 0
        %329 = vmatprep.subr.bf16.mxu0 0
        %330 = vmatpush1.bf16.xpose.msra.mxu0 0
        %331 = vmatprep.subr.bf16.mxu0 0
        %332 = vmatpush1.bf16.xpose.msra.mxu0 0
        %333 = vmatprep.subr.bf16.mxu0 0
        %334 = vmatpush1.bf16.xpose.msra.mxu0 0
        %335 = vmatprep.subr.bf16.mxu0 0
        %336 = vmatpush1.bf16.xpose.msra.mxu0 0
        %337 = vmatprep.subr.bf16.mxu0 0
        %338 = vmatpush1.bf16.xpose.msra.mxu0 0
        %339 = vmatprep.subr.bf16.mxu0 0
        %340 = vmatpush1.bf16.xpose.msra.mxu0 0
        %341 = vmatprep.subr.bf16.mxu0 0
        %342 = vmatpush1.bf16.xpose.msra.mxu0 0
        %343 = vmatprep.subr.bf16.mxu0 0
        %344 = vmatpush1.bf16.xpose.msra.mxu0 0
        %345 = vmatprep.subr.bf16.mxu0 0
        %346 = vmatpush1.bf16.xpose.msra.mxu0 0
        %347 = vmatprep.subr.bf16.mxu0 0
        %348 = vmatpush1.bf16.xpose.msra.mxu0 0
        %349 = vmatprep.subr.bf16.mxu0 0
        %350 = vmatpush1.bf16.xpose.msra.mxu0 0
        %351 = vmatprep.subr.bf16.mxu0 0
        %352 = vmatpush1.bf16.xpose.msra.mxu0 0
        %353 = vmatprep.subr.bf16.mxu0 0
        %354 = vmatpush1.bf16.xpose.msra.mxu0 0
        %355 = vmatprep.mubr.bf16.mxu0 0
        %356 = vmatmul.mubr.bf16.gmra.mrb[0].mxu0 %v318
        %v357 = vpop.f32.mrb[0].mxu0
        %v358 = vadd.f32 0.0, %v357
        %v359 = vpop.f32.mrb[0].mxu0
        %v360 = vpop.f32.mrb[0].mxu0
        %v361 = vpop.f32.mrb[0].mxu0
        %362 = vdwg.mxu0
        %v363 = vmul.f32 %v358, 0.35355338
        %v364 = vsel %vm315, %v363, -1e+10
        %v365 = vld [vmem:[#allocation2] sm:$0xff]
        %v366 = vsel %vm316, %v364, -inf
        %367 = vmax.xlane.f32.xlu0 %v366
        %v368 = vpop.xlane.xlu0 %367
        %v369 = vmax.f32 %v365, %v368
        %v370 = vsub.f32 %v365, %v369
        %v371 = vmul.f32 %v370, 1.442695
        %v372 = vpow.pop %v371
        %374 = vset.pattern.permute.xlu0 0
        %375 = vperm.xlu0 %374, %v369
        %v376 = vpop.permute.xlu0 %375
        %v378 = vsub.f32 %v364, %v376
        %v379 = vmul.f32 %v378, 1.442695
        %v380 = vpow.pop %v379
        %v381 = vld [vmem:[#allocation3] sm:$0xff]
        %v382 = vmul.f32 %v372, %v381
        %v383 = vsel %vm316, %v380, 0.0
        %384 = vadd.xlane.f32.xlu0 %v383
        %v385 = vpop.xlane.xlu0 %384
        %v386 = vadd.f32 %v382, %v385
        %vm387 = vcmask 7168
        %388 = vst.msk [vmem:[#allocation3] sm:$0xff] %vm387, %v386
        %v389 = vld [vmem:[#allocation4] sm:$0xff]
        %391 = vset.pattern.permute.xlu0 0
        %392 = vperm.xlu0 %391, %v372
        %v393 = vpop.permute.xlu0 %392
        %v395 = vmul.f32 %v393, %v389
        %v396 = vpack.c.bf16 %v380, %v380
        %v398 = vsel %vm316, %v396, 0
        %vm400 = vcmask 1043456
        %v402 = vsel %vm400, %v304, 0
        %404 = vmatprep.subr.bf16.mxu0 0
        %405 = vmatpush1.bf16.msra.mxu0 %v402
        %406 = vmatprep.subr.bf16.mxu0 0
        %407 = vmatpush1.bf16.msra.mxu0 0
        %408 = vmatprep.subr.bf16.mxu0 0
        %409 = vmatpush1.bf16.msra.mxu0 0
        %410 = vmatprep.subr.bf16.mxu0 0
        %411 = vmatpush1.bf16.msra.mxu0 0
        %412 = vmatprep.subr.bf16.mxu0 0
        %413 = vmatpush1.bf16.msra.mxu0 0
        %414 = vmatprep.subr.bf16.mxu0 0
        %415 = vmatpush1.bf16.msra.mxu0 0
        %416 = vmatprep.subr.bf16.mxu0 0
        %417 = vmatpush1.bf16.msra.mxu0 0
        %418 = vmatprep.subr.bf16.mxu0 0
        %419 = vmatpush1.bf16.msra.mxu0 0
        %420 = vmatprep.subr.bf16.mxu0 0
        %421 = vmatpush1.bf16.msra.mxu0 0
        %422 = vmatprep.subr.bf16.mxu0 0
        %423 = vmatpush1.bf16.msra.mxu0 0
        %424 = vmatprep.subr.bf16.mxu0 0
        %425 = vmatpush1.bf16.msra.mxu0 0
        %426 = vmatprep.subr.bf16.mxu0 0
        %427 = vmatpush1.bf16.msra.mxu0 0
        %428 = vmatprep.subr.bf16.mxu0 0
        %429 = vmatpush1.bf16.msra.mxu0 0
        %430 = vmatprep.subr.bf16.mxu0 0
        %431 = vmatpush1.bf16.msra.mxu0 0
        %432 = vmatprep.subr.bf16.mxu0 0
        %433 = vmatpush1.bf16.msra.mxu0 0
        %434 = vmatprep.subr.bf16.mxu0 0
        %435 = vmatpush1.bf16.msra.mxu0 0
        %436 = vmatprep.mubr.bf16.mxu0 0
        %437 = vmatmul.mubr.bf16.gmra.mrb[0].mxu0 %v398
        %v438 = vpop.f32.mrb[0].mxu0
        %v439 = vadd.f32 0.0, %v438
        %v440 = vpop.f32.mrb[0].mxu0
        %v441 = vpop.f32.mrb[0].mxu0
        %v442 = vpop.f32.mrb[0].mxu0
        %443 = vdwg.mxu0
        %v444 = vadd.f32 %v395, %v439
        %445 = vst.msk [vmem:[#allocation4] sm:$0xff] %vm316, %v444
        %446 = vst.msk [vmem:[#allocation2] sm:$0xff] %vm387, %v369
        %v448 = vunpack.c.l.b16 %v302
        %v449 = vpack.c.b16 %v448, %v448
        %450 = vrot.lane.b32.xlu0 %v449, 120
        %v451 = vpop.permute.xlu0 %450
        %v453 = vunpack.c.l.b16 %v303
        %v454 = vpack.c.b16 %v453, %v453
        %455 = vrot.lane.b32.xlu0 %v454, 120
        %v456 = vpop.permute.xlu0 %455
        %v458 = vsel %vm316, %v451, 0
        %v461 = vsel %vm316, %v456, 0
        %463 = vmatprep.subr.bf16.mxu0 0
        %464 = vmatpush1.bf16.xpose.msra.mxu0 %v461
        %465 = vmatprep.subr.bf16.mxu0 0
        %466 = vmatpush1.bf16.xpose.msra.mxu0 0
        %467 = vmatprep.subr.bf16.mxu0 0
        %468 = vmatpush1.bf16.xpose.msra.mxu0 0
        %469 = vmatprep.subr.bf16.mxu0 0
        %470 = vmatpush1.bf16.xpose.msra.mxu0 0
        %471 = vmatprep.subr.bf16.mxu0 0
        %472 = vmatpush1.bf16.xpose.msra.mxu0 0
        %473 = vmatprep.subr.bf16.mxu0 0
        %474 = vmatpush1.bf16.xpose.msra.mxu0 0
        %475 = vmatprep.subr.bf16.mxu0 0
        %476 = vmatpush1.bf16.xpose.msra.mxu0 0
        %477 = vmatprep.subr.bf16.mxu0 0
        %478 = vmatpush1.bf16.xpose.msra.mxu0 0
        %479 = vmatprep.subr.bf16.mxu0 0
        %480 = vmatpush1.bf16.xpose.msra.mxu0 0
        %481 = vmatprep.subr.bf16.mxu0 0
        %482 = vmatpush1.bf16.xpose.msra.mxu0 0
        %483 = vmatprep.subr.bf16.mxu0 0
        %484 = vmatpush1.bf16.xpose.msra.mxu0 0
        %485 = vmatprep.subr.bf16.mxu0 0
        %486 = vmatpush1.bf16.xpose.msra.mxu0 0
        %487 = vmatprep.subr.bf16.mxu0 0
        %488 = vmatpush1.bf16.xpose.msra.mxu0 0
        %489 = vmatprep.subr.bf16.mxu0 0
        %490 = vmatpush1.bf16.xpose.msra.mxu0 0
        %491 = vmatprep.subr.bf16.mxu0 0
        %492 = vmatpush1.bf16.xpose.msra.mxu0 0
        %493 = vmatprep.subr.bf16.mxu0 0
        %494 = vmatpush1.bf16.xpose.msra.mxu0 0
        %495 = vmatprep.mubr.bf16.mxu0 0
        %496 = vmatmul.mubr.bf16.gmra.mrb[0].mxu0 %v458
        %v497 = vpop.f32.mrb[0].mxu0
        %v498 = vadd.f32 0.0, %v497
        %v499 = vpop.f32.mrb[0].mxu0
        %v500 = vpop.f32.mrb[0].mxu0
        %v501 = vpop.f32.mrb[0].mxu0
        %502 = vdwg.mxu0
        %v503 = vmul.f32 %v498, 0.35355338
        %v504 = vsel %vm315, %v503, -1e+10
        %v505 = vld [vmem:[#allocation2] sm:$0xff]
        %v506 = vsel %vm316, %v504, -inf
        %507 = vmax.xlane.f32.xlu0 %v506
        %v508 = vpop.xlane.xlu0 %507
        %v509 = vmax.f32 %v505, %v508
        %v510 = vsub.f32 %v505, %v509
        %v511 = vmul.f32 %v510, 1.442695
        %v512 = vpow.pop %v511
        %514 = vset.pattern.permute.xlu0 1
        %515 = vperm.xlu0 %514, %v509
        %v516 = vpop.permute.xlu0 %515
        %v518 = vsub.f32 %v504, %v516
        %v519 = vmul.f32 %v518, 1.442695
        %v520 = vpow.pop %v519
        %v521 = vld [vmem:[#allocation3] sm:$0xff]
        %v522 = vmul.f32 %v512, %v521
        %v523 = vsel %vm316, %v520, 0.0
        %524 = vadd.xlane.f32.xlu0 %v523
        %v525 = vpop.xlane.xlu0 %524
        %v526 = vadd.f32 %v522, %v525
        %vm527 = vcmask 15368
        %528 = vst.msk [vmem:[#allocation3] sm:$0xff] %vm527, %v526
        %v529 = vld [vmem:[#allocation4] sm:$0xff]
        %531 = vset.pattern.permute.xlu0 1
        %532 = vperm.xlu0 %531, %v512
        %v533 = vpop.permute.xlu0 %532
        %v535 = vmul.f32 %v533, %v529
        %v536 = vpack.c.bf16 %v520, %v520
        %v538 = vunpack.c.l.b16 %v304
        %v539 = vpack.c.b16 %v538, %v538
        %540 = vrot.lane.b32.xlu0 %v539, 120
        %v541 = vpop.permute.xlu0 %540
        %v543 = vsel %vm316, %v536, 0
        %v546 = vsel %vm400, %v541, 0
        %548 = vmatprep.subr.bf16.mxu0 0
        %549 = vmatpush1.bf16.msra.mxu0 %v546
        %550 = vmatprep.subr.bf16.mxu0 0
        %551 = vmatpush1.bf16.msra.mxu0 0
        %552 = vmatprep.subr.bf16.mxu0 0
        %553 = vmatpush1.bf16.msra.mxu0 0
        %554 = vmatprep.subr.bf16.mxu0 0
        %555 = vmatpush1.bf16.msra.mxu0 0
        %556 = vmatprep.subr.bf16.mxu0 0
        %557 = vmatpush1.bf16.msra.mxu0 0
        %558 = vmatprep.subr.bf16.mxu0 0
        %559 = vmatpush1.bf16.msra.mxu0 0
        %560 = vmatprep.subr.bf16.mxu0 0
        %561 = vmatpush1.bf16.msra.mxu0 0
        %562 = vmatprep.subr.bf16.mxu0 0
        %563 = vmatpush1.bf16.msra.mxu0 0
        %564 = vmatprep.subr.bf16.mxu0 0
        %565 = vmatpush1.bf16.msra.mxu0 0
        %566 = vmatprep.subr.bf16.mxu0 0
        %567 = vmatpush1.bf16.msra.mxu0 0
        %568 = vmatprep.subr.bf16.mxu0 0
        %569 = vmatpush1.bf16.msra.mxu0 0
        %570 = vmatprep.subr.bf16.mxu0 0
        %571 = vmatpush1.bf16.msra.mxu0 0
        %572 = vmatprep.subr.bf16.mxu0 0
        %573 = vmatpush1.bf16.msra.mxu0 0
        %574 = vmatprep.subr.bf16.mxu0 0
        %575 = vmatpush1.bf16.msra.mxu0 0
        %576 = vmatprep.subr.bf16.mxu0 0
        %577 = vmatpush1.bf16.msra.mxu0 0
        %578 = vmatprep.subr.bf16.mxu0 0
        %579 = vmatpush1.bf16.msra.mxu0 0
        %580 = vmatprep.mubr.bf16.mxu0 0
        %581 = vmatmul.mubr.bf16.gmra.mrb[0].mxu0 %v543
        %v582 = vpop.f32.mrb[0].mxu0
        %v583 = vadd.f32 0.0, %v582
        %v584 = vpop.f32.mrb[0].mxu0
        %v585 = vpop.f32.mrb[0].mxu0
        %v586 = vpop.f32.mrb[0].mxu0
        %587 = vdwg.mxu0
        %589 = vrot.lane.b32.xlu0 %v583, 8
        %v590 = vpop.permute.xlu0 %589
        %v592 = vadd.f32 %v535, %v590
        %vm593 = vcmask 130112
        %594 = vst.msk [vmem:[#allocation4] sm:$0xff] %vm593, %v592
        %595 = vst.msk [vmem:[#allocation2] sm:$0xff] %vm527, %v509
        %596 = vrot.lane.b32.xlu0 %v449, 112
        %v597 = vpop.permute.xlu0 %596
        %598 = vrot.lane.b32.xlu0 %v454, 112
        %v599 = vpop.permute.xlu0 %598
        %v601 = vsel %vm316, %v597, 0
        %v604 = vsel %vm316, %v599, 0
        %606 = vmatprep.subr.bf16.mxu0 0
        %607 = vmatpush1.bf16.xpose.msra.mxu0 %v604
        %608 = vmatprep.subr.bf16.mxu0 0
        %609 = vmatpush1.bf16.xpose.msra.mxu0 0
        %610 = vmatprep.subr.bf16.mxu0 0
        %611 = vmatpush1.bf16.xpose.msra.mxu0 0
        %612 = vmatprep.subr.bf16.mxu0 0
        %613 = vmatpush1.bf16.xpose.msra.mxu0 0
        %614 = vmatprep.subr.bf16.mxu0 0
        %615 = vmatpush1.bf16.xpose.msra.mxu0 0
        %616 = vmatprep.subr.bf16.mxu0 0
        %617 = vmatpush1.bf16.xpose.msra.mxu0 0
        %618 = vmatprep.subr.bf16.mxu0 0
        %619 = vmatpush1.bf16.xpose.msra.mxu0 0
        %620 = vmatprep.subr.bf16.mxu0 0
        %621 = vmatpush1.bf16.xpose.msra.mxu0 0
        %622 = vmatprep.subr.bf16.mxu0 0
        %623 = vmatpush1.bf16.xpose.msra.mxu0 0
        %624 = vmatprep.subr.bf16.mxu0 0
        %625 = vmatpush1.bf16.xpose.msra.mxu0 0
        %626 = vmatprep.subr.bf16.mxu0 0
        %627 = vmatpush1.bf16.xpose.msra.mxu0 0
        %628 = vmatprep.subr.bf16.mxu0 0
        %629 = vmatpush1.bf16.xpose.msra.mxu0 0
        %630 = vmatprep.subr.bf16.mxu0 0
        %631 = vmatpush1.bf16.xpose.msra.mxu0 0
        %632 = vmatprep.subr.bf16.mxu0 0
        %633 = vmatpush1.bf16.xpose.msra.mxu0 0
        %634 = vmatprep.subr.bf16.mxu0 0
        %635 = vmatpush1.bf16.xpose.msra.mxu0 0
        %636 = vmatprep.subr.bf16.mxu0 0
        %637 = vmatpush1.bf16.xpose.msra.mxu0 0
        %638 = vmatprep.mubr.bf16.mxu0 0
        %639 = vmatmul.mubr.bf16.gmra.mrb[0].mxu0 %v601
        %v640 = vpop.f32.mrb[0].mxu0
        %v641 = vadd.f32 0.0, %v640
        %v642 = vpop.f32.mrb[0].mxu0
        %v643 = vpop.f32.mrb[0].mxu0
        %v644 = vpop.f32.mrb[0].mxu0
        %645 = vdwg.mxu0
        %v646 = vmul.f32 %v641, 0.35355338
        %v647 = vsel %vm315, %v646, -1e+10
        %v648 = vld [vmem:[#allocation2] sm:$0xff]
        %v649 = vsel %vm316, %v647, -inf
        %650 = vmax.xlane.f32.xlu0 %v649
        %v651 = vpop.xlane.xlu0 %650
        %v652 = vmax.f32 %v648, %v651
        %v653 = vsub.f32 %v648, %v652
        %v654 = vmul.f32 %v653, 1.442695
        %v655 = vpow.pop %v654
        %657 = vset.pattern.permute.xlu0 2
        %658 = vperm.xlu0 %657, %v652
        %v659 = vpop.permute.xlu0 %658
        %v661 = vsub.f32 %v647, %v659
        %v662 = vmul.f32 %v661, 1.442695
        %v663 = vpow.pop %v662
        %v664 = vld [vmem:[#allocation3] sm:$0xff]
        %v665 = vmul.f32 %v655, %v664
        %v666 = vsel %vm316, %v663, 0.0
        %667 = vadd.xlane.f32.xlu0 %v666
        %v668 = vpop.xlane.xlu0 %667
        %v669 = vadd.f32 %v665, %v668
        %vm670 = vcmask 23568
        %671 = vst.msk [vmem:[#allocation3] sm:$0xff] %vm670, %v669
        %v672 = vld [vmem:[#allocation4] sm:$0xff]
        %674 = vset.pattern.permute.xlu0 2
        %675 = vperm.xlu0 %674, %v655
        %v676 = vpop.permute.xlu0 %675
        %v678 = vmul.f32 %v676, %v672
        %v679 = vpack.c.bf16 %v663, %v663
        %680 = vrot.lane.b32.xlu0 %v539, 112
        %v681 = vpop.permute.xlu0 %680
        %v683 = vsel %vm316, %v679, 0
        %v686 = vsel %vm400, %v681, 0
        %688 = vmatprep.subr.bf16.mxu0 0
        %689 = vmatpush1.bf16.msra.mxu0 %v686
        %690 = vmatprep.subr.bf16.mxu0 0
        %691 = vmatpush1.bf16.msra.mxu0 0
        %692 = vmatprep.subr.bf16.mxu0 0
        %693 = vmatpush1.bf16.msra.mxu0 0
        %694 = vmatprep.subr.bf16.mxu0 0
        %695 = vmatpush1.bf16.msra.mxu0 0
        %696 = vmatprep.subr.bf16.mxu0 0
        %697 = vmatpush1.bf16.msra.mxu0 0
        %698 = vmatprep.subr.bf16.mxu0 0
        %699 = vmatpush1.bf16.msra.mxu0 0
        %700 = vmatprep.subr.bf16.mxu0 0
        %701 = vmatpush1.bf16.msra.mxu0 0
        %702 = vmatprep.subr.bf16.mxu0 0
        %703 = vmatpush1.bf16.msra.mxu0 0
        %704 = vmatprep.subr.bf16.mxu0 0
        %705 = vmatpush1.bf16.msra.mxu0 0
        %706 = vmatprep.subr.bf16.mxu0 0
        %707 = vmatpush1.bf16.msra.mxu0 0
        %708 = vmatprep.subr.bf16.mxu0 0
        %709 = vmatpush1.bf16.msra.mxu0 0
        %710 = vmatprep.subr.bf16.mxu0 0
        %711 = vmatpush1.bf16.msra.mxu0 0
        %712 = vmatprep.subr.bf16.mxu0 0
        %713 = vmatpush1.bf16.msra.mxu0 0
        %714 = vmatprep.subr.bf16.mxu0 0
        %715 = vmatpush1.bf16.msra.mxu0 0
        %716 = vmatprep.subr.bf16.mxu0 0
        %717 = vmatpush1.bf16.msra.mxu0 0
        %718 = vmatprep.subr.bf16.mxu0 0
        %719 = vmatpush1.bf16.msra.mxu0 0
        %720 = vmatprep.mubr.bf16.mxu0 0
        %721 = vmatmul.mubr.bf16.gmra.mrb[0].mxu0 %v683
        %v722 = vpop.f32.mrb[0].mxu0
        %v723 = vadd.f32 0.0, %v722
        %v724 = vpop.f32.mrb[0].mxu0
        %v725 = vpop.f32.mrb[0].mxu0
        %v726 = vpop.f32.mrb[0].mxu0
        %727 = vdwg.mxu0
        %729 = vrot.lane.b32.xlu0 %v723, 16
        %v730 = vpop.permute.xlu0 %729
        %v732 = vadd.f32 %v678, %v730
        %vm733 = vcmask 195712
        %734 = vst.msk [vmem:[#allocation4] sm:$0xff] %vm733, %v732
        %735 = vst.msk [vmem:[#allocation2] sm:$0xff] %vm670, %v652
        %736 = vrot.lane.b32.xlu0 %v449, 104
        %v737 = vpop.permute.xlu0 %736
        %738 = vrot.lane.b32.xlu0 %v454, 104
        %v739 = vpop.permute.xlu0 %738
        %v741 = vsel %vm316, %v737, 0
        %v744 = vsel %vm316, %v739, 0
        %746 = vmatprep.subr.bf16.mxu0 0
        %747 = vmatpush1.bf16.xpose.msra.mxu0 %v744
        %748 = vmatprep.subr.bf16.mxu0 0
        %749 = vmatpush1.bf16.xpose.msra.mxu0 0
        %750 = vmatprep.subr.bf16.mxu0 0
        %751 = vmatpush1.bf16.xpose.msra.mxu0 0
        %752 = vmatprep.subr.bf16.mxu0 0
        %753 = vmatpush1.bf16.xpose.msra.mxu0 0
        %754 = vmatprep.subr.bf16.mxu0 0
        %755 = vmatpush1.bf16.xpose.msra.mxu0 0
        %756 = vmatprep.subr.bf16.mxu0 0
        %757 = vmatpush1.bf16.xpose.msra.mxu0 0
        %758 = vmatprep.subr.bf16.mxu0 0
        %759 = vmatpush1.bf16.xpose.msra.mxu0 0
        %760 = vmatprep.subr.bf16.mxu0 0
        %761 = vmatpush1.bf16.xpose.msra.mxu0 0
        %762 = vmatprep.subr.bf16.mxu0 0
        %763 = vmatpush1.bf16.xpose.msra.mxu0 0
        %764 = vmatprep.subr.bf16.mxu0 0
        %765 = vmatpush1.bf16.xpose.msra.mxu0 0
        %766 = vmatprep.subr.bf16.mxu0 0
        %767 = vmatpush1.bf16.xpose.msra.mxu0 0
        %768 = vmatprep.subr.bf16.mxu0 0
        %769 = vmatpush1.bf16.xpose.msra.mxu0 0
        %770 = vmatprep.subr.bf16.mxu0 0
        %771 = vmatpush1.bf16.xpose.msra.mxu0 0
        %772 = vmatprep.subr.bf16.mxu0 0
        %773 = vmatpush1.bf16.xpose.msra.mxu0 0
        %774 = vmatprep.subr.bf16.mxu0 0
        %775 = vmatpush1.bf16.xpose.msra.mxu0 0
        %776 = vmatprep.subr.bf16.mxu0 0
        %777 = vmatpush1.bf16.xpose.msra.mxu0 0
        %778 = vmatprep.mubr.bf16.mxu0 0
        %779 = vmatmul.mubr.bf16.gmra.mrb[0].mxu0 %v741
        %v780 = vpop.f32.mrb[0].mxu0
        %v781 = vadd.f32 0.0, %v780
        %v782 = vpop.f32.mrb[0].mxu0
        %v783 = vpop.f32.mrb[0].mxu0
        %v784 = vpop.f32.mrb[0].mxu0
        %785 = vdwg.mxu0
        %v786 = vmul.f32 %v781, 0.35355338
        %v787 = vsel %vm315, %v786, -1e+10
        %v788 = vld [vmem:[#allocation2] sm:$0xff]
        %v789 = vsel %vm316, %v787, -inf
        %790 = vmax.xlane.f32.xlu0 %v789
        %v791 = vpop.xlane.xlu0 %790
        %v792 = vmax.f32 %v788, %v791
        %v793 = vsub.f32 %v788, %v792
        %v794 = vmul.f32 %v793, 1.442695
        %v795 = vpow.pop %v794
        %797 = vset.pattern.permute.xlu0 3
        %798 = vperm.xlu0 %797, %v792
        %v799 = vpop.permute.xlu0 %798
        %v801 = vsub.f32 %v787, %v799
        %v802 = vmul.f32 %v801, 1.442695
        %v803 = vpow.pop %v802
        %v804 = vld [vmem:[#allocation3] sm:$0xff]
        %v805 = vmul.f32 %v795, %v804
        %v806 = vsel %vm316, %v803, 0.0
        %807 = vadd.xlane.f32.xlu0 %v806
        %v808 = vpop.xlane.xlu0 %807
        %v809 = vadd.f32 %v805, %v808
        %vm810 = vcmask 31768
        %811 = vst.msk [vmem:[#allocation3] sm:$0xff] %vm810, %v809
        %v812 = vld [vmem:[#allocation4] sm:$0xff]
        %814 = vset.pattern.permute.xlu0 3
        %815 = vperm.xlu0 %814, %v795
        %v816 = vpop.permute.xlu0 %815
        %v818 = vmul.f32 %v816, %v812
        %v819 = vpack.c.bf16 %v803, %v803
        %820 = vrot.lane.b32.xlu0 %v539, 104
        %v821 = vpop.permute.xlu0 %820
        %v823 = vsel %vm316, %v819, 0
        %v826 = vsel %vm400, %v821, 0
        %828 = vmatprep.subr.bf16.mxu0 0
        %829 = vmatpush1.bf16.msra.mxu0 %v826
        %830 = vmatprep.subr.bf16.mxu0 0
        %831 = vmatpush1.bf16.msra.mxu0 0
        %832 = vmatprep.subr.bf16.mxu0 0
        %833 = vmatpush1.bf16.msra.mxu0 0
        %834 = vmatprep.subr.bf16.mxu0 0
        %835 = vmatpush1.bf16.msra.mxu0 0
        %836 = vmatprep.subr.bf16.mxu0 0
        %837 = vmatpush1.bf16.msra.mxu0 0
        %838 = vmatprep.subr.bf16.mxu0 0
        %839 = vmatpush1.bf16.msra.mxu0 0
        %840 = vmatprep.subr.bf16.mxu0 0
        %841 = vmatpush1.bf16.msra.mxu0 0
        %842 = vmatprep.subr.bf16.mxu0 0
        %843 = vmatpush1.bf16.msra.mxu0 0
        %844 = vmatprep.subr.bf16.mxu0 0
        %845 = vmatpush1.bf16.msra.mxu0 0
        %846 = vmatprep.subr.bf16.mxu0 0
        %847 = vmatpush1.bf16.msra.mxu0 0
        %848 = vmatprep.subr.bf16.mxu0 0
        %849 = vmatpush1.bf16.msra.mxu0 0
        %850 = vmatprep.subr.bf16.mxu0 0
        %851 = vmatpush1.bf16.msra.mxu0 0
        %852 = vmatprep.subr.bf16.mxu0 0
        %853 = vmatpush1.bf16.msra.mxu0 0
        %854 = vmatprep.subr.bf16.mxu0 0
        %855 = vmatpush1.bf16.msra.mxu0 0
        %856 = vmatprep.subr.bf16.mxu0 0
        %857 = vmatpush1.bf16.msra.mxu0 0
        %858 = vmatprep.subr.bf16.mxu0 0
        %859 = vmatpush1.bf16.msra.mxu0 0
        %860 = vmatprep.mubr.bf16.mxu0 0
        %861 = vmatmul.mubr.bf16.gmra.mrb[0].mxu0 %v823
        %v862 = vpop.f32.mrb[0].mxu0
        %v863 = vadd.f32 0.0, %v862
        %v864 = vpop.f32.mrb[0].mxu0
        %v865 = vpop.f32.mrb[0].mxu0
        %v866 = vpop.f32.mrb[0].mxu0
        %867 = vdwg.mxu0
        %869 = vrot.lane.b32.xlu0 %v863, 24
        %v870 = vpop.permute.xlu0 %869
        %v872 = vadd.f32 %v818, %v870
        %vm873 = vcmask 261312
        %874 = vst.msk [vmem:[#allocation4] sm:$0xff] %vm873, %v872
        %875 = vst.msk [vmem:[#allocation2] sm:$0xff] %vm810, %v792
      $region40: #{gpt_forward.14} parent=31 // pred_fallthru
        _
      // Predicated region
      $region41: #{gpt_forward.14} parent=31 // pred_check
        %p876 = pneg %p289
      $region42: #{gpt_forward.14} parent=31 // pred_check_branch
        %878 = sbr.rel (%p876) target = $region44
      $region43: #{gpt_forward.14} parent=31 // pred_region
        %v879 = vld [vmem:[#allocation3] sm:$0xff]
        %v880 = vrcp.pop %v879
        %v881 = vld [vmem:[#allocation4] sm:$0xff]
        %883 = vset.pattern.permute.xlu0 0
        %884 = vperm.xlu0 %883, %v880
        %v885 = vpop.permute.xlu0 %884
        %v887 = vmul.f32 %v881, %v885
        %v888 = vpack.c.bf16 %v887, %v887
        %vm889 = vcmask 60416
        %890 = vst.msk [vmem:[%s287] sm:$0xf] %vm889, %v888
        %v891 = vld [vmem:[#allocation3] sm:$0xff]
        %v892 = vrcp.pop %v891
        %v893 = vld [vmem:[#allocation4] sm:$0xff]
        %895 = vset.pattern.permute.xlu0 1
        %896 = vperm.xlu0 %895, %v892
        %v897 = vpop.permute.xlu0 %896
        %v899 = vmul.f32 %v893, %v897
        %v900 = vpack.c.bf16 %v899, %v899
        %vm901 = vcmask 126016
        %902 = vst.msk [vmem:[%s287] sm:$0xf] %vm901, %v900
        %v903 = vld [vmem:[#allocation3] sm:$0xff]
        %v904 = vrcp.pop %v903
        %v905 = vld [vmem:[#allocation4] sm:$0xff]
        %907 = vset.pattern.permute.xlu0 2
        %908 = vperm.xlu0 %907, %v904
        %v909 = vpop.permute.xlu0 %908
        %v911 = vmul.f32 %v905, %v909
        %v912 = vpack.c.bf16 %v911, %v911
        %vm913 = vcmask 191616
        %914 = vst.msk [vmem:[%s287] sm:$0xf] %vm913, %v912
        %v915 = vld [vmem:[#allocation3] sm:$0xff]
        %v916 = vrcp.pop %v915
        %v917 = vld [vmem:[#allocation4] sm:$0xff]
        %919 = vset.pattern.permute.xlu0 3
        %920 = vperm.xlu0 %919, %v916
        %v921 = vpop.permute.xlu0 %920
        %v923 = vmul.f32 %v917, %v921
        %v924 = vpack.c.bf16 %v923, %v923
        %vm925 = vcmask 257216
        %926 = vst.msk [vmem:[%s287] sm:$0xf] %vm925, %v924
      $region44: #{gpt_forward.14} parent=31 // pred_fallthru
        _
      %p927 = scmp.lt.s32.totalorder %s19, 1
      %s928 = scalar_select %p927, %s19, 1
      %p929 = scmp.lt.s32.totalorder %s20, 0
      %s930 = scalar_select %p929, %s20, 0
      %s931 = sadd.s32 %s930, %s928
      %s932 = smul.addr %s931, 4
      %s933 = scalar_lea.vmem %s3, %s932
      // Predicated region
      $region45: #{gpt_forward.14} parent=31 // pred_check
        %p934 = pneg %p145
      $region46: #{gpt_forward.14} parent=31 // pred_check_branch
        %936 = sbr.rel (%p934) target = $region48
      $region47: #{gpt_forward.14} parent=31 // pred_region
        _
      $region48: #{gpt_forward.14} parent=31 // pred_fallthru
        _
    $region32: #{gpt_forward.14} parent=5 // pred_fallthru
      _
    %p937 = scmp.le.s32.totalorder 2, %s9
    // Predicated region
    $region49: #{gpt_forward.14} parent=5 // pred_check
      %p938 = pneg %p937
    $region50: #{gpt_forward.14} parent=5 // pred_check_branch
      %940 = sbr.rel (%p938) target = $region52
    $region51: #{gpt_forward.14} parent=5 // pred_region
      %s941 = ssub.s32 %s9, 2
      // Predicated region
      $region53: #{gpt_forward.14} parent=51 // pred_check
        %p942 = pneg %p151
      $region54: #{gpt_forward.14} parent=51 // pred_check_branch
        %944 = sbr.rel (%p942) target = $region56
      $region55: #{gpt_forward.14} parent=51 // pred_region
        %p945 = scmp.lt.s32.totalorder %s22, 1
        %s946 = scalar_select %p945, %s22, 1
        %p947 = scmp.lt.s32.totalorder %s23, 0
        %s948 = scalar_select %p947, %s23, 0
        %s949 = sadd.s32 %s948, %s946
        %s950 = smul.addr %s949, 4
        %s951 = scalar_lea.vmem %s3, %s950
      $region56: #{gpt_forward.14} parent=51 // pred_fallthru
        _
    $region52: #{gpt_forward.14} parent=5 // pred_fallthru
      _
  $region6: #{gpt_forward.14} parent=0 // loop_footer
    %s13 = sadd.s32 1, %s9
  $region7: #{gpt_forward.14} parent=0 // loop_footer_branch
    %8 = sbr.rel target = $region3
  $region8: #{gpt_forward.14} parent=0 // loop_exit
    _

// kernel: gpt_forward.17
$region0: #{gpt_forward.17}
  #allocation0 [shape = 'u32[]', space=smem, size = 0x4, offset = 0x4, fixed_abs, tag = 'smem constant byte address 0x4 - core index']
  #allocation1 [shape = 'u32[144,128]{1,0:T(1,128)}', space=vmem, size = 0x12000, scoped, tag = 'internal scratch']
  %s0 = inlined_call_operand.vmem [shape: bf16[16,128], index: 0, kind: input, shape index: {}]
  %s1 = inlined_call_operand.vmem [shape: bf16[128,32], index: 1, kind: input, shape index: {}]
  %s2 = inlined_call_operand.vmem [shape: f32[1,32], index: 2, kind: input, shape index: {}]
  %s3 = inlined_call_operand.vmem [shape: bf16[16,32], index: 3, kind: input, shape index: {}]
  %s4 = inlined_call_operand.vmem [shape: bf16[16,32], index: 4, kind: output, shape index: {}]
  %s5 = sld [smem:[#allocation0]]
  $region26: #{gpt_forward.17} parent=0
    _
  %s7 = ssub.s32 1, %s5
  %s8 = scalar_select 0, %s7, %s5
  // Predicated region
  $region2: #{gpt_forward.17} parent=0 // pred_check
    _
  $region3: #{gpt_forward.17} parent=0 // pred_check_branch
    %10 = sbr.rel (0) target = $region5
  $region4: #{gpt_forward.17} parent=0 // pred_region
    _
  $region5: #{gpt_forward.17} parent=0 // pred_fallthru
    _
  // Predicated region
  $region6: #{gpt_forward.17} parent=0 // pred_check
    _
  $region7: #{gpt_forward.17} parent=0 // pred_check_branch
    %12 = sbr.rel (0) target = $region9
  $region8: #{gpt_forward.17} parent=0 // pred_region
    _
  $region9: #{gpt_forward.17} parent=0 // pred_fallthru
    _
  // Predicated region
  $region10: #{gpt_forward.17} parent=0 // pred_check
    _
  $region11: #{gpt_forward.17} parent=0 // pred_check_branch
    %14 = sbr.rel (0) target = $region13
  $region12: #{gpt_forward.17} parent=0 // pred_region
    _
  $region13: #{gpt_forward.17} parent=0 // pred_fallthru
    _
  // Predicated region
  $region14: #{gpt_forward.17} parent=0 // pred_check
    _
  $region15: #{gpt_forward.17} parent=0 // pred_check_branch
    %16 = sbr.rel (0) target = $region17
  $region16: #{gpt_forward.17} parent=0 // pred_region
    _
  $region17: #{gpt_forward.17} parent=0 // pred_fallthru
    _
  %v18 = vld [vmem:[%s0] sm:$0xf]
  %v19 = vld [vmem:[%s0 + $0x4] sm:$0xf]
  %v20 = vld [vmem:[%s1] sm:$0xf]
  %v21 = vld [vmem:[%s1 + $0x4] sm:$0xf]
  %v22 = vld [vmem:[%s1 + $0x8] sm:$0xf]
  %v23 = vld [vmem:[%s1 + $0xc] sm:$0xf]
  %v24 = vld [vmem:[%s1 + $0x10] sm:$0xf]
  %v25 = vld [vmem:[%s1 + $0x14] sm:$0xf]
  %v26 = vld [vmem:[%s1 + $0x18] sm:$0xf]
  %v27 = vld [vmem:[%s1 + $0x1c] sm:$0xf]
  %v28 = vld [vmem:[%s1 + $0x20] sm:$0xf]
  %v29 = vld [vmem:[%s1 + $0x24] sm:$0xf]
  %v30 = vld [vmem:[%s1 + $0x28] sm:$0xf]
  %v31 = vld [vmem:[%s1 + $0x2c] sm:$0xf]
  %v32 = vld [vmem:[%s1 + $0x30] sm:$0xf]
  %v33 = vld [vmem:[%s1 + $0x34] sm:$0xf]
  %v34 = vld [vmem:[%s1 + $0x38] sm:$0xf]
  %v35 = vld [vmem:[%s1 + $0x3c] sm:$0xf]
  %v36 = vld [vmem:[%s2] sm:$0x1]
  %v38 = vlaneseq
  %v39 = vshrl.u32 %v38, 7
  %v40 = vsub.s32 0, %v39
  %v41 = vrot.slane %v36, %v40
  %v45 = vunpack.c.l.b16 %v18
  %v46 = vunpack.c.l.b16 %v19
  %v47 = vpack.c.b16 %v46, %v45
  %v65 = vunpack.c.l.b16 %v20
  %v66 = vunpack.c.l.b16 %v21
  %v67 = vunpack.c.l.b16 %v22
  %v68 = vunpack.c.l.b16 %v23
  %v69 = vunpack.c.l.b16 %v24
  %v70 = vunpack.c.l.b16 %v25
  %v71 = vunpack.c.l.b16 %v26
  %v72 = vunpack.c.l.b16 %v27
  %v73 = vunpack.c.l.b16 %v28
  %v74 = vunpack.c.l.b16 %v29
  %v75 = vunpack.c.l.b16 %v30
  %v76 = vunpack.c.l.b16 %v31
  %v77 = vunpack.c.l.b16 %v32
  %v78 = vunpack.c.l.b16 %v33
  %v79 = vunpack.c.l.b16 %v34
  %v80 = vunpack.c.l.b16 %v35
  %v81 = vpack.c.b16 %v66, %v65
  %v82 = vpack.c.b16 %v68, %v67
  %v83 = vpack.c.b16 %v70, %v69
  %v84 = vpack.c.b16 %v72, %v71
  %v85 = vpack.c.b16 %v74, %v73
  %v86 = vpack.c.b16 %v76, %v75
  %v87 = vpack.c.b16 %v78, %v77
  %v88 = vpack.c.b16 %v80, %v79
  %97 = vmatprep.subr.bf16.mxu0 0
  %98 = vmatpush1.bf16.msra.mxu0 %v81
  %99 = vmatprep.subr.bf16.mxu0 0
  %100 = vmatpush1.bf16.msra.mxu0 %v82
  %101 = vmatprep.subr.bf16.mxu0 0
  %102 = vmatpush1.bf16.msra.mxu0 %v83
  %103 = vmatprep.subr.bf16.mxu0 0
  %104 = vmatpush1.bf16.msra.mxu0 %v84
  %105 = vmatprep.subr.bf16.mxu0 0
  %106 = vmatpush1.bf16.msra.mxu0 %v85
  %107 = vmatprep.subr.bf16.mxu0 0
  %108 = vmatpush1.bf16.msra.mxu0 %v86
  %109 = vmatprep.subr.bf16.mxu0 0
  %110 = vmatpush1.bf16.msra.mxu0 %v87
  %111 = vmatprep.subr.bf16.mxu0 0
  %112 = vmatpush1.bf16.msra.mxu0 %v88
  %113 = vmatprep.subr.bf16.mxu0 0
  %114 = vmatpush1.bf16.msra.mxu0 0
  %115 = vmatprep.subr.bf16.mxu0 0
  %116 = vmatpush1.bf16.msra.mxu0 0
  %117 = vmatprep.subr.bf16.mxu0 0
  %118 = vmatpush1.bf16.msra.mxu0 0
  %119 = vmatprep.subr.bf16.mxu0 0
  %120 = vmatpush1.bf16.msra.mxu0 0
  %121 = vmatprep.subr.bf16.mxu0 0
  %122 = vmatpush1.bf16.msra.mxu0 0
  %123 = vmatprep.subr.bf16.mxu0 0
  %124 = vmatpush1.bf16.msra.mxu0 0
  %125 = vmatprep.subr.bf16.mxu0 0
  %126 = vmatpush1.bf16.msra.mxu0 0
  %127 = vmatprep.subr.bf16.mxu0 0
  %128 = vmatpush1.bf16.msra.mxu0 0
  %129 = vmatprep.mubr.bf16.mxu0 0
  %130 = vmatmul.mubr.bf16.gmra.mrb[0].mxu0 %v47
  %v131 = vpop.f32.mrb[0].mxu0
  %v132 = vadd.f32 %v41, %v131
  %v133 = vpop.f32.mrb[0].mxu0
  %v134 = vpop.f32.mrb[0].mxu0
  %v135 = vadd.f32 %v41, %v134
  %v136 = vpop.f32.mrb[0].mxu0
  %137 = vdwg.mxu0
  %v138 = vld [vmem:[%s3] sm:$0xf]
  %v139 = vld [vmem:[%s3 + $0x4] sm:$0xf]
  %v140 = vunpack.c.l.bf16 %v138
  %v141 = vunpack.c.l.bf16 %v139
  %v142 = vadd.f32 %v132, %v140
  %v143 = vadd.f32 %v135, %v141
  %v144 = vpack.c.bf16 %v143, %v142
  %v146 = vunpack.c.l.b16 %v144
  %v147 = vunpack.c.h.b16 %v144
  %v148 = vpack.c.b16 %v146, %v146
  %v149 = vpack.c.b16 %v147, %v147
  %vm152 = vcmask 257024
  %153 = vst.msk [vmem:[%s4] sm:$0xf] %vm152, %v148
  %154 = vst.msk [vmem:[%s4 + $0x4] sm:$0xf] %vm152, %v149
  // Predicated region
  $region18: #{gpt_forward.17} parent=0 // pred_check
    _
  $region19: #{gpt_forward.17} parent=0 // pred_check_branch
    %156 = sbr.rel (0) target = $region21
  $region20: #{gpt_forward.17} parent=0 // pred_region
    _
  $region21: #{gpt_forward.17} parent=0 // pred_fallthru
    _
  // Predicated region
  $region22: #{gpt_forward.17} parent=0 // pred_check
    _
  $region23: #{gpt_forward.17} parent=0 // pred_check_branch
    %158 = sbr.rel (0) target = $region25
  $region24: #{gpt_forward.17} parent=0 // pred_region
    _
  $region25: #{gpt_forward.17} parent=0 // pred_fallthru
    _

// kernel: gpt_forward.16
$region0: #{gpt_forward.16}
  #allocation0 [shape = 'u32[]', space=smem, size = 0x4, offset = 0x4, fixed_abs, tag = 'smem constant byte address 0x4 - core index']
  #allocation1 [shape = 'u32[144,128]{1,0:T(1,128)}', space=vmem, size = 0x12000, scoped, tag = 'internal scratch']
  #allocation2 [shape = 'bf16[16,32]{1,0:T(16,128)(2,1)}', space=vmem, size = 0x1000, scoped, tag = 'scratch operand']
  %s0 = inlined_call_operand.vmem [shape: bf16[16,32], index: 0, kind: input, shape index: {}]
  %s1 = inlined_call_operand.vmem [shape: bf16[32,128], index: 1, kind: input, shape index: {}]
  %s2 = inlined_call_operand.vmem [shape: f32[1,128], index: 2, kind: input, shape index: {}]
  %s3 = inlined_call_operand.vmem [shape: f32[1,32], index: 3, kind: input, shape index: {}]
  %s4 = inlined_call_operand.vmem [shape: f32[1,32], index: 4, kind: input, shape index: {}]
  %s5 = inlined_call_operand.vmem [shape: bf16[16,128], index: 5, kind: output, shape index: {}]
  %s6 = sld [smem:[#allocation0]]
  $region34: #{gpt_forward.16} parent=0
    _
  %s8 = ssub.s32 1, %s6
  %s9 = scalar_select 0, %s8, %s6
  // Predicated region
  $region2: #{gpt_forward.16} parent=0 // pred_check
    _
  $region3: #{gpt_forward.16} parent=0 // pred_check_branch
    %11 = sbr.rel (0) target = $region5
  $region4: #{gpt_forward.16} parent=0 // pred_region
    _
  $region5: #{gpt_forward.16} parent=0 // pred_fallthru
    _
  // Predicated region
  $region6: #{gpt_forward.16} parent=0 // pred_check
    _
  $region7: #{gpt_forward.16} parent=0 // pred_check_branch
    %13 = sbr.rel (0) target = $region9
  $region8: #{gpt_forward.16} parent=0 // pred_region
    _
  $region9: #{gpt_forward.16} parent=0 // pred_fallthru
    _
  // Predicated region
  $region10: #{gpt_forward.16} parent=0 // pred_check
    _
  $region11: #{gpt_forward.16} parent=0 // pred_check_branch
    %15 = sbr.rel (0) target = $region13
  $region12: #{gpt_forward.16} parent=0 // pred_region
    _
  $region13: #{gpt_forward.16} parent=0 // pred_fallthru
    _
  // Predicated region
  $region14: #{gpt_forward.16} parent=0 // pred_check
    _
  $region15: #{gpt_forward.16} parent=0 // pred_check_branch
    %17 = sbr.rel (0) target = $region17
  $region16: #{gpt_forward.16} parent=0 // pred_region
    _
  $region17: #{gpt_forward.16} parent=0 // pred_fallthru
    _
  // Predicated region
  $region18: #{gpt_forward.16} parent=0 // pred_check
    _
  $region19: #{gpt_forward.16} parent=0 // pred_check_branch
    %19 = sbr.rel (0) target = $region21
  $region20: #{gpt_forward.16} parent=0 // pred_region
    _
  $region21: #{gpt_forward.16} parent=0 // pred_fallthru
    _
  %p21 = scmp.eq.s32.totalorder 0, 0
  // Predicated region
  $region22: #{gpt_forward.16} parent=0 // pred_check
    %p22 = pneg %p21
  $region23: #{gpt_forward.16} parent=0 // pred_check_branch
    %24 = sbr.rel (%p22) target = $region25
  $region24: #{gpt_forward.16} parent=0 // pred_region
    %v25 = vld [vmem:[%s0] sm:$0xf]
    %v26 = vld [vmem:[%s0 + $0x4] sm:$0xf]
    %v27 = vunpack.c.l.bf16 %v25
    %v28 = vunpack.c.l.bf16 %v26
    %vm29 = vcmask 261120
    %v30 = vsel %vm29, %v27, 0.0
    %31 = vadd.xlane.f32.xlu0 %v30
    %v32 = vpop.xlane.xlu0 %31
    %v33 = vsel %vm29, %v28, 0.0
    %34 = vadd.xlane.f32.xlu0 %v33
    %v35 = vpop.xlane.xlu0 %34
    %v36 = vrcp.pop 32.0
    %v37 = vmul.f32 %v32, %v36
    %v38 = vmul.f32 %v35, %v36
    %v39 = vsub.f32 %v27, %v37
    %v40 = vsub.f32 %v28, %v38
    %v41 = vmul.f32 %v39, %v39
    %v42 = vmul.f32 %v40, %v40
    %v43 = vsel %vm29, %v41, 0.0
    %44 = vadd.xlane.f32.xlu0 %v43
    %v45 = vpop.xlane.xlu0 %44
    %v46 = vsel %vm29, %v42, 0.0
    %47 = vadd.xlane.f32.xlu0 %v46
    %v48 = vpop.xlane.xlu0 %47
    %v49 = vmul.f32 %v45, %v36
    %v50 = vmul.f32 %v48, %v36
    %v51 = vadd.f32 %v49, 1e-05
    %v52 = vadd.f32 %v50, 1e-05
    %v53 = vrsqrt.pop %v51
    %v54 = vrsqrt.pop %v52
    %v55 = vmul.f32 %v39, %v53
    %v56 = vmul.f32 %v40, %v54
    %v57 = vld [vmem:[%s3] sm:$0x1]
    %v59 = vlaneseq
    %v60 = vshrl.u32 %v59, 7
    %v61 = vsub.s32 0, %v60
    %v62 = vrot.slane %v57, %v61
    %v64 = vmul.f32 %v55, %v62
    %v65 = vmul.f32 %v56, %v62
    %v66 = vld [vmem:[%s4] sm:$0x1]
    %v68 = vlaneseq
    %v69 = vshrl.u32 %v68, 7
    %v70 = vsub.s32 0, %v69
    %v71 = vrot.slane %v66, %v70
    %v73 = vadd.f32 %v64, %v71
    %v74 = vadd.f32 %v65, %v71
    %v75 = vpack.c.bf16 %v74, %v73
    %76 = vst.msk [vmem:[#allocation2] sm:$0xff] %vm29, %v75
  $region25: #{gpt_forward.16} parent=0 // pred_fallthru
    _
  %v77 = vld [vmem:[#allocation2] sm:$0xff]
  %v78 = vld [vmem:[%s1] sm:$0xf]
  %v79 = vld [vmem:[%s1 + $0x4] sm:$0xf]
  %v80 = vld [vmem:[%s1 + $0x8] sm:$0xf]
  %v81 = vld [vmem:[%s1 + $0xc] sm:$0xf]
  %v82 = vld [vmem:[%s2] sm:$0x1]
  %v84 = vlaneseq
  %v85 = vshrl.u32 %v84, 7
  %v86 = vsub.s32 0, %v85
  %v87 = vrot.slane %v82, %v86
  %v93 = vunpack.c.l.b16 %v78
  %v94 = vunpack.c.l.b16 %v79
  %v95 = vunpack.c.l.b16 %v80
  %v96 = vunpack.c.l.b16 %v81
  %v97 = vpack.c.b16 %v94, %v93
  %v98 = vpack.c.b16 %v96, %v95
  %vm101 = vcmask 261120
  %v103 = vsel %vm101, %v77, 0
  %105 = vmatprep.subr.bf16.mxu0 0
  %106 = vmatpush1.bf16.msra.mxu0 %v97
  %107 = vmatprep.subr.bf16.mxu0 0
  %108 = vmatpush1.bf16.msra.mxu0 %v98
  %109 = vmatprep.subr.bf16.mxu0 0
  %110 = vmatpush1.bf16.msra.mxu0 0
  %111 = vmatprep.subr.bf16.mxu0 0
  %112 = vmatpush1.bf16.msra.mxu0 0
  %113 = vmatprep.subr.bf16.mxu0 0
  %114 = vmatpush1.bf16.msra.mxu0 0
  %115 = vmatprep.subr.bf16.mxu0 0
  %116 = vmatpush1.bf16.msra.mxu0 0
  %117 = vmatprep.subr.bf16.mxu0 0
  %118 = vmatpush1.bf16.msra.mxu0 0
  %119 = vmatprep.subr.bf16.mxu0 0
  %120 = vmatpush1.bf16.msra.mxu0 0
  %121 = vmatprep.subr.bf16.mxu0 0
  %122 = vmatpush1.bf16.msra.mxu0 0
  %123 = vmatprep.subr.bf16.mxu0 0
  %124 = vmatpush1.bf16.msra.mxu0 0
  %125 = vmatprep.subr.bf16.mxu0 0
  %126 = vmatpush1.bf16.msra.mxu0 0
  %127 = vmatprep.subr.bf16.mxu0 0
  %128 = vmatpush1.bf16.msra.mxu0 0
  %129 = vmatprep.subr.bf16.mxu0 0
  %130 = vmatpush1.bf16.msra.mxu0 0
  %131 = vmatprep.subr.bf16.mxu0 0
  %132 = vmatpush1.bf16.msra.mxu0 0
  %133 = vmatprep.subr.bf16.mxu0 0
  %134 = vmatpush1.bf16.msra.mxu0 0
  %135 = vmatprep.subr.bf16.mxu0 0
  %136 = vmatpush1.bf16.msra.mxu0 0
  %137 = vmatprep.mubr.bf16.mxu0 0
  %138 = vmatmul.mubr.bf16.gmra.mrb[0].mxu0 %v103
  %v139 = vpop.f32.mrb[0].mxu0
  %v140 = vadd.f32 %v87, %v139
  %v141 = vpop.f32.mrb[0].mxu0
  %v142 = vpop.f32.mrb[0].mxu0
  %v143 = vadd.f32 %v87, %v142
  %v144 = vpop.f32.mrb[0].mxu0
  %145 = vdwg.mxu0
  %v146 = vmul.f32 %v140, 0.5
  %v147 = vmul.f32 %v143, 0.5
  %v148 = vmul.f32 %v140, %v140
  %v149 = vmul.f32 %v143, %v143
  %v150 = vmul.f32 %v148, %v140
  %v151 = vmul.f32 %v149, %v143
  %v152 = vmul.f32 %v150, 0.044715
  %v153 = vmul.f32 %v151, 0.044715
  %v154 = vadd.f32 %v140, %v152
  %v155 = vadd.f32 %v143, %v153
  %v156 = vmul.f32 %v154, 0.7978846
  %v157 = vmul.f32 %v155, 0.7978846
  %v158 = vtanh.pop %v156
  %v159 = vtanh.pop %v157
  %v160 = vadd.f32 %v158, 1.0
  %v161 = vadd.f32 %v159, 1.0
  %v162 = vmul.f32 %v146, %v160
  %v163 = vmul.f32 %v147, %v161
  %v164 = vpack.c.bf16 %v163, %v162
  %v166 = vunpack.c.l.b16 %v164
  %v167 = vunpack.c.h.b16 %v164
  %v168 = vpack.c.b16 %v166, %v166
  %v169 = vpack.c.b16 %v167, %v167
  %172 = vst [vmem:[%s5] sm:$0xf] %v168
  %173 = vst [vmem:[%s5 + $0x4] sm:$0xf] %v169
  // Predicated region
  $region26: #{gpt_forward.16} parent=0 // pred_check
    _
  $region27: #{gpt_forward.16} parent=0 // pred_check_branch
    %175 = sbr.rel (0) target = $region29
  $region28: #{gpt_forward.16} parent=0 // pred_region
    _
  $region29: #{gpt_forward.16} parent=0 // pred_fallthru
    _
  // Predicated region
  $region30: #{gpt_forward.16} parent=0 // pred_check
    _
  $region31: #{gpt_forward.16} parent=0 // pred_check_branch
    %177 = sbr.rel (0) target = $region33
  $region32: #{gpt_forward.16} parent=0 // pred_region
    _
  $region33: #{gpt_forward.16} parent=0 // pred_fallthru
    _

// kernel: gpt_forward.23
$region0: #{gpt_forward.23}
  #allocation0 [shape = 'u32[]', space=smem, size = 0x4, offset = 0x4, fixed_abs, tag = 'smem constant byte address 0x4 - core index']
  #allocation1 [shape = 'u32[144,128]{1,0:T(1,128)}', space=vmem, size = 0x12000, scoped, tag = 'internal scratch']
  #allocation2 [shape = 'bf16[16,32]{1,0:T(16,128)(2,1)}', space=vmem, size = 0x1000, scoped, tag = 'scratch operand']
  %s0 = inlined_call_operand.vmem [shape: bf16[16,32], index: 0, kind: input, shape index: {}]
  %s1 = inlined_call_operand.vmem [shape: bf16[32,64], index: 1, kind: input, shape index: {}]
  %s2 = inlined_call_operand.vmem [shape: f32[1,64], index: 2, kind: input, shape index: {}]
  %s3 = inlined_call_operand.vmem [shape: f32[1,32], index: 3, kind: input, shape index: {}]
  %s4 = inlined_call_operand.vmem [shape: f32[1,32], index: 4, kind: input, shape index: {}]
  %s5 = inlined_call_operand.hbm [shape: bf16[16,64], index: 5, kind: output, shape index: {}]
  %s6 = sld [smem:[#allocation0]]
  $region34: #{gpt_forward.23} parent=0
    _
  %s8 = ssub.s32 1, %s6
  %s9 = scalar_select 0, %s8, %s6
  $region1: #{gpt_forward.23} parent=0
    #allocation3 [shape = 'u8[4096]{0}', space=vmem, size = 0x1000, scoped, tag = 'output window, operand 0, single buffered']
    #allocation4 [shape = 's32[1]{0}', space=sflag, size = 0x4, scoped, tag = 'scoped memory for gpt_forward.23']
    %10 = vsyncpa [#allocation4], 0
    // Predicated region
    $region2: #{gpt_forward.23} parent=1 // pred_check
      _
    $region3: #{gpt_forward.23} parent=1 // pred_check_branch
      %12 = sbr.rel (0) target = $region5
    $region4: #{gpt_forward.23} parent=1 // pred_region
      _
    $region5: #{gpt_forward.23} parent=1 // pred_fallthru
      _
    // Predicated region
    $region6: #{gpt_forward.23} parent=1 // pred_check
      _
    $region7: #{gpt_forward.23} parent=1 // pred_check_branch
      %14 = sbr.rel (0) target = $region9
    $region8: #{gpt_forward.23} parent=1 // pred_region
      _
    $region9: #{gpt_forward.23} parent=1 // pred_fallthru
      _
    // Predicated region
    $region10: #{gpt_forward.23} parent=1 // pred_check
      _
    $region11: #{gpt_forward.23} parent=1 // pred_check_branch
      %16 = sbr.rel (0) target = $region13
    $region12: #{gpt_forward.23} parent=1 // pred_region
      _
    $region13: #{gpt_forward.23} parent=1 // pred_fallthru
      _
    // Predicated region
    $region14: #{gpt_forward.23} parent=1 // pred_check
      _
    $region15: #{gpt_forward.23} parent=1 // pred_check_branch
      %18 = sbr.rel (0) target = $region17
    $region16: #{gpt_forward.23} parent=1 // pred_region
      _
    $region17: #{gpt_forward.23} parent=1 // pred_fallthru
      _
    // Predicated region
    $region18: #{gpt_forward.23} parent=1 // pred_check
      _
    $region19: #{gpt_forward.23} parent=1 // pred_check_branch
      %20 = sbr.rel (0) target = $region21
    $region20: #{gpt_forward.23} parent=1 // pred_region
      _
    $region21: #{gpt_forward.23} parent=1 // pred_fallthru
      _
    %p22 = scmp.eq.s32.totalorder 0, 0
    // Predicated region
    $region22: #{gpt_forward.23} parent=1 // pred_check
      %p23 = pneg %p22
    $region23: #{gpt_forward.23} parent=1 // pred_check_branch
      %25 = sbr.rel (%p23) target = $region25
    $region24: #{gpt_forward.23} parent=1 // pred_region
      %v26 = vld [vmem:[%s0] sm:$0xf]
      %v27 = vld [vmem:[%s0 + $0x4] sm:$0xf]
      %v28 = vunpack.c.l.bf16 %v26
      %v29 = vunpack.c.l.bf16 %v27
      %vm30 = vcmask 261120
      %v31 = vsel %vm30, %v28, 0.0
      %32 = vadd.xlane.f32.xlu0 %v31
      %v33 = vpop.xlane.xlu0 %32
      %v34 = vsel %vm30, %v29, 0.0
      %35 = vadd.xlane.f32.xlu0 %v34
      %v36 = vpop.xlane.xlu0 %35
      %v37 = vrcp.pop 32.0
      %v38 = vmul.f32 %v33, %v37
      %v39 = vmul.f32 %v36, %v37
      %v40 = vsub.f32 %v28, %v38
      %v41 = vsub.f32 %v29, %v39
      %v42 = vmul.f32 %v40, %v40
      %v43 = vmul.f32 %v41, %v41
      %v44 = vsel %vm30, %v42, 0.0
      %45 = vadd.xlane.f32.xlu0 %v44
      %v46 = vpop.xlane.xlu0 %45
      %v47 = vsel %vm30, %v43, 0.0
      %48 = vadd.xlane.f32.xlu0 %v47
      %v49 = vpop.xlane.xlu0 %48
      %v50 = vmul.f32 %v46, %v37
      %v51 = vmul.f32 %v49, %v37
      %v52 = vadd.f32 %v50, 1e-05
      %v53 = vadd.f32 %v51, 1e-05
      %v54 = vrsqrt.pop %v52
      %v55 = vrsqrt.pop %v53
      %v56 = vmul.f32 %v40, %v54
      %v57 = vmul.f32 %v41, %v55
      %v58 = vld [vmem:[%s3] sm:$0x1]
      %v60 = vlaneseq
      %v61 = vshrl.u32 %v60, 7
      %v62 = vsub.s32 0, %v61
      %v63 = vrot.slane %v58, %v62
      %v65 = vmul.f32 %v56, %v63
      %v66 = vmul.f32 %v57, %v63
      %v67 = vld [vmem:[%s4] sm:$0x1]
      %v69 = vlaneseq
      %v70 = vshrl.u32 %v69, 7
      %v71 = vsub.s32 0, %v70
      %v72 = vrot.slane %v67, %v71
      %v74 = vadd.f32 %v65, %v72
      %v75 = vadd.f32 %v66, %v72
      %v76 = vpack.c.bf16 %v75, %v74
      %77 = vst.msk [vmem:[#allocation2] sm:$0xff] %vm30, %v76
    $region25: #{gpt_forward.23} parent=1 // pred_fallthru
      _
    %v78 = vld [vmem:[#allocation2] sm:$0xff]
    %v79 = vld [vmem:[%s1] sm:$0xf]
    %v80 = vld [vmem:[%s1 + $0x4] sm:$0xf]
    %v81 = vld [vmem:[%s1 + $0x8] sm:$0xf]
    %v82 = vld [vmem:[%s1 + $0xc] sm:$0xf]
    %v83 = vld [vmem:[%s2] sm:$0x1]
    %v85 = vlaneseq
    %v86 = vshrl.u32 %v85, 7
    %v87 = vsub.s32 0, %v86
    %v88 = vrot.slane %v83, %v87
    %v94 = vunpack.c.l.b16 %v79
    %v95 = vunpack.c.l.b16 %v80
    %v96 = vunpack.c.l.b16 %v81
    %v97 = vunpack.c.l.b16 %v82
    %v98 = vpack.c.b16 %v95, %v94
    %v99 = vpack.c.b16 %v97, %v96
    %vm102 = vcmask 261120
    %v104 = vsel %vm102, %v78, 0
    %106 = vmatprep.subr.bf16.mxu0 0
    %107 = vmatpush1.bf16.msra.mxu0 %v98
    %108 = vmatprep.subr.bf16.mxu0 0
    %109 = vmatpush1.bf16.msra.mxu0 %v99
    %110 = vmatprep.subr.bf16.mxu0 0
    %111 = vmatpush1.bf16.msra.mxu0 0
    %112 = vmatprep.subr.bf16.mxu0 0
    %113 = vmatpush1.bf16.msra.mxu0 0
    %114 = vmatprep.subr.bf16.mxu0 0
    %115 = vmatpush1.bf16.msra.mxu0 0
    %116 = vmatprep.subr.bf16.mxu0 0
    %117 = vmatpush1.bf16.msra.mxu0 0
    %118 = vmatprep.subr.bf16.mxu0 0
    %119 = vmatpush1.bf16.msra.mxu0 0
    %120 = vmatprep.subr.bf16.mxu0 0
    %121 = vmatpush1.bf16.msra.mxu0 0
    %122 = vmatprep.subr.bf16.mxu0 0
    %123 = vmatpush1.bf16.msra.mxu0 0
    %124 = vmatprep.subr.bf16.mxu0 0
    %125 = vmatpush1.bf16.msra.mxu0 0
    %126 = vmatprep.subr.bf16.mxu0 0
    %127 = vmatpush1.bf16.msra.mxu0 0
    %128 = vmatprep.subr.bf16.mxu0 0
    %129 = vmatpush1.bf16.msra.mxu0 0
    %130 = vmatprep.subr.bf16.mxu0 0
    %131 = vmatpush1.bf16.msra.mxu0 0
    %132 = vmatprep.subr.bf16.mxu0 0
    %133 = vmatpush1.bf16.msra.mxu0 0
    %134 = vmatprep.subr.bf16.mxu0 0
    %135 = vmatpush1.bf16.msra.mxu0 0
    %136 = vmatprep.subr.bf16.mxu0 0
    %137 = vmatpush1.bf16.msra.mxu0 0
    %138 = vmatprep.mubr.bf16.mxu0 0
    %139 = vmatmul.mubr.bf16.gmra.mrb[0].mxu0 %v104
    %v140 = vpop.f32.mrb[0].mxu0
    %v141 = vadd.f32 %v88, %v140
    %v142 = vpop.f32.mrb[0].mxu0
    %v143 = vpop.f32.mrb[0].mxu0
    %v144 = vadd.f32 %v88, %v143
    %v145 = vpop.f32.mrb[0].mxu0
    %146 = vdwg.mxu0
    %v147 = vxor.u32 %v141, 2147483648
    %v148 = vxor.u32 %v144, 2147483648
    %v149 = vmul.f32 %v147, 1.442695
    %v150 = vpow.pop %v149
    %v151 = vmul.f32 %v148, 1.442695
    %v152 = vpow.pop %v151
    %v153 = vadd.f32 %v150, 1.0
    %v154 = vadd.f32 %v152, 1.0
    %v155 = vrcp.pop %v153
    %v156 = vmul.f32 1.0, %v155
    %v157 = vrcp.pop %v154
    %v158 = vmul.f32 1.0, %v157
    %v159 = vpack.c.bf16 %v158, %v156
    %v161 = vunpack.c.l.b16 %v159
    %v162 = vunpack.c.h.b16 %v159
    %v163 = vpack.c.b16 %v161, %v161
    %v164 = vpack.c.b16 %v162, %v162
    %vm167 = vcmask 519168
    %168 = vst.msk [vmem:[#allocation3] sm:$0xf] %vm167, %v163
    %169 = vst.msk [vmem:[#allocation3 + $0x4] sm:$0xf] %vm167, %v164
    // Predicated region
    $region26: #{gpt_forward.23} parent=1 // pred_check
      _
    $region27: #{gpt_forward.23} parent=1 // pred_check_branch
      %171 = sbr.rel (0) target = $region29
    $region28: #{gpt_forward.23} parent=1 // pred_region
      %s173 = ssub.s32 128, 128
      %174 = vsyncadd [#allocation4], %s173
      %s175 = sshll.u32 [#allocation3], 4
      %s176 = int_to_ptr.vmem [resolvable:$true] %s175
      %181 = dma.vmem_to_hbm [thread:$0]  %s176, 128, %s5, [#allocation4], 64, 64, 4
    $region29: #{gpt_forward.23} parent=1 // pred_fallthru
      _
    // Predicated region
    $region30: #{gpt_forward.23} parent=1 // pred_check
      _
    $region31: #{gpt_forward.23} parent=1 // pred_check_branch
      %183 = sbr.rel (0) target = $region33
    $region32: #{gpt_forward.23} parent=1 // pred_region
      %184 = dma.done [#allocation4], 128
    $region33: #{gpt_forward.23} parent=1 // pred_fallthru
      _
    %185 = vsyncpa [#allocation4], 1

</llo_original>
